<compile_context>
chip_gen: v6e
topology: v6e:2x2x1
jax: 0.10.0
libtpu: 0.0.40
codegen_flags: <defaults>
</compile_context>

<pallas_src>
import functools

import jax
import jax.numpy as jnp
from jax import lax
from jax.experimental import pallas as pl
from jax.experimental.pallas import tpu as pltpu


# Norse default LIFParameters / LIParameters, dt = 1e-3.
DT = 1e-3
TAU_SYN_INV = 200.0          # 1 / 5e-3
TAU_MEM_INV = 100.0          # 1 / 1e-2
V_LEAK = 0.0
V_TH = 1.0
V_RESET = 0.0
DT_MEM = DT * TAU_MEM_INV    # 0.1
DT_SYN = DT * TAU_SYN_INV    # 0.2

LANE = 128                   # lane width (last dim tile)
SUBLANE = 8                  # f32 sublane minimum


def _round_up(x, m):
    return (x + m - 1) // m * m


def _snn_kernel(x_ref, w1_ref, b1_ref, w2_ref, b2_ref, w3_ref,   # inputs
                out_ref,                                          # output
                *, seq_length, unroll):
    # No grid: every ref is the full array, DMA'd into VMEM once; the output
    # stays VMEM-resident and is written back to HBM once at the end.
    x = x_ref[...].astype(jnp.bfloat16)                 # (Bp, 1024)
    w1 = w1_ref[...]                                    # (1024, 512) bf16
    w2 = w2_ref[...]                                    # (512, 256)  bf16
    w3 = w3_ref[...]                                    # (256, 128)  bf16 (zero-padded cols)
    Bp = x.shape[0]
    H1 = w1.shape[1]
    H2 = w2.shape[1]
    NC = w3.shape[1]

    # Hoisted bias broadcasts (executed once, not per timestep).
    b1b = jnp.broadcast_to(b1_ref[...], (Bp, H1))       # f32
    b2b = jnp.broadcast_to(b2_ref[...], (Bp, H2))       # f32

    # uses_ts=False: identical input every step -> layer-1 drive is constant
    # across time; the biggest matmul (1024x512) runs exactly once.
    a1 = jnp.dot(x, w1, preferred_element_type=jnp.float32) + b1b   # (Bp, H1) f32

    def step(ts, carry):
        v1, i1, v2, i2, v3, i3 = carry

        # --- LIFCell #1 (norse lif_feed_forward_step); Dropout = identity ---
        v1d = v1 + DT_MEM * ((V_LEAK - v1) + i1)
        i1d = i1 * (1.0 - DT_SYN)
        s1 = v1d > V_TH
        z1 = s1.astype(jnp.bfloat16)                    # spikes exact in bf16
        v1 = jnp.where(s1, V_RESET, v1d)                # v_reset == 0
        i1 = i1d + a1

        # --- Linear(512, 256) + LIFCell #2; Dropout = identity ---
        a2 = jnp.dot(z1, w2, preferred_element_type=jnp.float32) + b2b
        v2d = v2 + DT_MEM * ((V_LEAK - v2) + i2)
        i2d = i2 * (1.0 - DT_SYN)
        s2 = v2d > V_TH
        z2 = s2.astype(jnp.bfloat16)
        v2 = jnp.where(s2, V_RESET, v2d)
        i2 = i2d + a2

        # --- LILinearCell(256, n_classes): leaky integrator, no bias ---
        i_jump = i3 + jnp.dot(z2, w3, preferred_element_type=jnp.float32)
        v3 = v3 + DT_MEM * ((V_LEAK - v3) + i_jump)
        i3 = i_jump * (1.0 - DT_SYN)

        out_ref[ts] = v3                                # lane-dense (Bp, 128) VMEM store
        return (v1, i1, v2, i2, v3, i3)

    zeros = lambda n: jnp.zeros((Bp, n), jnp.float32)   # state=None in PyTorch
    init = (zeros(H1), zeros(H1), zeros(H2), zeros(H2), zeros(NC), zeros(NC))
    lax.fori_loop(0, seq_length, step, init, unroll=unroll)


def snn_model_b_forward(params, x, *, seq_length, n_classes):
    """x: (B, 1024) f32 -> voltages (seq_length, B, n_classes) f32."""
    B, in_dim = x.shape
    Bp = max(_round_up(B, SUBLANE), SUBLANE)            # pad batch to sublane min
    x_p = jnp.zeros((Bp, in_dim), x.dtype).at[:B].set(x)
    nc_pad = params["w3"].shape[1]                      # 128-lane padded classes

    kernel = functools.partial(
        _snn_kernel, seq_length=seq_length, unroll=(seq_length <= 32))

    out = pl.pallas_call(
        kernel,
        out_shape=jax.ShapeDtypeStruct((seq_length, Bp, nc_pad), jnp.float32),
        compiler_params=pltpu.CompilerParams(
            vmem_limit_bytes=32 * 1024 * 1024,          # footprint is ~1.5 MiB
        ),
    )(x_p, params["w1"], params["b1"], params["w2"], params["b2"], params["w3"])

    return out[:, :B, :n_classes]


def init_params(key, n_classes):
    """PyTorch-like init; weights stored pre-transposed [K, N] and in bf16
    (done once, outside the jitted forward).  w3 is zero-padded to 128 output
    lanes; the extra columns stay exactly 0 through the whole forward."""
    ks = jax.random.split(key, 5)

    def linear(kw, kb, out_f, in_f):
        bound = 1.0 / float(in_f) ** 0.5
        w = jax.random.uniform(kw, (out_f, in_f), jnp.float32, -bound, bound)
        b = jax.random.uniform(kb, (out_f,), jnp.float32, -bound, bound)
        return w.T.astype(jnp.bfloat16), b.reshape(1, out_f)

    w1, b1 = linear(ks[0], ks[1], 512, 1024)
    w2, b2 = linear(ks[2], ks[3], 256, 512)

    # LILinearCell weights: randn(out, in) / sqrt(in), no bias; pad out -> 128.
    nc_pad = max(_round_up(n_classes, LANE), LANE)
    w3_t = (jax.random.normal(ks[4], (n_classes, 256), jnp.float32)
            / float(256) ** 0.5).T                      # (256, n_classes)
    w3 = jnp.zeros((256, nc_pad), jnp.float32).at[:, :n_classes].set(w3_t)
    w3 = w3.astype(jnp.bfloat16)

    return {"w1": w1, "b1": b1, "w2": w2, "b2": b2, "w3": w3}


if __name__ == "__main__":
    n_classes = 10
    seq_length = 8
    batch = 2

    key = jax.random.PRNGKey(0)
    pkey, xkey = jax.random.split(key)
    params = init_params(pkey, n_classes)

    # Input consistent with Linear(1024, 512) and uses_ts=False: (B, 1024).
    x = jax.random.normal(xkey, (batch, 1024), jnp.float32) * 2.0

    fwd = jax.jit(functools.partial(
        snn_model_b_forward, seq_length=seq_length, n_classes=n_classes))
    out = jax.block_until_ready(fwd(params, x))

    assert out.shape == (seq_length, batch, n_classes), out.shape
    assert bool(jnp.all(jnp.isfinite(out)))
    print("KERNEL_OK")
</pallas_src>

<mosaic_0001>
module attributes {stable_mosaic.version = 11 : i64} {
  func.func @_snn_kernel(%arg0: memref<8x1024xf32, #tpu.memory_space<vmem>>, %arg1: memref<1024x512xbf16, #tpu.memory_space<vmem>>, %arg2: memref<1x512xf32, #tpu.memory_space<vmem>>, %arg3: memref<512x256xbf16, #tpu.memory_space<vmem>>, %arg4: memref<1x256xf32, #tpu.memory_space<vmem>>, %arg5: memref<256x128xbf16, #tpu.memory_space<vmem>>, %arg6: memref<8x8x128xf32, #tpu.memory_space<vmem>>) attributes {dimension_semantics = [], scalar_prefetch = 0 : i64, scratch_operands = 0 : i64, tpu.core_type = #tpu.core_type<tc>} {
    %c0 = arith.constant 0 : index
    %c0_0 = arith.constant 0 : index
    %0 = vector.load %arg0[%c0, %c0_0] : memref<8x1024xf32, #tpu.memory_space<vmem>>, vector<8x1024xf32>
    %1 = arith.truncf %0 : vector<8x1024xf32> to vector<8x1024xbf16>
    %c0_1 = arith.constant 0 : index
    %c0_2 = arith.constant 0 : index
    %2 = vector.load %arg1[%c0_1, %c0_2] : memref<1024x512xbf16, #tpu.memory_space<vmem>>, vector<1024x512xbf16>
    %c0_3 = arith.constant 0 : index
    %c0_4 = arith.constant 0 : index
    %3 = vector.load %arg3[%c0_3, %c0_4] : memref<512x256xbf16, #tpu.memory_space<vmem>>, vector<512x256xbf16>
    %c0_5 = arith.constant 0 : index
    %c0_6 = arith.constant 0 : index
    %4 = vector.load %arg5[%c0_5, %c0_6] : memref<256x128xbf16, #tpu.memory_space<vmem>>, vector<256x128xbf16>
    %c0_7 = arith.constant 0 : index
    %c0_8 = arith.constant 0 : index
    %5 = vector.load %arg2[%c0_7, %c0_8] : memref<1x512xf32, #tpu.memory_space<vmem>>, vector<1x512xf32>
    %6 = vector.shape_cast %5 : vector<1x512xf32> to vector<1x512xf32>
    %7 = vector.broadcast %6 : vector<1x512xf32> to vector<8x512xf32>
    %c0_9 = arith.constant 0 : index
    %c0_10 = arith.constant 0 : index
    %8 = vector.load %arg4[%c0_9, %c0_10] : memref<1x256xf32, #tpu.memory_space<vmem>>, vector<1x256xf32>
    %9 = vector.shape_cast %8 : vector<1x256xf32> to vector<1x256xf32>
    %10 = vector.broadcast %9 : vector<1x256xf32> to vector<8x256xf32>
    %cst = arith.constant dense<0.000000e+00> : vector<8x512xf32>
    %11 = tpu.matmul %1, %2, %cst {dimension_numbers = #tpu.dot_dimension_numbers<[1], [0], [0], [1], [0, 0, 1, 1], [], []>} : vector<8x1024xbf16>, vector<1024x512xbf16>, vector<8x512xf32> -> vector<8x512xf32>
    %12 = arith.addf %11, %7 : vector<8x512xf32>
    %cst_11 = arith.constant 0.000000e+00 : f32
    %13 = vector.broadcast %cst_11 : f32 to vector<8x512xf32>
    %cst_12 = arith.constant 0.000000e+00 : f32
    %14 = vector.broadcast %cst_12 : f32 to vector<8x512xf32>
    %cst_13 = arith.constant 0.000000e+00 : f32
    %15 = vector.broadcast %cst_13 : f32 to vector<8x256xf32>
    %cst_14 = arith.constant 0.000000e+00 : f32
    %16 = vector.broadcast %cst_14 : f32 to vector<8x256xf32>
    %cst_15 = arith.constant 0.000000e+00 : f32
    %17 = vector.broadcast %cst_15 : f32 to vector<8x128xf32>
    %cst_16 = arith.constant 0.000000e+00 : f32
    %18 = vector.broadcast %cst_16 : f32 to vector<8x128xf32>
    %c0_i32 = arith.constant 0 : i32
    %cst_17 = arith.constant 0.000000e+00 : f32
    %19 = vector.broadcast %cst_17 : f32 to vector<8x512xf32>
    %20 = arith.subf %19, %13 : vector<8x512xf32>
    %21 = arith.addf %20, %14 : vector<8x512xf32>
    %cst_18 = arith.constant 1.000000e-01 : f32
    %22 = vector.broadcast %cst_18 : f32 to vector<8x512xf32>
    %23 = arith.mulf %22, %21 : vector<8x512xf32>
    %24 = arith.addf %13, %23 : vector<8x512xf32>
    %cst_19 = arith.constant 8.000000e-01 : f32
    %25 = vector.broadcast %cst_19 : f32 to vector<8x512xf32>
    %26 = arith.mulf %14, %25 : vector<8x512xf32>
    %cst_20 = arith.constant 1.000000e+00 : f32
    %27 = vector.broadcast %cst_20 : f32 to vector<8x512xf32>
    %28 = arith.cmpf ogt, %24, %27 : vector<8x512xf32>
    %29 = arith.extui %28 : vector<8x512xi1> to vector<8x512xi32>
    %30 = arith.sitofp %29 : vector<8x512xi32> to vector<8x512xf32>
    %31 = arith.truncf %30 : vector<8x512xf32> to vector<8x512xbf16>
    %cst_21 = arith.constant 0.000000e+00 : f32
    %32 = vector.broadcast %cst_21 : f32 to vector<8x512xf32>
    %33 = arith.select %28, %32, %24 : vector<8x512xi1>, vector<8x512xf32>
    %34 = arith.addf %26, %12 : vector<8x512xf32>
    %cst_22 = arith.constant dense<0.000000e+00> : vector<8x256xf32>
    %35 = tpu.matmul %31, %3, %cst_22 {dimension_numbers = #tpu.dot_dimension_numbers<[1], [0], [0], [1], [0, 0, 1, 1], [], []>} : vector<8x512xbf16>, vector<512x256xbf16>, vector<8x256xf32> -> vector<8x256xf32>
    %36 = arith.addf %35, %10 : vector<8x256xf32>
    %cst_23 = arith.constant 0.000000e+00 : f32
    %37 = vector.broadcast %cst_23 : f32 to vector<8x256xf32>
    %38 = arith.subf %37, %15 : vector<8x256xf32>
    %39 = arith.addf %38, %16 : vector<8x256xf32>
    %cst_24 = arith.constant 1.000000e-01 : f32
    %40 = vector.broadcast %cst_24 : f32 to vector<8x256xf32>
    %41 = arith.mulf %40, %39 : vector<8x256xf32>
    %42 = arith.addf %15, %41 : vector<8x256xf32>
    %cst_25 = arith.constant 8.000000e-01 : f32
    %43 = vector.broadcast %cst_25 : f32 to vector<8x256xf32>
    %44 = arith.mulf %16, %43 : vector<8x256xf32>
    %cst_26 = arith.constant 1.000000e+00 : f32
    %45 = vector.broadcast %cst_26 : f32 to vector<8x256xf32>
    %46 = arith.cmpf ogt, %42, %45 : vector<8x256xf32>
    %47 = arith.extui %46 : vector<8x256xi1> to vector<8x256xi32>
    %48 = arith.sitofp %47 : vector<8x256xi32> to vector<8x256xf32>
    %49 = arith.truncf %48 : vector<8x256xf32> to vector<8x256xbf16>
    %cst_27 = arith.constant 0.000000e+00 : f32
    %50 = vector.broadcast %cst_27 : f32 to vector<8x256xf32>
    %51 = arith.select %46, %50, %42 : vector<8x256xi1>, vector<8x256xf32>
    %52 = arith.addf %44, %36 : vector<8x256xf32>
    %cst_28 = arith.constant dense<0.000000e+00> : vector<8x128xf32>
    %53 = tpu.matmul %49, %4, %cst_28 {dimension_numbers = #tpu.dot_dimension_numbers<[1], [0], [0], [1], [0, 0, 1, 1], [], []>} : vector<8x256xbf16>, vector<256x128xbf16>, vector<8x128xf32> -> vector<8x128xf32>
    %54 = arith.addf %18, %53 : vector<8x128xf32>
    %cst_29 = arith.constant 0.000000e+00 : f32
    %55 = vector.broadcast %cst_29 : f32 to vector<8x128xf32>
    %56 = arith.subf %55, %17 : vector<8x128xf32>
    %57 = arith.addf %56, %54 : vector<8x128xf32>
    %cst_30 = arith.constant 1.000000e-01 : f32
    %58 = vector.broadcast %cst_30 : f32 to vector<8x128xf32>
    %59 = arith.mulf %58, %57 : vector<8x128xf32>
    %60 = arith.addf %17, %59 : vector<8x128xf32>
    %cst_31 = arith.constant 8.000000e-01 : f32
    %61 = vector.broadcast %cst_31 : f32 to vector<8x128xf32>
    %62 = arith.mulf %54, %61 : vector<8x128xf32>
    %63 = arith.index_cast %c0_i32 : i32 to index
    %c0_32 = arith.constant 0 : index
    %c0_33 = arith.constant 0 : index
    %64 = vector.load %arg6[%63, %c0_32, %c0_33] : memref<8x8x128xf32, #tpu.memory_space<vmem>>, vector<1x8x128xf32>
    %65 = vector.shape_cast %64 : vector<1x8x128xf32> to vector<8x128xf32>
    %66 = vector.shape_cast %60 : vector<8x128xf32> to vector<1x8x128xf32>
    tpu.vector_store %arg6[%63, %c0_32, %c0_33], %66 {strides = array<i32>} : memref<8x8x128xf32, #tpu.memory_space<vmem>>, vector<1x8x128xf32>,
    %c1_i32 = arith.constant 1 : i32
    %cst_34 = arith.constant 0.000000e+00 : f32
    %67 = vector.broadcast %cst_34 : f32 to vector<8x512xf32>
    %68 = arith.subf %67, %33 : vector<8x512xf32>
    %69 = arith.addf %68, %34 : vector<8x512xf32>
    %cst_35 = arith.constant 1.000000e-01 : f32
    %70 = vector.broadcast %cst_35 : f32 to vector<8x512xf32>
    %71 = arith.mulf %70, %69 : vector<8x512xf32>
    %72 = arith.addf %33, %71 : vector<8x512xf32>
    %cst_36 = arith.constant 8.000000e-01 : f32
    %73 = vector.broadcast %cst_36 : f32 to vector<8x512xf32>
    %74 = arith.mulf %34, %73 : vector<8x512xf32>
    %cst_37 = arith.constant 1.000000e+00 : f32
    %75 = vector.broadcast %cst_37 : f32 to vector<8x512xf32>
    %76 = arith.cmpf ogt, %72, %75 : vector<8x512xf32>
    %77 = arith.extui %76 : vector<8x512xi1> to vector<8x512xi32>
    %78 = arith.sitofp %77 : vector<8x512xi32> to vector<8x512xf32>
    %79 = arith.truncf %78 : vector<8x512xf32> to vector<8x512xbf16>
    %cst_38 = arith.constant 0.000000e+00 : f32
    %80 = vector.broadcast %cst_38 : f32 to vector<8x512xf32>
    %81 = arith.select %76, %80, %72 : vector<8x512xi1>, vector<8x512xf32>
    %82 = arith.addf %74, %12 : vector<8x512xf32>
    %cst_39 = arith.constant dense<0.000000e+00> : vector<8x256xf32>
    %83 = tpu.matmul %79, %3, %cst_39 {dimension_numbers = #tpu.dot_dimension_numbers<[1], [0], [0], [1], [0, 0, 1, 1], [], []>} : vector<8x512xbf16>, vector<512x256xbf16>, vector<8x256xf32> -> vector<8x256xf32>
    %84 = arith.addf %83, %10 : vector<8x256xf32>
    %cst_40 = arith.constant 0.000000e+00 : f32
    %85 = vector.broadcast %cst_40 : f32 to vector<8x256xf32>
    %86 = arith.subf %85, %51 : vector<8x256xf32>
    %87 = arith.addf %86, %52 : vector<8x256xf32>
    %cst_41 = arith.constant 1.000000e-01 : f32
    %88 = vector.broadcast %cst_41 : f32 to vector<8x256xf32>
    %89 = arith.mulf %88, %87 : vector<8x256xf32>
    %90 = arith.addf %51, %89 : vector<8x256xf32>
    %cst_42 = arith.constant 8.000000e-01 : f32
    %91 = vector.broadcast %cst_42 : f32 to vector<8x256xf32>
    %92 = arith.mulf %52, %91 : vector<8x256xf32>
    %cst_43 = arith.constant 1.000000e+00 : f32
    %93 = vector.broadcast %cst_43 : f32 to vector<8x256xf32>
    %94 = arith.cmpf ogt, %90, %93 : vector<8x256xf32>
    %95 = arith.extui %94 : vector<8x256xi1> to vector<8x256xi32>
    %96 = arith.sitofp %95 : vector<8x256xi32> to vector<8x256xf32>
    %97 = arith.truncf %96 : vector<8x256xf32> to vector<8x256xbf16>
    %cst_44 = arith.constant 0.000000e+00 : f32
    %98 = vector.broadcast %cst_44 : f32 to vector<8x256xf32>
    %99 = arith.select %94, %98, %90 : vector<8x256xi1>, vector<8x256xf32>
    %100 = arith.addf %92, %84 : vector<8x256xf32>
    %cst_45 = arith.constant dense<0.000000e+00> : vector<8x128xf32>
    %101 = tpu.matmul %97, %4, %cst_45 {dimension_numbers = #tpu.dot_dimension_numbers<[1], [0], [0], [1], [0, 0, 1, 1], [], []>} : vector<8x256xbf16>, vector<256x128xbf16>, vector<8x128xf32> -> vector<8x128xf32>
    %102 = arith.addf %62, %101 : vector<8x128xf32>
    %cst_46 = arith.constant 0.000000e+00 : f32
    %103 = vector.broadcast %cst_46 : f32 to vector<8x128xf32>
    %104 = arith.subf %103, %60 : vector<8x128xf32>
    %105 = arith.addf %104, %102 : vector<8x128xf32>
    %cst_47 = arith.constant 1.000000e-01 : f32
    %106 = vector.broadcast %cst_47 : f32 to vector<8x128xf32>
    %107 = arith.mulf %106, %105 : vector<8x128xf32>
    %108 = arith.addf %60, %107 : vector<8x128xf32>
    %cst_48 = arith.constant 8.000000e-01 : f32
    %109 = vector.broadcast %cst_48 : f32 to vector<8x128xf32>
    %110 = arith.mulf %102, %109 : vector<8x128xf32>
    %111 = arith.index_cast %c1_i32 : i32 to index
    %c0_49 = arith.constant 0 : index
    %c0_50 = arith.constant 0 : index
    %112 = vector.load %arg6[%111, %c0_49, %c0_50] : memref<8x8x128xf32, #tpu.memory_space<vmem>>, vector<1x8x128xf32>
    %113 = vector.shape_cast %112 : vector<1x8x128xf32> to vector<8x128xf32>
    %114 = vector.shape_cast %108 : vector<8x128xf32> to vector<1x8x128xf32>
    tpu.vector_store %arg6[%111, %c0_49, %c0_50], %114 {strides = array<i32>} : memref<8x8x128xf32, #tpu.memory_space<vmem>>, vector<1x8x128xf32>,
    %c2_i32 = arith.constant 2 : i32
    %cst_51 = arith.constant 0.000000e+00 : f32
    %115 = vector.broadcast %cst_51 : f32 to vector<8x512xf32>
    %116 = arith.subf %115, %81 : vector<8x512xf32>
    %117 = arith.addf %116, %82 : vector<8x512xf32>
    %cst_52 = arith.constant 1.000000e-01 : f32
    %118 = vector.broadcast %cst_52 : f32 to vector<8x512xf32>
    %119 = arith.mulf %118, %117 : vector<8x512xf32>
    %120 = arith.addf %81, %119 : vector<8x512xf32>
    %cst_53 = arith.constant 8.000000e-01 : f32
    %121 = vector.broadcast %cst_53 : f32 to vector<8x512xf32>
    %122 = arith.mulf %82, %121 : vector<8x512xf32>
    %cst_54 = arith.constant 1.000000e+00 : f32
    %123 = vector.broadcast %cst_54 : f32 to vector<8x512xf32>
    %124 = arith.cmpf ogt, %120, %123 : vector<8x512xf32>
    %125 = arith.extui %124 : vector<8x512xi1> to vector<8x512xi32>
    %126 = arith.sitofp %125 : vector<8x512xi32> to vector<8x512xf32>
    %127 = arith.truncf %126 : vector<8x512xf32> to vector<8x512xbf16>
    %cst_55 = arith.constant 0.000000e+00 : f32
    %128 = vector.broadcast %cst_55 : f32 to vector<8x512xf32>
    %129 = arith.select %124, %128, %120 : vector<8x512xi1>, vector<8x512xf32>
    %130 = arith.addf %122, %12 : vector<8x512xf32>
    %cst_56 = arith.constant dense<0.000000e+00> : vector<8x256xf32>
    %131 = tpu.matmul %127, %3, %cst_56 {dimension_numbers = #tpu.dot_dimension_numbers<[1], [0], [0], [1], [0, 0, 1, 1], [], []>} : vector<8x512xbf16>, vector<512x256xbf16>, vector<8x256xf32> -> vector<8x256xf32>
    %132 = arith.addf %131, %10 : vector<8x256xf32>
    %cst_57 = arith.constant 0.000000e+00 : f32
    %133 = vector.broadcast %cst_57 : f32 to vector<8x256xf32>
    %134 = arith.subf %133, %99 : vector<8x256xf32>
    %135 = arith.addf %134, %100 : vector<8x256xf32>
    %cst_58 = arith.constant 1.000000e-01 : f32
    %136 = vector.broadcast %cst_58 : f32 to vector<8x256xf32>
    %137 = arith.mulf %136, %135 : vector<8x256xf32>
    %138 = arith.addf %99, %137 : vector<8x256xf32>
    %cst_59 = arith.constant 8.000000e-01 : f32
    %139 = vector.broadcast %cst_59 : f32 to vector<8x256xf32>
    %140 = arith.mulf %100, %139 : vector<8x256xf32>
    %cst_60 = arith.constant 1.000000e+00 : f32
    %141 = vector.broadcast %cst_60 : f32 to vector<8x256xf32>
    %142 = arith.cmpf ogt, %138, %141 : vector<8x256xf32>
    %143 = arith.extui %142 : vector<8x256xi1> to vector<8x256xi32>
    %144 = arith.sitofp %143 : vector<8x256xi32> to vector<8x256xf32>
    %145 = arith.truncf %144 : vector<8x256xf32> to vector<8x256xbf16>
    %cst_61 = arith.constant 0.000000e+00 : f32
    %146 = vector.broadcast %cst_61 : f32 to vector<8x256xf32>
    %147 = arith.select %142, %146, %138 : vector<8x256xi1>, vector<8x256xf32>
    %148 = arith.addf %140, %132 : vector<8x256xf32>
    %cst_62 = arith.constant dense<0.000000e+00> : vector<8x128xf32>
    %149 = tpu.matmul %145, %4, %cst_62 {dimension_numbers = #tpu.dot_dimension_numbers<[1], [0], [0], [1], [0, 0, 1, 1], [], []>} : vector<8x256xbf16>, vector<256x128xbf16>, vector<8x128xf32> -> vector<8x128xf32>
    %150 = arith.addf %110, %149 : vector<8x128xf32>
    %cst_63 = arith.constant 0.000000e+00 : f32
    %151 = vector.broadcast %cst_63 : f32 to vector<8x128xf32>
    %152 = arith.subf %151, %108 : vector<8x128xf32>
    %153 = arith.addf %152, %150 : vector<8x128xf32>
    %cst_64 = arith.constant 1.000000e-01 : f32
    %154 = vector.broadcast %cst_64 : f32 to vector<8x128xf32>
    %155 = arith.mulf %154, %153 : vector<8x128xf32>
    %156 = arith.addf %108, %155 : vector<8x128xf32>
    %cst_65 = arith.constant 8.000000e-01 : f32
    %157 = vector.broadcast %cst_65 : f32 to vector<8x128xf32>
    %158 = arith.mulf %150, %157 : vector<8x128xf32>
    %159 = arith.index_cast %c2_i32 : i32 to index
    %c0_66 = arith.constant 0 : index
    %c0_67 = arith.constant 0 : index
    %160 = vector.load %arg6[%159, %c0_66, %c0_67] : memref<8x8x128xf32, #tpu.memory_space<vmem>>, vector<1x8x128xf32>
    %161 = vector.shape_cast %160 : vector<1x8x128xf32> to vector<8x128xf32>
    %162 = vector.shape_cast %156 : vector<8x128xf32> to vector<1x8x128xf32>
    tpu.vector_store %arg6[%159, %c0_66, %c0_67], %162 {strides = array<i32>} : memref<8x8x128xf32, #tpu.memory_space<vmem>>, vector<1x8x128xf32>,
    %c3_i32 = arith.constant 3 : i32
    %cst_68 = arith.constant 0.000000e+00 : f32
    %163 = vector.broadcast %cst_68 : f32 to vector<8x512xf32>
    %164 = arith.subf %163, %129 : vector<8x512xf32>
    %165 = arith.addf %164, %130 : vector<8x512xf32>
    %cst_69 = arith.constant 1.000000e-01 : f32
    %166 = vector.broadcast %cst_69 : f32 to vector<8x512xf32>
    %167 = arith.mulf %166, %165 : vector<8x512xf32>
    %168 = arith.addf %129, %167 : vector<8x512xf32>
    %cst_70 = arith.constant 8.000000e-01 : f32
    %169 = vector.broadcast %cst_70 : f32 to vector<8x512xf32>
    %170 = arith.mulf %130, %169 : vector<8x512xf32>
    %cst_71 = arith.constant 1.000000e+00 : f32
    %171 = vector.broadcast %cst_71 : f32 to vector<8x512xf32>
    %172 = arith.cmpf ogt, %168, %171 : vector<8x512xf32>
    %173 = arith.extui %172 : vector<8x512xi1> to vector<8x512xi32>
    %174 = arith.sitofp %173 : vector<8x512xi32> to vector<8x512xf32>
    %175 = arith.truncf %174 : vector<8x512xf32> to vector<8x512xbf16>
    %cst_72 = arith.constant 0.000000e+00 : f32
    %176 = vector.broadcast %cst_72 : f32 to vector<8x512xf32>
    %177 = arith.select %172, %176, %168 : vector<8x512xi1>, vector<8x512xf32>
    %178 = arith.addf %170, %12 : vector<8x512xf32>
    %cst_73 = arith.constant dense<0.000000e+00> : vector<8x256xf32>
    %179 = tpu.matmul %175, %3, %cst_73 {dimension_numbers = #tpu.dot_dimension_numbers<[1], [0], [0], [1], [0, 0, 1, 1], [], []>} : vector<8x512xbf16>, vector<512x256xbf16>, vector<8x256xf32> -> vector<8x256xf32>
    %180 = arith.addf %179, %10 : vector<8x256xf32>
    %cst_74 = arith.constant 0.000000e+00 : f32
    %181 = vector.broadcast %cst_74 : f32 to vector<8x256xf32>
    %182 = arith.subf %181, %147 : vector<8x256xf32>
    %183 = arith.addf %182, %148 : vector<8x256xf32>
    %cst_75 = arith.constant 1.000000e-01 : f32
    %184 = vector.broadcast %cst_75 : f32 to vector<8x256xf32>
    %185 = arith.mulf %184, %183 : vector<8x256xf32>
    %186 = arith.addf %147, %185 : vector<8x256xf32>
    %cst_76 = arith.constant 8.000000e-01 : f32
    %187 = vector.broadcast %cst_76 : f32 to vector<8x256xf32>
    %188 = arith.mulf %148, %187 : vector<8x256xf32>
    %cst_77 = arith.constant 1.000000e+00 : f32
    %189 = vector.broadcast %cst_77 : f32 to vector<8x256xf32>
    %190 = arith.cmpf ogt, %186, %189 : vector<8x256xf32>
    %191 = arith.extui %190 : vector<8x256xi1> to vector<8x256xi32>
    %192 = arith.sitofp %191 : vector<8x256xi32> to vector<8x256xf32>
    %193 = arith.truncf %192 : vector<8x256xf32> to vector<8x256xbf16>
    %cst_78 = arith.constant 0.000000e+00 : f32
    %194 = vector.broadcast %cst_78 : f32 to vector<8x256xf32>
    %195 = arith.select %190, %194, %186 : vector<8x256xi1>, vector<8x256xf32>
    %196 = arith.addf %188, %180 : vector<8x256xf32>
    %cst_79 = arith.constant dense<0.000000e+00> : vector<8x128xf32>
    %197 = tpu.matmul %193, %4, %cst_79 {dimension_numbers = #tpu.dot_dimension_numbers<[1], [0], [0], [1], [0, 0, 1, 1], [], []>} : vector<8x256xbf16>, vector<256x128xbf16>, vector<8x128xf32> -> vector<8x128xf32>
    %198 = arith.addf %158, %197 : vector<8x128xf32>
    %cst_80 = arith.constant 0.000000e+00 : f32
    %199 = vector.broadcast %cst_80 : f32 to vector<8x128xf32>
    %200 = arith.subf %199, %156 : vector<8x128xf32>
    %201 = arith.addf %200, %198 : vector<8x128xf32>
    %cst_81 = arith.constant 1.000000e-01 : f32
    %202 = vector.broadcast %cst_81 : f32 to vector<8x128xf32>
    %203 = arith.mulf %202, %201 : vector<8x128xf32>
    %204 = arith.addf %156, %203 : vector<8x128xf32>
    %cst_82 = arith.constant 8.000000e-01 : f32
    %205 = vector.broadcast %cst_82 : f32 to vector<8x128xf32>
    %206 = arith.mulf %198, %205 : vector<8x128xf32>
    %207 = arith.index_cast %c3_i32 : i32 to index
    %c0_83 = arith.constant 0 : index
    %c0_84 = arith.constant 0 : index
    %208 = vector.load %arg6[%207, %c0_83, %c0_84] : memref<8x8x128xf32, #tpu.memory_space<vmem>>, vector<1x8x128xf32>
    %209 = vector.shape_cast %208 : vector<1x8x128xf32> to vector<8x128xf32>
    %210 = vector.shape_cast %204 : vector<8x128xf32> to vector<1x8x128xf32>
    tpu.vector_store %arg6[%207, %c0_83, %c0_84], %210 {strides = array<i32>} : memref<8x8x128xf32, #tpu.memory_space<vmem>>, vector<1x8x128xf32>,
    %c4_i32 = arith.constant 4 : i32
    %cst_85 = arith.constant 0.000000e+00 : f32
    %211 = vector.broadcast %cst_85 : f32 to vector<8x512xf32>
    %212 = arith.subf %211, %177 : vector<8x512xf32>
    %213 = arith.addf %212, %178 : vector<8x512xf32>
    %cst_86 = arith.constant 1.000000e-01 : f32
    %214 = vector.broadcast %cst_86 : f32 to vector<8x512xf32>
    %215 = arith.mulf %214, %213 : vector<8x512xf32>
    %216 = arith.addf %177, %215 : vector<8x512xf32>
    %cst_87 = arith.constant 8.000000e-01 : f32
    %217 = vector.broadcast %cst_87 : f32 to vector<8x512xf32>
    %218 = arith.mulf %178, %217 : vector<8x512xf32>
    %cst_88 = arith.constant 1.000000e+00 : f32
    %219 = vector.broadcast %cst_88 : f32 to vector<8x512xf32>
    %220 = arith.cmpf ogt, %216, %219 : vector<8x512xf32>
    %221 = arith.extui %220 : vector<8x512xi1> to vector<8x512xi32>
    %222 = arith.sitofp %221 : vector<8x512xi32> to vector<8x512xf32>
    %223 = arith.truncf %222 : vector<8x512xf32> to vector<8x512xbf16>
    %cst_89 = arith.constant 0.000000e+00 : f32
    %224 = vector.broadcast %cst_89 : f32 to vector<8x512xf32>
    %225 = arith.select %220, %224, %216 : vector<8x512xi1>, vector<8x512xf32>
    %226 = arith.addf %218, %12 : vector<8x512xf32>
    %cst_90 = arith.constant dense<0.000000e+00> : vector<8x256xf32>
    %227 = tpu.matmul %223, %3, %cst_90 {dimension_numbers = #tpu.dot_dimension_numbers<[1], [0], [0], [1], [0, 0, 1, 1], [], []>} : vector<8x512xbf16>, vector<512x256xbf16>, vector<8x256xf32> -> vector<8x256xf32>
    %228 = arith.addf %227, %10 : vector<8x256xf32>
    %cst_91 = arith.constant 0.000000e+00 : f32
    %229 = vector.broadcast %cst_91 : f32 to vector<8x256xf32>
    %230 = arith.subf %229, %195 : vector<8x256xf32>
    %231 = arith.addf %230, %196 : vector<8x256xf32>
    %cst_92 = arith.constant 1.000000e-01 : f32
    %232 = vector.broadcast %cst_92 : f32 to vector<8x256xf32>
    %233 = arith.mulf %232, %231 : vector<8x256xf32>
    %234 = arith.addf %195, %233 : vector<8x256xf32>
    %cst_93 = arith.constant 8.000000e-01 : f32
    %235 = vector.broadcast %cst_93 : f32 to vector<8x256xf32>
    %236 = arith.mulf %196, %235 : vector<8x256xf32>
    %cst_94 = arith.constant 1.000000e+00 : f32
    %237 = vector.broadcast %cst_94 : f32 to vector<8x256xf32>
    %238 = arith.cmpf ogt, %234, %237 : vector<8x256xf32>
    %239 = arith.extui %238 : vector<8x256xi1> to vector<8x256xi32>
    %240 = arith.sitofp %239 : vector<8x256xi32> to vector<8x256xf32>
    %241 = arith.truncf %240 : vector<8x256xf32> to vector<8x256xbf16>
    %cst_95 = arith.constant 0.000000e+00 : f32
    %242 = vector.broadcast %cst_95 : f32 to vector<8x256xf32>
    %243 = arith.select %238, %242, %234 : vector<8x256xi1>, vector<8x256xf32>
    %244 = arith.addf %236, %228 : vector<8x256xf32>
    %cst_96 = arith.constant dense<0.000000e+00> : vector<8x128xf32>
    %245 = tpu.matmul %241, %4, %cst_96 {dimension_numbers = #tpu.dot_dimension_numbers<[1], [0], [0], [1], [0, 0, 1, 1], [], []>} : vector<8x256xbf16>, vector<256x128xbf16>, vector<8x128xf32> -> vector<8x128xf32>
    %246 = arith.addf %206, %245 : vector<8x128xf32>
    %cst_97 = arith.constant 0.000000e+00 : f32
    %247 = vector.broadcast %cst_97 : f32 to vector<8x128xf32>
    %248 = arith.subf %247, %204 : vector<8x128xf32>
    %249 = arith.addf %248, %246 : vector<8x128xf32>
    %cst_98 = arith.constant 1.000000e-01 : f32
    %250 = vector.broadcast %cst_98 : f32 to vector<8x128xf32>
    %251 = arith.mulf %250, %249 : vector<8x128xf32>
    %252 = arith.addf %204, %251 : vector<8x128xf32>
    %cst_99 = arith.constant 8.000000e-01 : f32
    %253 = vector.broadcast %cst_99 : f32 to vector<8x128xf32>
    %254 = arith.mulf %246, %253 : vector<8x128xf32>
    %255 = arith.index_cast %c4_i32 : i32 to index
    %c0_100 = arith.constant 0 : index
    %c0_101 = arith.constant 0 : index
    %256 = vector.load %arg6[%255, %c0_100, %c0_101] : memref<8x8x128xf32, #tpu.memory_space<vmem>>, vector<1x8x128xf32>
    %257 = vector.shape_cast %256 : vector<1x8x128xf32> to vector<8x128xf32>
    %258 = vector.shape_cast %252 : vector<8x128xf32> to vector<1x8x128xf32>
    tpu.vector_store %arg6[%255, %c0_100, %c0_101], %258 {strides = array<i32>} : memref<8x8x128xf32, #tpu.memory_space<vmem>>, vector<1x8x128xf32>,
    %c5_i32 = arith.constant 5 : i32
    %cst_102 = arith.constant 0.000000e+00 : f32
    %259 = vector.broadcast %cst_102 : f32 to vector<8x512xf32>
    %260 = arith.subf %259, %225 : vector<8x512xf32>
    %261 = arith.addf %260, %226 : vector<8x512xf32>
    %cst_103 = arith.constant 1.000000e-01 : f32
    %262 = vector.broadcast %cst_103 : f32 to vector<8x512xf32>
    %263 = arith.mulf %262, %261 : vector<8x512xf32>
    %264 = arith.addf %225, %263 : vector<8x512xf32>
    %cst_104 = arith.constant 8.000000e-01 : f32
    %265 = vector.broadcast %cst_104 : f32 to vector<8x512xf32>
    %266 = arith.mulf %226, %265 : vector<8x512xf32>
    %cst_105 = arith.constant 1.000000e+00 : f32
    %267 = vector.broadcast %cst_105 : f32 to vector<8x512xf32>
    %268 = arith.cmpf ogt, %264, %267 : vector<8x512xf32>
    %269 = arith.extui %268 : vector<8x512xi1> to vector<8x512xi32>
    %270 = arith.sitofp %269 : vector<8x512xi32> to vector<8x512xf32>
    %271 = arith.truncf %270 : vector<8x512xf32> to vector<8x512xbf16>
    %cst_106 = arith.constant 0.000000e+00 : f32
    %272 = vector.broadcast %cst_106 : f32 to vector<8x512xf32>
    %273 = arith.select %268, %272, %264 : vector<8x512xi1>, vector<8x512xf32>
    %274 = arith.addf %266, %12 : vector<8x512xf32>
    %cst_107 = arith.constant dense<0.000000e+00> : vector<8x256xf32>
    %275 = tpu.matmul %271, %3, %cst_107 {dimension_numbers = #tpu.dot_dimension_numbers<[1], [0], [0], [1], [0, 0, 1, 1], [], []>} : vector<8x512xbf16>, vector<512x256xbf16>, vector<8x256xf32> -> vector<8x256xf32>
    %276 = arith.addf %275, %10 : vector<8x256xf32>
    %cst_108 = arith.constant 0.000000e+00 : f32
    %277 = vector.broadcast %cst_108 : f32 to vector<8x256xf32>
    %278 = arith.subf %277, %243 : vector<8x256xf32>
    %279 = arith.addf %278, %244 : vector<8x256xf32>
    %cst_109 = arith.constant 1.000000e-01 : f32
    %280 = vector.broadcast %cst_109 : f32 to vector<8x256xf32>
    %281 = arith.mulf %280, %279 : vector<8x256xf32>
    %282 = arith.addf %243, %281 : vector<8x256xf32>
    %cst_110 = arith.constant 8.000000e-01 : f32
    %283 = vector.broadcast %cst_110 : f32 to vector<8x256xf32>
    %284 = arith.mulf %244, %283 : vector<8x256xf32>
    %cst_111 = arith.constant 1.000000e+00 : f32
    %285 = vector.broadcast %cst_111 : f32 to vector<8x256xf32>
    %286 = arith.cmpf ogt, %282, %285 : vector<8x256xf32>
    %287 = arith.extui %286 : vector<8x256xi1> to vector<8x256xi32>
    %288 = arith.sitofp %287 : vector<8x256xi32> to vector<8x256xf32>
    %289 = arith.truncf %288 : vector<8x256xf32> to vector<8x256xbf16>
    %cst_112 = arith.constant 0.000000e+00 : f32
    %290 = vector.broadcast %cst_112 : f32 to vector<8x256xf32>
    %291 = arith.select %286, %290, %282 : vector<8x256xi1>, vector<8x256xf32>
    %292 = arith.addf %284, %276 : vector<8x256xf32>
    %cst_113 = arith.constant dense<0.000000e+00> : vector<8x128xf32>
    %293 = tpu.matmul %289, %4, %cst_113 {dimension_numbers = #tpu.dot_dimension_numbers<[1], [0], [0], [1], [0, 0, 1, 1], [], []>} : vector<8x256xbf16>, vector<256x128xbf16>, vector<8x128xf32> -> vector<8x128xf32>
    %294 = arith.addf %254, %293 : vector<8x128xf32>
    %cst_114 = arith.constant 0.000000e+00 : f32
    %295 = vector.broadcast %cst_114 : f32 to vector<8x128xf32>
    %296 = arith.subf %295, %252 : vector<8x128xf32>
    %297 = arith.addf %296, %294 : vector<8x128xf32>
    %cst_115 = arith.constant 1.000000e-01 : f32
    %298 = vector.broadcast %cst_115 : f32 to vector<8x128xf32>
    %299 = arith.mulf %298, %297 : vector<8x128xf32>
    %300 = arith.addf %252, %299 : vector<8x128xf32>
    %cst_116 = arith.constant 8.000000e-01 : f32
    %301 = vector.broadcast %cst_116 : f32 to vector<8x128xf32>
    %302 = arith.mulf %294, %301 : vector<8x128xf32>
    %303 = arith.index_cast %c5_i32 : i32 to index
    %c0_117 = arith.constant 0 : index
    %c0_118 = arith.constant 0 : index
    %304 = vector.load %arg6[%303, %c0_117, %c0_118] : memref<8x8x128xf32, #tpu.memory_space<vmem>>, vector<1x8x128xf32>
    %305 = vector.shape_cast %304 : vector<1x8x128xf32> to vector<8x128xf32>
    %306 = vector.shape_cast %300 : vector<8x128xf32> to vector<1x8x128xf32>
    tpu.vector_store %arg6[%303, %c0_117, %c0_118], %306 {strides = array<i32>} : memref<8x8x128xf32, #tpu.memory_space<vmem>>, vector<1x8x128xf32>,
    %c6_i32 = arith.constant 6 : i32
    %cst_119 = arith.constant 0.000000e+00 : f32
    %307 = vector.broadcast %cst_119 : f32 to vector<8x512xf32>
    %308 = arith.subf %307, %273 : vector<8x512xf32>
    %309 = arith.addf %308, %274 : vector<8x512xf32>
    %cst_120 = arith.constant 1.000000e-01 : f32
    %310 = vector.broadcast %cst_120 : f32 to vector<8x512xf32>
    %311 = arith.mulf %310, %309 : vector<8x512xf32>
    %312 = arith.addf %273, %311 : vector<8x512xf32>
    %cst_121 = arith.constant 8.000000e-01 : f32
    %313 = vector.broadcast %cst_121 : f32 to vector<8x512xf32>
    %314 = arith.mulf %274, %313 : vector<8x512xf32>
    %cst_122 = arith.constant 1.000000e+00 : f32
    %315 = vector.broadcast %cst_122 : f32 to vector<8x512xf32>
    %316 = arith.cmpf ogt, %312, %315 : vector<8x512xf32>
    %317 = arith.extui %316 : vector<8x512xi1> to vector<8x512xi32>
    %318 = arith.sitofp %317 : vector<8x512xi32> to vector<8x512xf32>
    %319 = arith.truncf %318 : vector<8x512xf32> to vector<8x512xbf16>
    %cst_123 = arith.constant 0.000000e+00 : f32
    %320 = vector.broadcast %cst_123 : f32 to vector<8x512xf32>
    %321 = arith.select %316, %320, %312 : vector<8x512xi1>, vector<8x512xf32>
    %322 = arith.addf %314, %12 : vector<8x512xf32>
    %cst_124 = arith.constant dense<0.000000e+00> : vector<8x256xf32>
    %323 = tpu.matmul %319, %3, %cst_124 {dimension_numbers = #tpu.dot_dimension_numbers<[1], [0], [0], [1], [0, 0, 1, 1], [], []>} : vector<8x512xbf16>, vector<512x256xbf16>, vector<8x256xf32> -> vector<8x256xf32>
    %324 = arith.addf %323, %10 : vector<8x256xf32>
    %cst_125 = arith.constant 0.000000e+00 : f32
    %325 = vector.broadcast %cst_125 : f32 to vector<8x256xf32>
    %326 = arith.subf %325, %291 : vector<8x256xf32>
    %327 = arith.addf %326, %292 : vector<8x256xf32>
    %cst_126 = arith.constant 1.000000e-01 : f32
    %328 = vector.broadcast %cst_126 : f32 to vector<8x256xf32>
    %329 = arith.mulf %328, %327 : vector<8x256xf32>
    %330 = arith.addf %291, %329 : vector<8x256xf32>
    %cst_127 = arith.constant 8.000000e-01 : f32
    %331 = vector.broadcast %cst_127 : f32 to vector<8x256xf32>
    %332 = arith.mulf %292, %331 : vector<8x256xf32>
    %cst_128 = arith.constant 1.000000e+00 : f32
    %333 = vector.broadcast %cst_128 : f32 to vector<8x256xf32>
    %334 = arith.cmpf ogt, %330, %333 : vector<8x256xf32>
    %335 = arith.extui %334 : vector<8x256xi1> to vector<8x256xi32>
    %336 = arith.sitofp %335 : vector<8x256xi32> to vector<8x256xf32>
    %337 = arith.truncf %336 : vector<8x256xf32> to vector<8x256xbf16>
    %cst_129 = arith.constant 0.000000e+00 : f32
    %338 = vector.broadcast %cst_129 : f32 to vector<8x256xf32>
    %339 = arith.select %334, %338, %330 : vector<8x256xi1>, vector<8x256xf32>
    %340 = arith.addf %332, %324 : vector<8x256xf32>
    %cst_130 = arith.constant dense<0.000000e+00> : vector<8x128xf32>
    %341 = tpu.matmul %337, %4, %cst_130 {dimension_numbers = #tpu.dot_dimension_numbers<[1], [0], [0], [1], [0, 0, 1, 1], [], []>} : vector<8x256xbf16>, vector<256x128xbf16>, vector<8x128xf32> -> vector<8x128xf32>
    %342 = arith.addf %302, %341 : vector<8x128xf32>
    %cst_131 = arith.constant 0.000000e+00 : f32
    %343 = vector.broadcast %cst_131 : f32 to vector<8x128xf32>
    %344 = arith.subf %343, %300 : vector<8x128xf32>
    %345 = arith.addf %344, %342 : vector<8x128xf32>
    %cst_132 = arith.constant 1.000000e-01 : f32
    %346 = vector.broadcast %cst_132 : f32 to vector<8x128xf32>
    %347 = arith.mulf %346, %345 : vector<8x128xf32>
    %348 = arith.addf %300, %347 : vector<8x128xf32>
    %cst_133 = arith.constant 8.000000e-01 : f32
    %349 = vector.broadcast %cst_133 : f32 to vector<8x128xf32>
    %350 = arith.mulf %342, %349 : vector<8x128xf32>
    %351 = arith.index_cast %c6_i32 : i32 to index
    %c0_134 = arith.constant 0 : index
    %c0_135 = arith.constant 0 : index
    %352 = vector.load %arg6[%351, %c0_134, %c0_135] : memref<8x8x128xf32, #tpu.memory_space<vmem>>, vector<1x8x128xf32>
    %353 = vector.shape_cast %352 : vector<1x8x128xf32> to vector<8x128xf32>
    %354 = vector.shape_cast %348 : vector<8x128xf32> to vector<1x8x128xf32>
    tpu.vector_store %arg6[%351, %c0_134, %c0_135], %354 {strides = array<i32>} : memref<8x8x128xf32, #tpu.memory_space<vmem>>, vector<1x8x128xf32>,
    %c7_i32 = arith.constant 7 : i32
    %cst_136 = arith.constant 0.000000e+00 : f32
    %355 = vector.broadcast %cst_136 : f32 to vector<8x512xf32>
    %356 = arith.subf %355, %321 : vector<8x512xf32>
    %357 = arith.addf %356, %322 : vector<8x512xf32>
    %cst_137 = arith.constant 1.000000e-01 : f32
    %358 = vector.broadcast %cst_137 : f32 to vector<8x512xf32>
    %359 = arith.mulf %358, %357 : vector<8x512xf32>
    %360 = arith.addf %321, %359 : vector<8x512xf32>
    %cst_138 = arith.constant 8.000000e-01 : f32
    %361 = vector.broadcast %cst_138 : f32 to vector<8x512xf32>
    %362 = arith.mulf %322, %361 : vector<8x512xf32>
    %cst_139 = arith.constant 1.000000e+00 : f32
    %363 = vector.broadcast %cst_139 : f32 to vector<8x512xf32>
    %364 = arith.cmpf ogt, %360, %363 : vector<8x512xf32>
    %365 = arith.extui %364 : vector<8x512xi1> to vector<8x512xi32>
    %366 = arith.sitofp %365 : vector<8x512xi32> to vector<8x512xf32>
    %367 = arith.truncf %366 : vector<8x512xf32> to vector<8x512xbf16>
    %cst_140 = arith.constant 0.000000e+00 : f32
    %368 = vector.broadcast %cst_140 : f32 to vector<8x512xf32>
    %369 = arith.select %364, %368, %360 : vector<8x512xi1>, vector<8x512xf32>
    %370 = arith.addf %362, %12 : vector<8x512xf32>
    %cst_141 = arith.constant dense<0.000000e+00> : vector<8x256xf32>
    %371 = tpu.matmul %367, %3, %cst_141 {dimension_numbers = #tpu.dot_dimension_numbers<[1], [0], [0], [1], [0, 0, 1, 1], [], []>} : vector<8x512xbf16>, vector<512x256xbf16>, vector<8x256xf32> -> vector<8x256xf32>
    %372 = arith.addf %371, %10 : vector<8x256xf32>
    %cst_142 = arith.constant 0.000000e+00 : f32
    %373 = vector.broadcast %cst_142 : f32 to vector<8x256xf32>
    %374 = arith.subf %373, %339 : vector<8x256xf32>
    %375 = arith.addf %374, %340 : vector<8x256xf32>
    %cst_143 = arith.constant 1.000000e-01 : f32
    %376 = vector.broadcast %cst_143 : f32 to vector<8x256xf32>
    %377 = arith.mulf %376, %375 : vector<8x256xf32>
    %378 = arith.addf %339, %377 : vector<8x256xf32>
    %cst_144 = arith.constant 8.000000e-01 : f32
    %379 = vector.broadcast %cst_144 : f32 to vector<8x256xf32>
    %380 = arith.mulf %340, %379 : vector<8x256xf32>
    %cst_145 = arith.constant 1.000000e+00 : f32
    %381 = vector.broadcast %cst_145 : f32 to vector<8x256xf32>
    %382 = arith.cmpf ogt, %378, %381 : vector<8x256xf32>
    %383 = arith.extui %382 : vector<8x256xi1> to vector<8x256xi32>
    %384 = arith.sitofp %383 : vector<8x256xi32> to vector<8x256xf32>
    %385 = arith.truncf %384 : vector<8x256xf32> to vector<8x256xbf16>
    %cst_146 = arith.constant 0.000000e+00 : f32
    %386 = vector.broadcast %cst_146 : f32 to vector<8x256xf32>
    %387 = arith.select %382, %386, %378 : vector<8x256xi1>, vector<8x256xf32>
    %388 = arith.addf %380, %372 : vector<8x256xf32>
    %cst_147 = arith.constant dense<0.000000e+00> : vector<8x128xf32>
    %389 = tpu.matmul %385, %4, %cst_147 {dimension_numbers = #tpu.dot_dimension_numbers<[1], [0], [0], [1], [0, 0, 1, 1], [], []>} : vector<8x256xbf16>, vector<256x128xbf16>, vector<8x128xf32> -> vector<8x128xf32>
    %390 = arith.addf %350, %389 : vector<8x128xf32>
    %cst_148 = arith.constant 0.000000e+00 : f32
    %391 = vector.broadcast %cst_148 : f32 to vector<8x128xf32>
    %392 = arith.subf %391, %348 : vector<8x128xf32>
    %393 = arith.addf %392, %390 : vector<8x128xf32>
    %cst_149 = arith.constant 1.000000e-01 : f32
    %394 = vector.broadcast %cst_149 : f32 to vector<8x128xf32>
    %395 = arith.mulf %394, %393 : vector<8x128xf32>
    %396 = arith.addf %348, %395 : vector<8x128xf32>
    %cst_150 = arith.constant 8.000000e-01 : f32
    %397 = vector.broadcast %cst_150 : f32 to vector<8x128xf32>
    %398 = arith.mulf %390, %397 : vector<8x128xf32>
    %399 = arith.index_cast %c7_i32 : i32 to index
    %c0_151 = arith.constant 0 : index
    %c0_152 = arith.constant 0 : index
    %400 = vector.load %arg6[%399, %c0_151, %c0_152] : memref<8x8x128xf32, #tpu.memory_space<vmem>>, vector<1x8x128xf32>
    %401 = vector.shape_cast %400 : vector<1x8x128xf32> to vector<8x128xf32>
    %402 = vector.shape_cast %396 : vector<8x128xf32> to vector<1x8x128xf32>
    tpu.vector_store %arg6[%399, %c0_151, %c0_152], %402 {strides = array<i32>} : memref<8x8x128xf32, #tpu.memory_space<vmem>>, vector<1x8x128xf32>,
    %c8_i32 = arith.constant 8 : i32
    return
  }
}

</mosaic_0001>

<llo_original>
// kernel: snn_model_b_forward.1
$region0: #{snn_model_b_forward.1}
  #allocation0 [shape = 'u32[]', space=smem, size = 0x4, offset = 0x4, fixed_abs, tag = 'smem constant byte address 0x4 - core index']
  #allocation1 [shape = 'u32[144,128]{1,0:T(1,128)}', space=vmem, size = 0x12000, scoped, tag = 'internal scratch']
  %s0 = inlined_call_operand.vmem [shape: f32[8,1024], index: 0, kind: input, shape index: {}]
  %s1 = inlined_call_operand.hbm [shape: bf16[1024,512], index: 1, kind: input, shape index: {}]
  %s2 = inlined_call_operand.vmem [shape: f32[1,512], index: 2, kind: input, shape index: {}]
  %s3 = inlined_call_operand.hbm [shape: bf16[512,256], index: 3, kind: input, shape index: {}]
  %s4 = inlined_call_operand.vmem [shape: f32[1,256], index: 4, kind: input, shape index: {}]
  %s5 = inlined_call_operand.hbm [shape: bf16[256,128], index: 5, kind: input, shape index: {}]
  %s6 = inlined_call_operand.vmem [shape: f32[8,8,128], index: 6, kind: output, shape index: {}]
  %s7 = sld [smem:[#allocation0]]
  $region46: #{snn_model_b_forward.1} parent=0
    _
  %s9 = ssub.s32 1, %s7
  %s10 = scalar_select 0, %s9, %s7
  $region1: #{snn_model_b_forward.1} parent=0
    #allocation2 [shape = 'u8[1048576]{0}', space=vmem, size = 0x100000, scoped, tag = 'input window, operand 1, single buffered']
    #allocation3 [shape = 's32[1]{0}', space=sflag, size = 0x4, scoped, tag = 'scoped memory for snn_model_b_forward.1']
    #allocation4 [shape = 'u8[262144]{0}', space=vmem, size = 0x40000, scoped, tag = 'input window, operand 3, single buffered']
    #allocation5 [shape = 's32[1]{0}', space=sflag, size = 0x4, scoped, tag = 'scoped memory for snn_model_b_forward.1']
    #allocation6 [shape = 'u8[65536]{0}', space=vmem, size = 0x10000, scoped, tag = 'input window, operand 5, single buffered']
    %11 = vsyncpa [#allocation3], 0
    %12 = vsyncpa [#allocation5], 0
    // Predicated region
    $region2: #{snn_model_b_forward.1} parent=1 // pred_check
      _
    $region3: #{snn_model_b_forward.1} parent=1 // pred_check_branch
      %14 = sbr.rel (0) target = $region5
    $region4: #{snn_model_b_forward.1} parent=1 // pred_region
      _
    $region5: #{snn_model_b_forward.1} parent=1 // pred_fallthru
      _
    // Predicated region
    $region6: #{snn_model_b_forward.1} parent=1 // pred_check
      _
    $region7: #{snn_model_b_forward.1} parent=1 // pred_check_branch
      %16 = sbr.rel (0) target = $region9
    $region8: #{snn_model_b_forward.1} parent=1 // pred_region
      %s18 = ssub.s32 32768, 32768
      %19 = vsyncadd [#allocation3], %s18
      %s20 = sshll.u32 [#allocation2], 4
      %s21 = int_to_ptr.vmem [resolvable:$true] %s20
      %26 = dma.hbm_to_vmem [thread:$0]  %s1, 32768, %s21, [#allocation3], 256, 256, 16
    $region9: #{snn_model_b_forward.1} parent=1 // pred_fallthru
      _
    // Predicated region
    $region10: #{snn_model_b_forward.1} parent=1 // pred_check
      _
    $region11: #{snn_model_b_forward.1} parent=1 // pred_check_branch
      %28 = sbr.rel (0) target = $region13
    $region12: #{snn_model_b_forward.1} parent=1 // pred_region
      _
    $region13: #{snn_model_b_forward.1} parent=1 // pred_fallthru
      _
    // Predicated region
    $region14: #{snn_model_b_forward.1} parent=1 // pred_check
      _
    $region15: #{snn_model_b_forward.1} parent=1 // pred_check_branch
      %30 = sbr.rel (0) target = $region17
    $region16: #{snn_model_b_forward.1} parent=1 // pred_region
      %s32 = ssub.s32 8192, 8192
      %33 = vsyncadd [#allocation5], %s32
      %s34 = sshll.u32 [#allocation4], 4
      %s35 = int_to_ptr.vmem [resolvable:$true] %s34
      %40 = dma.hbm_to_vmem [thread:$0]  %s3, 8192, %s35, [#allocation5], 128, 128, 8
    $region17: #{snn_model_b_forward.1} parent=1 // pred_fallthru
      _
    // Predicated region
    $region18: #{snn_model_b_forward.1} parent=1 // pred_check
      _
    $region19: #{snn_model_b_forward.1} parent=1 // pred_check_branch
      %42 = sbr.rel (0) target = $region21
    $region20: #{snn_model_b_forward.1} parent=1 // pred_region
      _
    $region21: #{snn_model_b_forward.1} parent=1 // pred_fallthru
      _
    // Predicated region
    $region22: #{snn_model_b_forward.1} parent=1 // pred_check
      _
    $region23: #{snn_model_b_forward.1} parent=1 // pred_check_branch
      %44 = sbr.rel (0) target = $region25
    $region24: #{snn_model_b_forward.1} parent=1 // pred_region
      %s46 = ssub.s32 2048, 2048
      %47 = vsyncadd [#allocation5], %s46
      %s48 = sshll.u32 [#allocation6], 4
      %s49 = int_to_ptr.vmem [resolvable:$true] %s48
      %54 = dma.hbm_to_vmem [thread:$0]  %s5, 2048, %s49, [#allocation5], 64, 64, 4
    $region25: #{snn_model_b_forward.1} parent=1 // pred_fallthru
      _
    // Predicated region
    $region26: #{snn_model_b_forward.1} parent=1 // pred_check
      _
    $region27: #{snn_model_b_forward.1} parent=1 // pred_check_branch
      %56 = sbr.rel (0) target = $region29
    $region28: #{snn_model_b_forward.1} parent=1 // pred_region
      %57 = dma.done [#allocation3], 32768
    $region29: #{snn_model_b_forward.1} parent=1 // pred_fallthru
      _
    // Predicated region
    $region30: #{snn_model_b_forward.1} parent=1 // pred_check
      _
    $region31: #{snn_model_b_forward.1} parent=1 // pred_check_branch
      %59 = sbr.rel (0) target = $region33
    $region32: #{snn_model_b_forward.1} parent=1 // pred_region
      %60 = dma.done [#allocation5], 8192
    $region33: #{snn_model_b_forward.1} parent=1 // pred_fallthru
      _
    // Predicated region
    $region34: #{snn_model_b_forward.1} parent=1 // pred_check
      _
    $region35: #{snn_model_b_forward.1} parent=1 // pred_check_branch
      %62 = sbr.rel (0) target = $region37
    $region36: #{snn_model_b_forward.1} parent=1 // pred_region
      %63 = dma.done [#allocation5], 2048
    $region37: #{snn_model_b_forward.1} parent=1 // pred_fallthru
      _
    %v65 = vld [vmem:[%s0] sm:$0xff]
    %v66 = vld [vmem:[%s0 + $0x8] sm:$0xff]
    %v67 = vld [vmem:[%s0 + $0x10] sm:$0xff]
    %v68 = vld [vmem:[%s0 + $0x18] sm:$0xff]
    %v69 = vld [vmem:[%s0 + $0x20] sm:$0xff]
    %v70 = vld [vmem:[%s0 + $0x28] sm:$0xff]
    %v71 = vld [vmem:[%s0 + $0x30] sm:$0xff]
    %v72 = vld [vmem:[%s0 + $0x38] sm:$0xff]
    %v73 = vpack.c.bf16 %v65, %v65
    %v74 = vpack.c.bf16 %v66, %v66
    %v75 = vpack.c.bf16 %v67, %v67
    %v76 = vpack.c.bf16 %v68, %v68
    %v77 = vpack.c.bf16 %v69, %v69
    %v78 = vpack.c.bf16 %v70, %v70
    %v79 = vpack.c.bf16 %v71, %v71
    %v80 = vpack.c.bf16 %v72, %v72
    %v81 = vld [vmem:[#allocation2] sm:$0xff]
    %v82 = vld [vmem:[#allocation2 + $0x8] sm:$0xff]
    %v83 = vld [vmem:[#allocation2 + $0x10] sm:$0xff]
    %v84 = vld [vmem:[#allocation2 + $0x18] sm:$0xff]
    %v85 = vld [vmem:[#allocation2 + $0x20] sm:$0xff]
    %v86 = vld [vmem:[#allocation2 + $0x28] sm:$0xff]
    %v87 = vld [vmem:[#allocation2 + $0x30] sm:$0xff]
    %v88 = vld [vmem:[#allocation2 + $0x38] sm:$0xff]
    %v89 = vld [vmem:[#allocation2 + $0x40] sm:$0xff]
    %v90 = vld [vmem:[#allocation2 + $0x48] sm:$0xff]
    %v91 = vld [vmem:[#allocation2 + $0x50] sm:$0xff]
    %v92 = vld [vmem:[#allocation2 + $0x58] sm:$0xff]
    %v93 = vld [vmem:[#allocation2 + $0x60] sm:$0xff]
    %v94 = vld [vmem:[#allocation2 + $0x68] sm:$0xff]
    %v95 = vld [vmem:[#allocation2 + $0x70] sm:$0xff]
    %v96 = vld [vmem:[#allocation2 + $0x78] sm:$0xff]
    %v97 = vld [vmem:[#allocation2 + $0x80] sm:$0xff]
    %v98 = vld [vmem:[#allocation2 + $0x88] sm:$0xff]
    %v99 = vld [vmem:[#allocation2 + $0x90] sm:$0xff]
    %v100 = vld [vmem:[#allocation2 + $0x98] sm:$0xff]
    %v101 = vld [vmem:[#allocation2 + $0xa0] sm:$0xff]
    %v102 = vld [vmem:[#allocation2 + $0xa8] sm:$0xff]
    %v103 = vld [vmem:[#allocation2 + $0xb0] sm:$0xff]
    %v104 = vld [vmem:[#allocation2 + $0xb8] sm:$0xff]
    %v105 = vld [vmem:[#allocation2 + $0xc0] sm:$0xff]
    %v106 = vld [vmem:[#allocation2 + $0xc8] sm:$0xff]
    %v107 = vld [vmem:[#allocation2 + $0xd0] sm:$0xff]
    %v108 = vld [vmem:[#allocation2 + $0xd8] sm:$0xff]
    %v109 = vld [vmem:[#allocation2 + $0xe0] sm:$0xff]
    %v110 = vld [vmem:[#allocation2 + $0xe8] sm:$0xff]
    %v111 = vld [vmem:[#allocation2 + $0xf0] sm:$0xff]
    %v112 = vld [vmem:[#allocation2 + $0xf8] sm:$0xff]
    %v113 = vld [vmem:[#allocation2 + $0x100] sm:$0xff]
    %v114 = vld [vmem:[#allocation2 + $0x108] sm:$0xff]
    %v115 = vld [vmem:[#allocation2 + $0x110] sm:$0xff]
    %v116 = vld [vmem:[#allocation2 + $0x118] sm:$0xff]
    %v117 = vld [vmem:[#allocation2 + $0x120] sm:$0xff]
    %v118 = vld [vmem:[#allocation2 + $0x128] sm:$0xff]
    %v119 = vld [vmem:[#allocation2 + $0x130] sm:$0xff]
    %v120 = vld [vmem:[#allocation2 + $0x138] sm:$0xff]
    %v121 = vld [vmem:[#allocation2 + $0x140] sm:$0xff]
    %v122 = vld [vmem:[#allocation2 + $0x148] sm:$0xff]
    %v123 = vld [vmem:[#allocation2 + $0x150] sm:$0xff]
    %v124 = vld [vmem:[#allocation2 + $0x158] sm:$0xff]
    %v125 = vld [vmem:[#allocation2 + $0x160] sm:$0xff]
    %v126 = vld [vmem:[#allocation2 + $0x168] sm:$0xff]
    %v127 = vld [vmem:[#allocation2 + $0x170] sm:$0xff]
    %v128 = vld [vmem:[#allocation2 + $0x178] sm:$0xff]
    %v129 = vld [vmem:[#allocation2 + $0x180] sm:$0xff]
    %v130 = vld [vmem:[#allocation2 + $0x188] sm:$0xff]
    %v131 = vld [vmem:[#allocation2 + $0x190] sm:$0xff]
    %v132 = vld [vmem:[#allocation2 + $0x198] sm:$0xff]
    %v133 = vld [vmem:[#allocation2 + $0x1a0] sm:$0xff]
    %v134 = vld [vmem:[#allocation2 + $0x1a8] sm:$0xff]
    %v135 = vld [vmem:[#allocation2 + $0x1b0] sm:$0xff]
    %v136 = vld [vmem:[#allocation2 + $0x1b8] sm:$0xff]
    %v137 = vld [vmem:[#allocation2 + $0x1c0] sm:$0xff]
    %v138 = vld [vmem:[#allocation2 + $0x1c8] sm:$0xff]
    %v139 = vld [vmem:[#allocation2 + $0x1d0] sm:$0xff]
    %v140 = vld [vmem:[#allocation2 + $0x1d8] sm:$0xff]
    %v141 = vld [vmem:[#allocation2 + $0x1e0] sm:$0xff]
    %v142 = vld [vmem:[#allocation2 + $0x1e8] sm:$0xff]
    %v143 = vld [vmem:[#allocation2 + $0x1f0] sm:$0xff]
    %v144 = vld [vmem:[#allocation2 + $0x1f8] sm:$0xff]
    %v145 = vld [vmem:[#allocation2 + $0x200] sm:$0xff]
    %v146 = vld [vmem:[#allocation2 + $0x208] sm:$0xff]
    %v147 = vld [vmem:[#allocation2 + $0x210] sm:$0xff]
    %v148 = vld [vmem:[#allocation2 + $0x218] sm:$0xff]
    %v149 = vld [vmem:[#allocation2 + $0x220] sm:$0xff]
    %v150 = vld [vmem:[#allocation2 + $0x228] sm:$0xff]
    %v151 = vld [vmem:[#allocation2 + $0x230] sm:$0xff]
    %v152 = vld [vmem:[#allocation2 + $0x238] sm:$0xff]
    %v153 = vld [vmem:[#allocation2 + $0x240] sm:$0xff]
    %v154 = vld [vmem:[#allocation2 + $0x248] sm:$0xff]
    %v155 = vld [vmem:[#allocation2 + $0x250] sm:$0xff]
    %v156 = vld [vmem:[#allocation2 + $0x258] sm:$0xff]
    %v157 = vld [vmem:[#allocation2 + $0x260] sm:$0xff]
    %v158 = vld [vmem:[#allocation2 + $0x268] sm:$0xff]
    %v159 = vld [vmem:[#allocation2 + $0x270] sm:$0xff]
    %v160 = vld [vmem:[#allocation2 + $0x278] sm:$0xff]
    %v161 = vld [vmem:[#allocation2 + $0x280] sm:$0xff]
    %v162 = vld [vmem:[#allocation2 + $0x288] sm:$0xff]
    %v163 = vld [vmem:[#allocation2 + $0x290] sm:$0xff]
    %v164 = vld [vmem:[#allocation2 + $0x298] sm:$0xff]
    %v165 = vld [vmem:[#allocation2 + $0x2a0] sm:$0xff]
    %v166 = vld [vmem:[#allocation2 + $0x2a8] sm:$0xff]
    %v167 = vld [vmem:[#allocation2 + $0x2b0] sm:$0xff]
    %v168 = vld [vmem:[#allocation2 + $0x2b8] sm:$0xff]
    %v169 = vld [vmem:[#allocation2 + $0x2c0] sm:$0xff]
    %v170 = vld [vmem:[#allocation2 + $0x2c8] sm:$0xff]
    %v171 = vld [vmem:[#allocation2 + $0x2d0] sm:$0xff]
    %v172 = vld [vmem:[#allocation2 + $0x2d8] sm:$0xff]
    %v173 = vld [vmem:[#allocation2 + $0x2e0] sm:$0xff]
    %v174 = vld [vmem:[#allocation2 + $0x2e8] sm:$0xff]
    %v175 = vld [vmem:[#allocation2 + $0x2f0] sm:$0xff]
    %v176 = vld [vmem:[#allocation2 + $0x2f8] sm:$0xff]
    %v177 = vld [vmem:[#allocation2 + $0x300] sm:$0xff]
    %v178 = vld [vmem:[#allocation2 + $0x308] sm:$0xff]
    %v179 = vld [vmem:[#allocation2 + $0x310] sm:$0xff]
    %v180 = vld [vmem:[#allocation2 + $0x318] sm:$0xff]
    %v181 = vld [vmem:[#allocation2 + $0x320] sm:$0xff]
    %v182 = vld [vmem:[#allocation2 + $0x328] sm:$0xff]
    %v183 = vld [vmem:[#allocation2 + $0x330] sm:$0xff]
    %v184 = vld [vmem:[#allocation2 + $0x338] sm:$0xff]
    %v185 = vld [vmem:[#allocation2 + $0x340] sm:$0xff]
    %v186 = vld [vmem:[#allocation2 + $0x348] sm:$0xff]
    %v187 = vld [vmem:[#allocation2 + $0x350] sm:$0xff]
    %v188 = vld [vmem:[#allocation2 + $0x358] sm:$0xff]
    %v189 = vld [vmem:[#allocation2 + $0x360] sm:$0xff]
    %v190 = vld [vmem:[#allocation2 + $0x368] sm:$0xff]
    %v191 = vld [vmem:[#allocation2 + $0x370] sm:$0xff]
    %v192 = vld [vmem:[#allocation2 + $0x378] sm:$0xff]
    %v193 = vld [vmem:[#allocation2 + $0x380] sm:$0xff]
    %v194 = vld [vmem:[#allocation2 + $0x388] sm:$0xff]
    %v195 = vld [vmem:[#allocation2 + $0x390] sm:$0xff]
    %v196 = vld [vmem:[#allocation2 + $0x398] sm:$0xff]
    %v197 = vld [vmem:[#allocation2 + $0x3a0] sm:$0xff]
    %v198 = vld [vmem:[#allocation2 + $0x3a8] sm:$0xff]
    %v199 = vld [vmem:[#allocation2 + $0x3b0] sm:$0xff]
    %v200 = vld [vmem:[#allocation2 + $0x3b8] sm:$0xff]
    %v201 = vld [vmem:[#allocation2 + $0x3c0] sm:$0xff]
    %v202 = vld [vmem:[#allocation2 + $0x3c8] sm:$0xff]
    %v203 = vld [vmem:[#allocation2 + $0x3d0] sm:$0xff]
    %v204 = vld [vmem:[#allocation2 + $0x3d8] sm:$0xff]
    %v205 = vld [vmem:[#allocation2 + $0x3e0] sm:$0xff]
    %v206 = vld [vmem:[#allocation2 + $0x3e8] sm:$0xff]
    %v207 = vld [vmem:[#allocation2 + $0x3f0] sm:$0xff]
    %v208 = vld [vmem:[#allocation2 + $0x3f8] sm:$0xff]
    %v209 = vld [vmem:[#allocation2 + $0x400] sm:$0xff]
    %v210 = vld [vmem:[#allocation2 + $0x408] sm:$0xff]
    %v211 = vld [vmem:[#allocation2 + $0x410] sm:$0xff]
    %v212 = vld [vmem:[#allocation2 + $0x418] sm:$0xff]
    %v213 = vld [vmem:[#allocation2 + $0x420] sm:$0xff]
    %v214 = vld [vmem:[#allocation2 + $0x428] sm:$0xff]
    %v215 = vld [vmem:[#allocation2 + $0x430] sm:$0xff]
    %v216 = vld [vmem:[#allocation2 + $0x438] sm:$0xff]
    %v217 = vld [vmem:[#allocation2 + $0x440] sm:$0xff]
    %v218 = vld [vmem:[#allocation2 + $0x448] sm:$0xff]
    %v219 = vld [vmem:[#allocation2 + $0x450] sm:$0xff]
    %v220 = vld [vmem:[#allocation2 + $0x458] sm:$0xff]
    %v221 = vld [vmem:[#allocation2 + $0x460] sm:$0xff]
    %v222 = vld [vmem:[#allocation2 + $0x468] sm:$0xff]
    %v223 = vld [vmem:[#allocation2 + $0x470] sm:$0xff]
    %v224 = vld [vmem:[#allocation2 + $0x478] sm:$0xff]
    %v225 = vld [vmem:[#allocation2 + $0x480] sm:$0xff]
    %v226 = vld [vmem:[#allocation2 + $0x488] sm:$0xff]
    %v227 = vld [vmem:[#allocation2 + $0x490] sm:$0xff]
    %v228 = vld [vmem:[#allocation2 + $0x498] sm:$0xff]
    %v229 = vld [vmem:[#allocation2 + $0x4a0] sm:$0xff]
    %v230 = vld [vmem:[#allocation2 + $0x4a8] sm:$0xff]
    %v231 = vld [vmem:[#allocation2 + $0x4b0] sm:$0xff]
    %v232 = vld [vmem:[#allocation2 + $0x4b8] sm:$0xff]
    %v233 = vld [vmem:[#allocation2 + $0x4c0] sm:$0xff]
    %v234 = vld [vmem:[#allocation2 + $0x4c8] sm:$0xff]
    %v235 = vld [vmem:[#allocation2 + $0x4d0] sm:$0xff]
    %v236 = vld [vmem:[#allocation2 + $0x4d8] sm:$0xff]
    %v237 = vld [vmem:[#allocation2 + $0x4e0] sm:$0xff]
    %v238 = vld [vmem:[#allocation2 + $0x4e8] sm:$0xff]
    %v239 = vld [vmem:[#allocation2 + $0x4f0] sm:$0xff]
    %v240 = vld [vmem:[#allocation2 + $0x4f8] sm:$0xff]
    %v241 = vld [vmem:[#allocation2 + $0x500] sm:$0xff]
    %v242 = vld [vmem:[#allocation2 + $0x508] sm:$0xff]
    %v243 = vld [vmem:[#allocation2 + $0x510] sm:$0xff]
    %v244 = vld [vmem:[#allocation2 + $0x518] sm:$0xff]
    %v245 = vld [vmem:[#allocation2 + $0x520] sm:$0xff]
    %v246 = vld [vmem:[#allocation2 + $0x528] sm:$0xff]
    %v247 = vld [vmem:[#allocation2 + $0x530] sm:$0xff]
    %v248 = vld [vmem:[#allocation2 + $0x538] sm:$0xff]
    %v249 = vld [vmem:[#allocation2 + $0x540] sm:$0xff]
    %v250 = vld [vmem:[#allocation2 + $0x548] sm:$0xff]
    %v251 = vld [vmem:[#allocation2 + $0x550] sm:$0xff]
    %v252 = vld [vmem:[#allocation2 + $0x558] sm:$0xff]
    %v253 = vld [vmem:[#allocation2 + $0x560] sm:$0xff]
    %v254 = vld [vmem:[#allocation2 + $0x568] sm:$0xff]
    %v255 = vld [vmem:[#allocation2 + $0x570] sm:$0xff]
    %v256 = vld [vmem:[#allocation2 + $0x578] sm:$0xff]
    %v257 = vld [vmem:[#allocation2 + $0x580] sm:$0xff]
    %v258 = vld [vmem:[#allocation2 + $0x588] sm:$0xff]
    %v259 = vld [vmem:[#allocation2 + $0x590] sm:$0xff]
    %v260 = vld [vmem:[#allocation2 + $0x598] sm:$0xff]
    %v261 = vld [vmem:[#allocation2 + $0x5a0] sm:$0xff]
    %v262 = vld [vmem:[#allocation2 + $0x5a8] sm:$0xff]
    %v263 = vld [vmem:[#allocation2 + $0x5b0] sm:$0xff]
    %v264 = vld [vmem:[#allocation2 + $0x5b8] sm:$0xff]
    %v265 = vld [vmem:[#allocation2 + $0x5c0] sm:$0xff]
    %v266 = vld [vmem:[#allocation2 + $0x5c8] sm:$0xff]
    %v267 = vld [vmem:[#allocation2 + $0x5d0] sm:$0xff]
    %v268 = vld [vmem:[#allocation2 + $0x5d8] sm:$0xff]
    %v269 = vld [vmem:[#allocation2 + $0x5e0] sm:$0xff]
    %v270 = vld [vmem:[#allocation2 + $0x5e8] sm:$0xff]
    %v271 = vld [vmem:[#allocation2 + $0x5f0] sm:$0xff]
    %v272 = vld [vmem:[#allocation2 + $0x5f8] sm:$0xff]
    %v273 = vld [vmem:[#allocation2 + $0x600] sm:$0xff]
    %v274 = vld [vmem:[#allocation2 + $0x608] sm:$0xff]
    %v275 = vld [vmem:[#allocation2 + $0x610] sm:$0xff]
    %v276 = vld [vmem:[#allocation2 + $0x618] sm:$0xff]
    %v277 = vld [vmem:[#allocation2 + $0x620] sm:$0xff]
    %v278 = vld [vmem:[#allocation2 + $0x628] sm:$0xff]
    %v279 = vld [vmem:[#allocation2 + $0x630] sm:$0xff]
    %v280 = vld [vmem:[#allocation2 + $0x638] sm:$0xff]
    %v281 = vld [vmem:[#allocation2 + $0x640] sm:$0xff]
    %v282 = vld [vmem:[#allocation2 + $0x648] sm:$0xff]
    %v283 = vld [vmem:[#allocation2 + $0x650] sm:$0xff]
    %v284 = vld [vmem:[#allocation2 + $0x658] sm:$0xff]
    %v285 = vld [vmem:[#allocation2 + $0x660] sm:$0xff]
    %v286 = vld [vmem:[#allocation2 + $0x668] sm:$0xff]
    %v287 = vld [vmem:[#allocation2 + $0x670] sm:$0xff]
    %v288 = vld [vmem:[#allocation2 + $0x678] sm:$0xff]
    %v289 = vld [vmem:[#allocation2 + $0x680] sm:$0xff]
    %v290 = vld [vmem:[#allocation2 + $0x688] sm:$0xff]
    %v291 = vld [vmem:[#allocation2 + $0x690] sm:$0xff]
    %v292 = vld [vmem:[#allocation2 + $0x698] sm:$0xff]
    %v293 = vld [vmem:[#allocation2 + $0x6a0] sm:$0xff]
    %v294 = vld [vmem:[#allocation2 + $0x6a8] sm:$0xff]
    %v295 = vld [vmem:[#allocation2 + $0x6b0] sm:$0xff]
    %v296 = vld [vmem:[#allocation2 + $0x6b8] sm:$0xff]
    %v297 = vld [vmem:[#allocation2 + $0x6c0] sm:$0xff]
    %v298 = vld [vmem:[#allocation2 + $0x6c8] sm:$0xff]
    %v299 = vld [vmem:[#allocation2 + $0x6d0] sm:$0xff]
    %v300 = vld [vmem:[#allocation2 + $0x6d8] sm:$0xff]
    %v301 = vld [vmem:[#allocation2 + $0x6e0] sm:$0xff]
    %v302 = vld [vmem:[#allocation2 + $0x6e8] sm:$0xff]
    %v303 = vld [vmem:[#allocation2 + $0x6f0] sm:$0xff]
    %v304 = vld [vmem:[#allocation2 + $0x6f8] sm:$0xff]
    %v305 = vld [vmem:[#allocation2 + $0x700] sm:$0xff]
    %v306 = vld [vmem:[#allocation2 + $0x708] sm:$0xff]
    %v307 = vld [vmem:[#allocation2 + $0x710] sm:$0xff]
    %v308 = vld [vmem:[#allocation2 + $0x718] sm:$0xff]
    %v309 = vld [vmem:[#allocation2 + $0x720] sm:$0xff]
    %v310 = vld [vmem:[#allocation2 + $0x728] sm:$0xff]
    %v311 = vld [vmem:[#allocation2 + $0x730] sm:$0xff]
    %v312 = vld [vmem:[#allocation2 + $0x738] sm:$0xff]
    %v313 = vld [vmem:[#allocation2 + $0x740] sm:$0xff]
    %v314 = vld [vmem:[#allocation2 + $0x748] sm:$0xff]
    %v315 = vld [vmem:[#allocation2 + $0x750] sm:$0xff]
    %v316 = vld [vmem:[#allocation2 + $0x758] sm:$0xff]
    %v317 = vld [vmem:[#allocation2 + $0x760] sm:$0xff]
    %v318 = vld [vmem:[#allocation2 + $0x768] sm:$0xff]
    %v319 = vld [vmem:[#allocation2 + $0x770] sm:$0xff]
    %v320 = vld [vmem:[#allocation2 + $0x778] sm:$0xff]
    %v321 = vld [vmem:[#allocation2 + $0x780] sm:$0xff]
    %v322 = vld [vmem:[#allocation2 + $0x788] sm:$0xff]
    %v323 = vld [vmem:[#allocation2 + $0x790] sm:$0xff]
    %v324 = vld [vmem:[#allocation2 + $0x798] sm:$0xff]
    %v325 = vld [vmem:[#allocation2 + $0x7a0] sm:$0xff]
    %v326 = vld [vmem:[#allocation2 + $0x7a8] sm:$0xff]
    %v327 = vld [vmem:[#allocation2 + $0x7b0] sm:$0xff]
    %v328 = vld [vmem:[#allocation2 + $0x7b8] sm:$0xff]
    %v329 = vld [vmem:[#allocation2 + $0x7c0] sm:$0xff]
    %v330 = vld [vmem:[#allocation2 + $0x7c8] sm:$0xff]
    %v331 = vld [vmem:[#allocation2 + $0x7d0] sm:$0xff]
    %v332 = vld [vmem:[#allocation2 + $0x7d8] sm:$0xff]
    %v333 = vld [vmem:[#allocation2 + $0x7e0] sm:$0xff]
    %v334 = vld [vmem:[#allocation2 + $0x7e8] sm:$0xff]
    %v335 = vld [vmem:[#allocation2 + $0x7f0] sm:$0xff]
    %v336 = vld [vmem:[#allocation2 + $0x7f8] sm:$0xff]
    %v337 = vld [vmem:[#allocation4] sm:$0xff]
    %v338 = vld [vmem:[#allocation4 + $0x8] sm:$0xff]
    %v339 = vld [vmem:[#allocation4 + $0x10] sm:$0xff]
    %v340 = vld [vmem:[#allocation4 + $0x18] sm:$0xff]
    %v341 = vld [vmem:[#allocation4 + $0x20] sm:$0xff]
    %v342 = vld [vmem:[#allocation4 + $0x28] sm:$0xff]
    %v343 = vld [vmem:[#allocation4 + $0x30] sm:$0xff]
    %v344 = vld [vmem:[#allocation4 + $0x38] sm:$0xff]
    %v345 = vld [vmem:[#allocation4 + $0x40] sm:$0xff]
    %v346 = vld [vmem:[#allocation4 + $0x48] sm:$0xff]
    %v347 = vld [vmem:[#allocation4 + $0x50] sm:$0xff]
    %v348 = vld [vmem:[#allocation4 + $0x58] sm:$0xff]
    %v349 = vld [vmem:[#allocation4 + $0x60] sm:$0xff]
    %v350 = vld [vmem:[#allocation4 + $0x68] sm:$0xff]
    %v351 = vld [vmem:[#allocation4 + $0x70] sm:$0xff]
    %v352 = vld [vmem:[#allocation4 + $0x78] sm:$0xff]
    %v353 = vld [vmem:[#allocation4 + $0x80] sm:$0xff]
    %v354 = vld [vmem:[#allocation4 + $0x88] sm:$0xff]
    %v355 = vld [vmem:[#allocation4 + $0x90] sm:$0xff]
    %v356 = vld [vmem:[#allocation4 + $0x98] sm:$0xff]
    %v357 = vld [vmem:[#allocation4 + $0xa0] sm:$0xff]
    %v358 = vld [vmem:[#allocation4 + $0xa8] sm:$0xff]
    %v359 = vld [vmem:[#allocation4 + $0xb0] sm:$0xff]
    %v360 = vld [vmem:[#allocation4 + $0xb8] sm:$0xff]
    %v361 = vld [vmem:[#allocation4 + $0xc0] sm:$0xff]
    %v362 = vld [vmem:[#allocation4 + $0xc8] sm:$0xff]
    %v363 = vld [vmem:[#allocation4 + $0xd0] sm:$0xff]
    %v364 = vld [vmem:[#allocation4 + $0xd8] sm:$0xff]
    %v365 = vld [vmem:[#allocation4 + $0xe0] sm:$0xff]
    %v366 = vld [vmem:[#allocation4 + $0xe8] sm:$0xff]
    %v367 = vld [vmem:[#allocation4 + $0xf0] sm:$0xff]
    %v368 = vld [vmem:[#allocation4 + $0xf8] sm:$0xff]
    %v369 = vld [vmem:[#allocation4 + $0x100] sm:$0xff]
    %v370 = vld [vmem:[#allocation4 + $0x108] sm:$0xff]
    %v371 = vld [vmem:[#allocation4 + $0x110] sm:$0xff]
    %v372 = vld [vmem:[#allocation4 + $0x118] sm:$0xff]
    %v373 = vld [vmem:[#allocation4 + $0x120] sm:$0xff]
    %v374 = vld [vmem:[#allocation4 + $0x128] sm:$0xff]
    %v375 = vld [vmem:[#allocation4 + $0x130] sm:$0xff]
    %v376 = vld [vmem:[#allocation4 + $0x138] sm:$0xff]
    %v377 = vld [vmem:[#allocation4 + $0x140] sm:$0xff]
    %v378 = vld [vmem:[#allocation4 + $0x148] sm:$0xff]
    %v379 = vld [vmem:[#allocation4 + $0x150] sm:$0xff]
    %v380 = vld [vmem:[#allocation4 + $0x158] sm:$0xff]
    %v381 = vld [vmem:[#allocation4 + $0x160] sm:$0xff]
    %v382 = vld [vmem:[#allocation4 + $0x168] sm:$0xff]
    %v383 = vld [vmem:[#allocation4 + $0x170] sm:$0xff]
    %v384 = vld [vmem:[#allocation4 + $0x178] sm:$0xff]
    %v385 = vld [vmem:[#allocation4 + $0x180] sm:$0xff]
    %v386 = vld [vmem:[#allocation4 + $0x188] sm:$0xff]
    %v387 = vld [vmem:[#allocation4 + $0x190] sm:$0xff]
    %v388 = vld [vmem:[#allocation4 + $0x198] sm:$0xff]
    %v389 = vld [vmem:[#allocation4 + $0x1a0] sm:$0xff]
    %v390 = vld [vmem:[#allocation4 + $0x1a8] sm:$0xff]
    %v391 = vld [vmem:[#allocation4 + $0x1b0] sm:$0xff]
    %v392 = vld [vmem:[#allocation4 + $0x1b8] sm:$0xff]
    %v393 = vld [vmem:[#allocation4 + $0x1c0] sm:$0xff]
    %v394 = vld [vmem:[#allocation4 + $0x1c8] sm:$0xff]
    %v395 = vld [vmem:[#allocation4 + $0x1d0] sm:$0xff]
    %v396 = vld [vmem:[#allocation4 + $0x1d8] sm:$0xff]
    %v397 = vld [vmem:[#allocation4 + $0x1e0] sm:$0xff]
    %v398 = vld [vmem:[#allocation4 + $0x1e8] sm:$0xff]
    %v399 = vld [vmem:[#allocation4 + $0x1f0] sm:$0xff]
    %v400 = vld [vmem:[#allocation4 + $0x1f8] sm:$0xff]
    %v401 = vld [vmem:[#allocation6] sm:$0xf]
    %v402 = vld [vmem:[#allocation6 + $0x4] sm:$0xf]
    %v403 = vld [vmem:[#allocation6 + $0x8] sm:$0xf]
    %v404 = vld [vmem:[#allocation6 + $0xc] sm:$0xf]
    %v405 = vld [vmem:[#allocation6 + $0x10] sm:$0xf]
    %v406 = vld [vmem:[#allocation6 + $0x14] sm:$0xf]
    %v407 = vld [vmem:[#allocation6 + $0x18] sm:$0xf]
    %v408 = vld [vmem:[#allocation6 + $0x1c] sm:$0xf]
    %v409 = vld [vmem:[#allocation6 + $0x20] sm:$0xf]
    %v410 = vld [vmem:[#allocation6 + $0x24] sm:$0xf]
    %v411 = vld [vmem:[#allocation6 + $0x28] sm:$0xf]
    %v412 = vld [vmem:[#allocation6 + $0x2c] sm:$0xf]
    %v413 = vld [vmem:[#allocation6 + $0x30] sm:$0xf]
    %v414 = vld [vmem:[#allocation6 + $0x34] sm:$0xf]
    %v415 = vld [vmem:[#allocation6 + $0x38] sm:$0xf]
    %v416 = vld [vmem:[#allocation6 + $0x3c] sm:$0xf]
    %v417 = vld [vmem:[#allocation6 + $0x40] sm:$0xf]
    %v418 = vld [vmem:[#allocation6 + $0x44] sm:$0xf]
    %v419 = vld [vmem:[#allocation6 + $0x48] sm:$0xf]
    %v420 = vld [vmem:[#allocation6 + $0x4c] sm:$0xf]
    %v421 = vld [vmem:[#allocation6 + $0x50] sm:$0xf]
    %v422 = vld [vmem:[#allocation6 + $0x54] sm:$0xf]
    %v423 = vld [vmem:[#allocation6 + $0x58] sm:$0xf]
    %v424 = vld [vmem:[#allocation6 + $0x5c] sm:$0xf]
    %v425 = vld [vmem:[#allocation6 + $0x60] sm:$0xf]
    %v426 = vld [vmem:[#allocation6 + $0x64] sm:$0xf]
    %v427 = vld [vmem:[#allocation6 + $0x68] sm:$0xf]
    %v428 = vld [vmem:[#allocation6 + $0x6c] sm:$0xf]
    %v429 = vld [vmem:[#allocation6 + $0x70] sm:$0xf]
    %v430 = vld [vmem:[#allocation6 + $0x74] sm:$0xf]
    %v431 = vld [vmem:[#allocation6 + $0x78] sm:$0xf]
    %v432 = vld [vmem:[#allocation6 + $0x7c] sm:$0xf]
    %v433 = vld [vmem:[%s2] sm:$0xf]
    %v435 = vlaneseq
    %v436 = vshrl.u32 %v435, 7
    %v437 = vsub.s32 0, %v436
    %v438 = vrot.slane %v433, %v437
    %v439 = vlaneseq
    %v440 = vshrl.u32 %v439, 7
    %v441 = vsub.s32 1, %v440
    %v442 = vrot.slane %v433, %v441
    %v443 = vlaneseq
    %v444 = vshrl.u32 %v443, 7
    %v445 = vsub.s32 2, %v444
    %v446 = vrot.slane %v433, %v445
    %v447 = vlaneseq
    %v448 = vshrl.u32 %v447, 7
    %v449 = vsub.s32 3, %v448
    %v450 = vrot.slane %v433, %v449
    %v455 = vld [vmem:[%s4] sm:$0x3]
    %v457 = vlaneseq
    %v458 = vshrl.u32 %v457, 7
    %v459 = vsub.s32 0, %v458
    %v460 = vrot.slane %v455, %v459
    %v461 = vlaneseq
    %v462 = vshrl.u32 %v461, 7
    %v463 = vsub.s32 1, %v462
    %v464 = vrot.slane %v455, %v463
    %v723 = vunpack.c.l.b16 %v81
    %v724 = vunpack.c.h.b16 %v81
    %v725 = vunpack.c.l.b16 %v82
    %v726 = vunpack.c.h.b16 %v82
    %v727 = vunpack.c.l.b16 %v83
    %v728 = vunpack.c.h.b16 %v83
    %v729 = vunpack.c.l.b16 %v84
    %v730 = vunpack.c.h.b16 %v84
    %v731 = vunpack.c.l.b16 %v85
    %v732 = vunpack.c.h.b16 %v85
    %v733 = vunpack.c.l.b16 %v86
    %v734 = vunpack.c.h.b16 %v86
    %v735 = vunpack.c.l.b16 %v87
    %v736 = vunpack.c.h.b16 %v87
    %v737 = vunpack.c.l.b16 %v88
    %v738 = vunpack.c.h.b16 %v88
    %v739 = vunpack.c.l.b16 %v89
    %v740 = vunpack.c.h.b16 %v89
    %v741 = vunpack.c.l.b16 %v90
    %v742 = vunpack.c.h.b16 %v90
    %v743 = vunpack.c.l.b16 %v91
    %v744 = vunpack.c.h.b16 %v91
    %v745 = vunpack.c.l.b16 %v92
    %v746 = vunpack.c.h.b16 %v92
    %v747 = vunpack.c.l.b16 %v93
    %v748 = vunpack.c.h.b16 %v93
    %v749 = vunpack.c.l.b16 %v94
    %v750 = vunpack.c.h.b16 %v94
    %v751 = vunpack.c.l.b16 %v95
    %v752 = vunpack.c.h.b16 %v95
    %v753 = vunpack.c.l.b16 %v96
    %v754 = vunpack.c.h.b16 %v96
    %v755 = vunpack.c.l.b16 %v97
    %v756 = vunpack.c.h.b16 %v97
    %v757 = vunpack.c.l.b16 %v98
    %v758 = vunpack.c.h.b16 %v98
    %v759 = vunpack.c.l.b16 %v99
    %v760 = vunpack.c.h.b16 %v99
    %v761 = vunpack.c.l.b16 %v100
    %v762 = vunpack.c.h.b16 %v100
    %v763 = vunpack.c.l.b16 %v101
    %v764 = vunpack.c.h.b16 %v101
    %v765 = vunpack.c.l.b16 %v102
    %v766 = vunpack.c.h.b16 %v102
    %v767 = vunpack.c.l.b16 %v103
    %v768 = vunpack.c.h.b16 %v103
    %v769 = vunpack.c.l.b16 %v104
    %v770 = vunpack.c.h.b16 %v104
    %v771 = vunpack.c.l.b16 %v105
    %v772 = vunpack.c.h.b16 %v105
    %v773 = vunpack.c.l.b16 %v106
    %v774 = vunpack.c.h.b16 %v106
    %v775 = vunpack.c.l.b16 %v107
    %v776 = vunpack.c.h.b16 %v107
    %v777 = vunpack.c.l.b16 %v108
    %v778 = vunpack.c.h.b16 %v108
    %v779 = vunpack.c.l.b16 %v109
    %v780 = vunpack.c.h.b16 %v109
    %v781 = vunpack.c.l.b16 %v110
    %v782 = vunpack.c.h.b16 %v110
    %v783 = vunpack.c.l.b16 %v111
    %v784 = vunpack.c.h.b16 %v111
    %v785 = vunpack.c.l.b16 %v112
    %v786 = vunpack.c.h.b16 %v112
    %v787 = vunpack.c.l.b16 %v113
    %v788 = vunpack.c.h.b16 %v113
    %v789 = vunpack.c.l.b16 %v114
    %v790 = vunpack.c.h.b16 %v114
    %v791 = vunpack.c.l.b16 %v115
    %v792 = vunpack.c.h.b16 %v115
    %v793 = vunpack.c.l.b16 %v116
    %v794 = vunpack.c.h.b16 %v116
    %v795 = vunpack.c.l.b16 %v117
    %v796 = vunpack.c.h.b16 %v117
    %v797 = vunpack.c.l.b16 %v118
    %v798 = vunpack.c.h.b16 %v118
    %v799 = vunpack.c.l.b16 %v119
    %v800 = vunpack.c.h.b16 %v119
    %v801 = vunpack.c.l.b16 %v120
    %v802 = vunpack.c.h.b16 %v120
    %v803 = vunpack.c.l.b16 %v121
    %v804 = vunpack.c.h.b16 %v121
    %v805 = vunpack.c.l.b16 %v122
    %v806 = vunpack.c.h.b16 %v122
    %v807 = vunpack.c.l.b16 %v123
    %v808 = vunpack.c.h.b16 %v123
    %v809 = vunpack.c.l.b16 %v124
    %v810 = vunpack.c.h.b16 %v124
    %v811 = vunpack.c.l.b16 %v125
    %v812 = vunpack.c.h.b16 %v125
    %v813 = vunpack.c.l.b16 %v126
    %v814 = vunpack.c.h.b16 %v126
    %v815 = vunpack.c.l.b16 %v127
    %v816 = vunpack.c.h.b16 %v127
    %v817 = vunpack.c.l.b16 %v128
    %v818 = vunpack.c.h.b16 %v128
    %v819 = vunpack.c.l.b16 %v129
    %v820 = vunpack.c.h.b16 %v129
    %v821 = vunpack.c.l.b16 %v130
    %v822 = vunpack.c.h.b16 %v130
    %v823 = vunpack.c.l.b16 %v131
    %v824 = vunpack.c.h.b16 %v131
    %v825 = vunpack.c.l.b16 %v132
    %v826 = vunpack.c.h.b16 %v132
    %v827 = vunpack.c.l.b16 %v133
    %v828 = vunpack.c.h.b16 %v133
    %v829 = vunpack.c.l.b16 %v134
    %v830 = vunpack.c.h.b16 %v134
    %v831 = vunpack.c.l.b16 %v135
    %v832 = vunpack.c.h.b16 %v135
    %v833 = vunpack.c.l.b16 %v136
    %v834 = vunpack.c.h.b16 %v136
    %v835 = vunpack.c.l.b16 %v137
    %v836 = vunpack.c.h.b16 %v137
    %v837 = vunpack.c.l.b16 %v138
    %v838 = vunpack.c.h.b16 %v138
    %v839 = vunpack.c.l.b16 %v139
    %v840 = vunpack.c.h.b16 %v139
    %v841 = vunpack.c.l.b16 %v140
    %v842 = vunpack.c.h.b16 %v140
    %v843 = vunpack.c.l.b16 %v141
    %v844 = vunpack.c.h.b16 %v141
    %v845 = vunpack.c.l.b16 %v142
    %v846 = vunpack.c.h.b16 %v142
    %v847 = vunpack.c.l.b16 %v143
    %v848 = vunpack.c.h.b16 %v143
    %v849 = vunpack.c.l.b16 %v144
    %v850 = vunpack.c.h.b16 %v144
    %v851 = vunpack.c.l.b16 %v145
    %v852 = vunpack.c.h.b16 %v145
    %v853 = vunpack.c.l.b16 %v146
    %v854 = vunpack.c.h.b16 %v146
    %v855 = vunpack.c.l.b16 %v147
    %v856 = vunpack.c.h.b16 %v147
    %v857 = vunpack.c.l.b16 %v148
    %v858 = vunpack.c.h.b16 %v148
    %v859 = vunpack.c.l.b16 %v149
    %v860 = vunpack.c.h.b16 %v149
    %v861 = vunpack.c.l.b16 %v150
    %v862 = vunpack.c.h.b16 %v150
    %v863 = vunpack.c.l.b16 %v151
    %v864 = vunpack.c.h.b16 %v151
    %v865 = vunpack.c.l.b16 %v152
    %v866 = vunpack.c.h.b16 %v152
    %v867 = vunpack.c.l.b16 %v153
    %v868 = vunpack.c.h.b16 %v153
    %v869 = vunpack.c.l.b16 %v154
    %v870 = vunpack.c.h.b16 %v154
    %v871 = vunpack.c.l.b16 %v155
    %v872 = vunpack.c.h.b16 %v155
    %v873 = vunpack.c.l.b16 %v156
    %v874 = vunpack.c.h.b16 %v156
    %v875 = vunpack.c.l.b16 %v157
    %v876 = vunpack.c.h.b16 %v157
    %v877 = vunpack.c.l.b16 %v158
    %v878 = vunpack.c.h.b16 %v158
    %v879 = vunpack.c.l.b16 %v159
    %v880 = vunpack.c.h.b16 %v159
    %v881 = vunpack.c.l.b16 %v160
    %v882 = vunpack.c.h.b16 %v160
    %v883 = vunpack.c.l.b16 %v161
    %v884 = vunpack.c.h.b16 %v161
    %v885 = vunpack.c.l.b16 %v162
    %v886 = vunpack.c.h.b16 %v162
    %v887 = vunpack.c.l.b16 %v163
    %v888 = vunpack.c.h.b16 %v163
    %v889 = vunpack.c.l.b16 %v164
    %v890 = vunpack.c.h.b16 %v164
    %v891 = vunpack.c.l.b16 %v165
    %v892 = vunpack.c.h.b16 %v165
    %v893 = vunpack.c.l.b16 %v166
    %v894 = vunpack.c.h.b16 %v166
    %v895 = vunpack.c.l.b16 %v167
    %v896 = vunpack.c.h.b16 %v167
    %v897 = vunpack.c.l.b16 %v168
    %v898 = vunpack.c.h.b16 %v168
    %v899 = vunpack.c.l.b16 %v169
    %v900 = vunpack.c.h.b16 %v169
    %v901 = vunpack.c.l.b16 %v170
    %v902 = vunpack.c.h.b16 %v170
    %v903 = vunpack.c.l.b16 %v171
    %v904 = vunpack.c.h.b16 %v171
    %v905 = vunpack.c.l.b16 %v172
    %v906 = vunpack.c.h.b16 %v172
    %v907 = vunpack.c.l.b16 %v173
    %v908 = vunpack.c.h.b16 %v173
    %v909 = vunpack.c.l.b16 %v174
    %v910 = vunpack.c.h.b16 %v174
    %v911 = vunpack.c.l.b16 %v175
    %v912 = vunpack.c.h.b16 %v175
    %v913 = vunpack.c.l.b16 %v176
    %v914 = vunpack.c.h.b16 %v176
    %v915 = vunpack.c.l.b16 %v177
    %v916 = vunpack.c.h.b16 %v177
    %v917 = vunpack.c.l.b16 %v178
    %v918 = vunpack.c.h.b16 %v178
    %v919 = vunpack.c.l.b16 %v179
    %v920 = vunpack.c.h.b16 %v179
    %v921 = vunpack.c.l.b16 %v180
    %v922 = vunpack.c.h.b16 %v180
    %v923 = vunpack.c.l.b16 %v181
    %v924 = vunpack.c.h.b16 %v181
    %v925 = vunpack.c.l.b16 %v182
    %v926 = vunpack.c.h.b16 %v182
    %v927 = vunpack.c.l.b16 %v183
    %v928 = vunpack.c.h.b16 %v183
    %v929 = vunpack.c.l.b16 %v184
    %v930 = vunpack.c.h.b16 %v184
    %v931 = vunpack.c.l.b16 %v185
    %v932 = vunpack.c.h.b16 %v185
    %v933 = vunpack.c.l.b16 %v186
    %v934 = vunpack.c.h.b16 %v186
    %v935 = vunpack.c.l.b16 %v187
    %v936 = vunpack.c.h.b16 %v187
    %v937 = vunpack.c.l.b16 %v188
    %v938 = vunpack.c.h.b16 %v188
    %v939 = vunpack.c.l.b16 %v189
    %v940 = vunpack.c.h.b16 %v189
    %v941 = vunpack.c.l.b16 %v190
    %v942 = vunpack.c.h.b16 %v190
    %v943 = vunpack.c.l.b16 %v191
    %v944 = vunpack.c.h.b16 %v191
    %v945 = vunpack.c.l.b16 %v192
    %v946 = vunpack.c.h.b16 %v192
    %v947 = vunpack.c.l.b16 %v193
    %v948 = vunpack.c.h.b16 %v193
    %v949 = vunpack.c.l.b16 %v194
    %v950 = vunpack.c.h.b16 %v194
    %v951 = vunpack.c.l.b16 %v195
    %v952 = vunpack.c.h.b16 %v195
    %v953 = vunpack.c.l.b16 %v196
    %v954 = vunpack.c.h.b16 %v196
    %v955 = vunpack.c.l.b16 %v197
    %v956 = vunpack.c.h.b16 %v197
    %v957 = vunpack.c.l.b16 %v198
    %v958 = vunpack.c.h.b16 %v198
    %v959 = vunpack.c.l.b16 %v199
    %v960 = vunpack.c.h.b16 %v199
    %v961 = vunpack.c.l.b16 %v200
    %v962 = vunpack.c.h.b16 %v200
    %v963 = vunpack.c.l.b16 %v201
    %v964 = vunpack.c.h.b16 %v201
    %v965 = vunpack.c.l.b16 %v202
    %v966 = vunpack.c.h.b16 %v202
    %v967 = vunpack.c.l.b16 %v203
    %v968 = vunpack.c.h.b16 %v203
    %v969 = vunpack.c.l.b16 %v204
    %v970 = vunpack.c.h.b16 %v204
    %v971 = vunpack.c.l.b16 %v205
    %v972 = vunpack.c.h.b16 %v205
    %v973 = vunpack.c.l.b16 %v206
    %v974 = vunpack.c.h.b16 %v206
    %v975 = vunpack.c.l.b16 %v207
    %v976 = vunpack.c.h.b16 %v207
    %v977 = vunpack.c.l.b16 %v208
    %v978 = vunpack.c.h.b16 %v208
    %v979 = vunpack.c.l.b16 %v209
    %v980 = vunpack.c.h.b16 %v209
    %v981 = vunpack.c.l.b16 %v210
    %v982 = vunpack.c.h.b16 %v210
    %v983 = vunpack.c.l.b16 %v211
    %v984 = vunpack.c.h.b16 %v211
    %v985 = vunpack.c.l.b16 %v212
    %v986 = vunpack.c.h.b16 %v212
    %v987 = vunpack.c.l.b16 %v213
    %v988 = vunpack.c.h.b16 %v213
    %v989 = vunpack.c.l.b16 %v214
    %v990 = vunpack.c.h.b16 %v214
    %v991 = vunpack.c.l.b16 %v215
    %v992 = vunpack.c.h.b16 %v215
    %v993 = vunpack.c.l.b16 %v216
    %v994 = vunpack.c.h.b16 %v216
    %v995 = vunpack.c.l.b16 %v217
    %v996 = vunpack.c.h.b16 %v217
    %v997 = vunpack.c.l.b16 %v218
    %v998 = vunpack.c.h.b16 %v218
    %v999 = vunpack.c.l.b16 %v219
    %v1000 = vunpack.c.h.b16 %v219
    %v1001 = vunpack.c.l.b16 %v220
    %v1002 = vunpack.c.h.b16 %v220
    %v1003 = vunpack.c.l.b16 %v221
    %v1004 = vunpack.c.h.b16 %v221
    %v1005 = vunpack.c.l.b16 %v222
    %v1006 = vunpack.c.h.b16 %v222
    %v1007 = vunpack.c.l.b16 %v223
    %v1008 = vunpack.c.h.b16 %v223
    %v1009 = vunpack.c.l.b16 %v224
    %v1010 = vunpack.c.h.b16 %v224
    %v1011 = vunpack.c.l.b16 %v225
    %v1012 = vunpack.c.h.b16 %v225
    %v1013 = vunpack.c.l.b16 %v226
    %v1014 = vunpack.c.h.b16 %v226
    %v1015 = vunpack.c.l.b16 %v227
    %v1016 = vunpack.c.h.b16 %v227
    %v1017 = vunpack.c.l.b16 %v228
    %v1018 = vunpack.c.h.b16 %v228
    %v1019 = vunpack.c.l.b16 %v229
    %v1020 = vunpack.c.h.b16 %v229
    %v1021 = vunpack.c.l.b16 %v230
    %v1022 = vunpack.c.h.b16 %v230
    %v1023 = vunpack.c.l.b16 %v231
    %v1024 = vunpack.c.h.b16 %v231
    %v1025 = vunpack.c.l.b16 %v232
    %v1026 = vunpack.c.h.b16 %v232
    %v1027 = vunpack.c.l.b16 %v233
    %v1028 = vunpack.c.h.b16 %v233
    %v1029 = vunpack.c.l.b16 %v234
    %v1030 = vunpack.c.h.b16 %v234
    %v1031 = vunpack.c.l.b16 %v235
    %v1032 = vunpack.c.h.b16 %v235
    %v1033 = vunpack.c.l.b16 %v236
    %v1034 = vunpack.c.h.b16 %v236
    %v1035 = vunpack.c.l.b16 %v237
    %v1036 = vunpack.c.h.b16 %v237
    %v1037 = vunpack.c.l.b16 %v238
    %v1038 = vunpack.c.h.b16 %v238
    %v1039 = vunpack.c.l.b16 %v239
    %v1040 = vunpack.c.h.b16 %v239
    %v1041 = vunpack.c.l.b16 %v240
    %v1042 = vunpack.c.h.b16 %v240
    %v1043 = vunpack.c.l.b16 %v241
    %v1044 = vunpack.c.h.b16 %v241
    %v1045 = vunpack.c.l.b16 %v242
    %v1046 = vunpack.c.h.b16 %v242
    %v1047 = vunpack.c.l.b16 %v243
    %v1048 = vunpack.c.h.b16 %v243
    %v1049 = vunpack.c.l.b16 %v244
    %v1050 = vunpack.c.h.b16 %v244
    %v1051 = vunpack.c.l.b16 %v245
    %v1052 = vunpack.c.h.b16 %v245
    %v1053 = vunpack.c.l.b16 %v246
    %v1054 = vunpack.c.h.b16 %v246
    %v1055 = vunpack.c.l.b16 %v247
    %v1056 = vunpack.c.h.b16 %v247
    %v1057 = vunpack.c.l.b16 %v248
    %v1058 = vunpack.c.h.b16 %v248
    %v1059 = vunpack.c.l.b16 %v249
    %v1060 = vunpack.c.h.b16 %v249
    %v1061 = vunpack.c.l.b16 %v250
    %v1062 = vunpack.c.h.b16 %v250
    %v1063 = vunpack.c.l.b16 %v251
    %v1064 = vunpack.c.h.b16 %v251
    %v1065 = vunpack.c.l.b16 %v252
    %v1066 = vunpack.c.h.b16 %v252
    %v1067 = vunpack.c.l.b16 %v253
    %v1068 = vunpack.c.h.b16 %v253
    %v1069 = vunpack.c.l.b16 %v254
    %v1070 = vunpack.c.h.b16 %v254
    %v1071 = vunpack.c.l.b16 %v255
    %v1072 = vunpack.c.h.b16 %v255
    %v1073 = vunpack.c.l.b16 %v256
    %v1074 = vunpack.c.h.b16 %v256
    %v1075 = vunpack.c.l.b16 %v257
    %v1076 = vunpack.c.h.b16 %v257
    %v1077 = vunpack.c.l.b16 %v258
    %v1078 = vunpack.c.h.b16 %v258
    %v1079 = vunpack.c.l.b16 %v259
    %v1080 = vunpack.c.h.b16 %v259
    %v1081 = vunpack.c.l.b16 %v260
    %v1082 = vunpack.c.h.b16 %v260
    %v1083 = vunpack.c.l.b16 %v261
    %v1084 = vunpack.c.h.b16 %v261
    %v1085 = vunpack.c.l.b16 %v262
    %v1086 = vunpack.c.h.b16 %v262
    %v1087 = vunpack.c.l.b16 %v263
    %v1088 = vunpack.c.h.b16 %v263
    %v1089 = vunpack.c.l.b16 %v264
    %v1090 = vunpack.c.h.b16 %v264
    %v1091 = vunpack.c.l.b16 %v265
    %v1092 = vunpack.c.h.b16 %v265
    %v1093 = vunpack.c.l.b16 %v266
    %v1094 = vunpack.c.h.b16 %v266
    %v1095 = vunpack.c.l.b16 %v267
    %v1096 = vunpack.c.h.b16 %v267
    %v1097 = vunpack.c.l.b16 %v268
    %v1098 = vunpack.c.h.b16 %v268
    %v1099 = vunpack.c.l.b16 %v269
    %v1100 = vunpack.c.h.b16 %v269
    %v1101 = vunpack.c.l.b16 %v270
    %v1102 = vunpack.c.h.b16 %v270
    %v1103 = vunpack.c.l.b16 %v271
    %v1104 = vunpack.c.h.b16 %v271
    %v1105 = vunpack.c.l.b16 %v272
    %v1106 = vunpack.c.h.b16 %v272
    %v1107 = vunpack.c.l.b16 %v273
    %v1108 = vunpack.c.h.b16 %v273
    %v1109 = vunpack.c.l.b16 %v274
    %v1110 = vunpack.c.h.b16 %v274
    %v1111 = vunpack.c.l.b16 %v275
    %v1112 = vunpack.c.h.b16 %v275
    %v1113 = vunpack.c.l.b16 %v276
    %v1114 = vunpack.c.h.b16 %v276
    %v1115 = vunpack.c.l.b16 %v277
    %v1116 = vunpack.c.h.b16 %v277
    %v1117 = vunpack.c.l.b16 %v278
    %v1118 = vunpack.c.h.b16 %v278
    %v1119 = vunpack.c.l.b16 %v279
    %v1120 = vunpack.c.h.b16 %v279
    %v1121 = vunpack.c.l.b16 %v280
    %v1122 = vunpack.c.h.b16 %v280
    %v1123 = vunpack.c.l.b16 %v281
    %v1124 = vunpack.c.h.b16 %v281
    %v1125 = vunpack.c.l.b16 %v282
    %v1126 = vunpack.c.h.b16 %v282
    %v1127 = vunpack.c.l.b16 %v283
    %v1128 = vunpack.c.h.b16 %v283
    %v1129 = vunpack.c.l.b16 %v284
    %v1130 = vunpack.c.h.b16 %v284
    %v1131 = vunpack.c.l.b16 %v285
    %v1132 = vunpack.c.h.b16 %v285
    %v1133 = vunpack.c.l.b16 %v286
    %v1134 = vunpack.c.h.b16 %v286
    %v1135 = vunpack.c.l.b16 %v287
    %v1136 = vunpack.c.h.b16 %v287
    %v1137 = vunpack.c.l.b16 %v288
    %v1138 = vunpack.c.h.b16 %v288
    %v1139 = vunpack.c.l.b16 %v289
    %v1140 = vunpack.c.h.b16 %v289
    %v1141 = vunpack.c.l.b16 %v290
    %v1142 = vunpack.c.h.b16 %v290
    %v1143 = vunpack.c.l.b16 %v291
    %v1144 = vunpack.c.h.b16 %v291
    %v1145 = vunpack.c.l.b16 %v292
    %v1146 = vunpack.c.h.b16 %v292
    %v1147 = vunpack.c.l.b16 %v293
    %v1148 = vunpack.c.h.b16 %v293
    %v1149 = vunpack.c.l.b16 %v294
    %v1150 = vunpack.c.h.b16 %v294
    %v1151 = vunpack.c.l.b16 %v295
    %v1152 = vunpack.c.h.b16 %v295
    %v1153 = vunpack.c.l.b16 %v296
    %v1154 = vunpack.c.h.b16 %v296
    %v1155 = vunpack.c.l.b16 %v297
    %v1156 = vunpack.c.h.b16 %v297
    %v1157 = vunpack.c.l.b16 %v298
    %v1158 = vunpack.c.h.b16 %v298
    %v1159 = vunpack.c.l.b16 %v299
    %v1160 = vunpack.c.h.b16 %v299
    %v1161 = vunpack.c.l.b16 %v300
    %v1162 = vunpack.c.h.b16 %v300
    %v1163 = vunpack.c.l.b16 %v301
    %v1164 = vunpack.c.h.b16 %v301
    %v1165 = vunpack.c.l.b16 %v302
    %v1166 = vunpack.c.h.b16 %v302
    %v1167 = vunpack.c.l.b16 %v303
    %v1168 = vunpack.c.h.b16 %v303
    %v1169 = vunpack.c.l.b16 %v304
    %v1170 = vunpack.c.h.b16 %v304
    %v1171 = vunpack.c.l.b16 %v305
    %v1172 = vunpack.c.h.b16 %v305
    %v1173 = vunpack.c.l.b16 %v306
    %v1174 = vunpack.c.h.b16 %v306
    %v1175 = vunpack.c.l.b16 %v307
    %v1176 = vunpack.c.h.b16 %v307
    %v1177 = vunpack.c.l.b16 %v308
    %v1178 = vunpack.c.h.b16 %v308
    %v1179 = vunpack.c.l.b16 %v309
    %v1180 = vunpack.c.h.b16 %v309
    %v1181 = vunpack.c.l.b16 %v310
    %v1182 = vunpack.c.h.b16 %v310
    %v1183 = vunpack.c.l.b16 %v311
    %v1184 = vunpack.c.h.b16 %v311
    %v1185 = vunpack.c.l.b16 %v312
    %v1186 = vunpack.c.h.b16 %v312
    %v1187 = vunpack.c.l.b16 %v313
    %v1188 = vunpack.c.h.b16 %v313
    %v1189 = vunpack.c.l.b16 %v314
    %v1190 = vunpack.c.h.b16 %v314
    %v1191 = vunpack.c.l.b16 %v315
    %v1192 = vunpack.c.h.b16 %v315
    %v1193 = vunpack.c.l.b16 %v316
    %v1194 = vunpack.c.h.b16 %v316
    %v1195 = vunpack.c.l.b16 %v317
    %v1196 = vunpack.c.h.b16 %v317
    %v1197 = vunpack.c.l.b16 %v318
    %v1198 = vunpack.c.h.b16 %v318
    %v1199 = vunpack.c.l.b16 %v319
    %v1200 = vunpack.c.h.b16 %v319
    %v1201 = vunpack.c.l.b16 %v320
    %v1202 = vunpack.c.h.b16 %v320
    %v1203 = vunpack.c.l.b16 %v321
    %v1204 = vunpack.c.h.b16 %v321
    %v1205 = vunpack.c.l.b16 %v322
    %v1206 = vunpack.c.h.b16 %v322
    %v1207 = vunpack.c.l.b16 %v323
    %v1208 = vunpack.c.h.b16 %v323
    %v1209 = vunpack.c.l.b16 %v324
    %v1210 = vunpack.c.h.b16 %v324
    %v1211 = vunpack.c.l.b16 %v325
    %v1212 = vunpack.c.h.b16 %v325
    %v1213 = vunpack.c.l.b16 %v326
    %v1214 = vunpack.c.h.b16 %v326
    %v1215 = vunpack.c.l.b16 %v327
    %v1216 = vunpack.c.h.b16 %v327
    %v1217 = vunpack.c.l.b16 %v328
    %v1218 = vunpack.c.h.b16 %v328
    %v1219 = vunpack.c.l.b16 %v329
    %v1220 = vunpack.c.h.b16 %v329
    %v1221 = vunpack.c.l.b16 %v330
    %v1222 = vunpack.c.h.b16 %v330
    %v1223 = vunpack.c.l.b16 %v331
    %v1224 = vunpack.c.h.b16 %v331
    %v1225 = vunpack.c.l.b16 %v332
    %v1226 = vunpack.c.h.b16 %v332
    %v1227 = vunpack.c.l.b16 %v333
    %v1228 = vunpack.c.h.b16 %v333
    %v1229 = vunpack.c.l.b16 %v334
    %v1230 = vunpack.c.h.b16 %v334
    %v1231 = vunpack.c.l.b16 %v335
    %v1232 = vunpack.c.h.b16 %v335
    %v1233 = vunpack.c.l.b16 %v336
    %v1234 = vunpack.c.h.b16 %v336
    %v1235 = vpack.c.b16 %v727, %v723
    %v1236 = vpack.c.b16 %v728, %v724
    %v1237 = vpack.c.b16 %v729, %v725
    %v1238 = vpack.c.b16 %v730, %v726
    %v1239 = vpack.c.b16 %v735, %v731
    %v1240 = vpack.c.b16 %v736, %v732
    %v1241 = vpack.c.b16 %v737, %v733
    %v1242 = vpack.c.b16 %v738, %v734
    %v1243 = vpack.c.b16 %v743, %v739
    %v1244 = vpack.c.b16 %v744, %v740
    %v1245 = vpack.c.b16 %v745, %v741
    %v1246 = vpack.c.b16 %v746, %v742
    %v1247 = vpack.c.b16 %v751, %v747
    %v1248 = vpack.c.b16 %v752, %v748
    %v1249 = vpack.c.b16 %v753, %v749
    %v1250 = vpack.c.b16 %v754, %v750
    %v1251 = vpack.c.b16 %v759, %v755
    %v1252 = vpack.c.b16 %v760, %v756
    %v1253 = vpack.c.b16 %v761, %v757
    %v1254 = vpack.c.b16 %v762, %v758
    %v1255 = vpack.c.b16 %v767, %v763
    %v1256 = vpack.c.b16 %v768, %v764
    %v1257 = vpack.c.b16 %v769, %v765
    %v1258 = vpack.c.b16 %v770, %v766
    %v1259 = vpack.c.b16 %v775, %v771
    %v1260 = vpack.c.b16 %v776, %v772
    %v1261 = vpack.c.b16 %v777, %v773
    %v1262 = vpack.c.b16 %v778, %v774
    %v1263 = vpack.c.b16 %v783, %v779
    %v1264 = vpack.c.b16 %v784, %v780
    %v1265 = vpack.c.b16 %v785, %v781
    %v1266 = vpack.c.b16 %v786, %v782
    %v1267 = vpack.c.b16 %v791, %v787
    %v1268 = vpack.c.b16 %v792, %v788
    %v1269 = vpack.c.b16 %v793, %v789
    %v1270 = vpack.c.b16 %v794, %v790
    %v1271 = vpack.c.b16 %v799, %v795
    %v1272 = vpack.c.b16 %v800, %v796
    %v1273 = vpack.c.b16 %v801, %v797
    %v1274 = vpack.c.b16 %v802, %v798
    %v1275 = vpack.c.b16 %v807, %v803
    %v1276 = vpack.c.b16 %v808, %v804
    %v1277 = vpack.c.b16 %v809, %v805
    %v1278 = vpack.c.b16 %v810, %v806
    %v1279 = vpack.c.b16 %v815, %v811
    %v1280 = vpack.c.b16 %v816, %v812
    %v1281 = vpack.c.b16 %v817, %v813
    %v1282 = vpack.c.b16 %v818, %v814
    %v1283 = vpack.c.b16 %v823, %v819
    %v1284 = vpack.c.b16 %v824, %v820
    %v1285 = vpack.c.b16 %v825, %v821
    %v1286 = vpack.c.b16 %v826, %v822
    %v1287 = vpack.c.b16 %v831, %v827
    %v1288 = vpack.c.b16 %v832, %v828
    %v1289 = vpack.c.b16 %v833, %v829
    %v1290 = vpack.c.b16 %v834, %v830
    %v1291 = vpack.c.b16 %v839, %v835
    %v1292 = vpack.c.b16 %v840, %v836
    %v1293 = vpack.c.b16 %v841, %v837
    %v1294 = vpack.c.b16 %v842, %v838
    %v1295 = vpack.c.b16 %v847, %v843
    %v1296 = vpack.c.b16 %v848, %v844
    %v1297 = vpack.c.b16 %v849, %v845
    %v1298 = vpack.c.b16 %v850, %v846
    %v1299 = vpack.c.b16 %v855, %v851
    %v1300 = vpack.c.b16 %v856, %v852
    %v1301 = vpack.c.b16 %v857, %v853
    %v1302 = vpack.c.b16 %v858, %v854
    %v1303 = vpack.c.b16 %v863, %v859
    %v1304 = vpack.c.b16 %v864, %v860
    %v1305 = vpack.c.b16 %v865, %v861
    %v1306 = vpack.c.b16 %v866, %v862
    %v1307 = vpack.c.b16 %v871, %v867
    %v1308 = vpack.c.b16 %v872, %v868
    %v1309 = vpack.c.b16 %v873, %v869
    %v1310 = vpack.c.b16 %v874, %v870
    %v1311 = vpack.c.b16 %v879, %v875
    %v1312 = vpack.c.b16 %v880, %v876
    %v1313 = vpack.c.b16 %v881, %v877
    %v1314 = vpack.c.b16 %v882, %v878
    %v1315 = vpack.c.b16 %v887, %v883
    %v1316 = vpack.c.b16 %v888, %v884
    %v1317 = vpack.c.b16 %v889, %v885
    %v1318 = vpack.c.b16 %v890, %v886
    %v1319 = vpack.c.b16 %v895, %v891
    %v1320 = vpack.c.b16 %v896, %v892
    %v1321 = vpack.c.b16 %v897, %v893
    %v1322 = vpack.c.b16 %v898, %v894
    %v1323 = vpack.c.b16 %v903, %v899
    %v1324 = vpack.c.b16 %v904, %v900
    %v1325 = vpack.c.b16 %v905, %v901
    %v1326 = vpack.c.b16 %v906, %v902
    %v1327 = vpack.c.b16 %v911, %v907
    %v1328 = vpack.c.b16 %v912, %v908
    %v1329 = vpack.c.b16 %v913, %v909
    %v1330 = vpack.c.b16 %v914, %v910
    %v1331 = vpack.c.b16 %v919, %v915
    %v1332 = vpack.c.b16 %v920, %v916
    %v1333 = vpack.c.b16 %v921, %v917
    %v1334 = vpack.c.b16 %v922, %v918
    %v1335 = vpack.c.b16 %v927, %v923
    %v1336 = vpack.c.b16 %v928, %v924
    %v1337 = vpack.c.b16 %v929, %v925
    %v1338 = vpack.c.b16 %v930, %v926
    %v1339 = vpack.c.b16 %v935, %v931
    %v1340 = vpack.c.b16 %v936, %v932
    %v1341 = vpack.c.b16 %v937, %v933
    %v1342 = vpack.c.b16 %v938, %v934
    %v1343 = vpack.c.b16 %v943, %v939
    %v1344 = vpack.c.b16 %v944, %v940
    %v1345 = vpack.c.b16 %v945, %v941
    %v1346 = vpack.c.b16 %v946, %v942
    %v1347 = vpack.c.b16 %v951, %v947
    %v1348 = vpack.c.b16 %v952, %v948
    %v1349 = vpack.c.b16 %v953, %v949
    %v1350 = vpack.c.b16 %v954, %v950
    %v1351 = vpack.c.b16 %v959, %v955
    %v1352 = vpack.c.b16 %v960, %v956
    %v1353 = vpack.c.b16 %v961, %v957
    %v1354 = vpack.c.b16 %v962, %v958
    %v1355 = vpack.c.b16 %v967, %v963
    %v1356 = vpack.c.b16 %v968, %v964
    %v1357 = vpack.c.b16 %v969, %v965
    %v1358 = vpack.c.b16 %v970, %v966
    %v1359 = vpack.c.b16 %v975, %v971
    %v1360 = vpack.c.b16 %v976, %v972
    %v1361 = vpack.c.b16 %v977, %v973
    %v1362 = vpack.c.b16 %v978, %v974
    %v1363 = vpack.c.b16 %v983, %v979
    %v1364 = vpack.c.b16 %v984, %v980
    %v1365 = vpack.c.b16 %v985, %v981
    %v1366 = vpack.c.b16 %v986, %v982
    %v1367 = vpack.c.b16 %v991, %v987
    %v1368 = vpack.c.b16 %v992, %v988
    %v1369 = vpack.c.b16 %v993, %v989
    %v1370 = vpack.c.b16 %v994, %v990
    %v1371 = vpack.c.b16 %v999, %v995
    %v1372 = vpack.c.b16 %v1000, %v996
    %v1373 = vpack.c.b16 %v1001, %v997
    %v1374 = vpack.c.b16 %v1002, %v998
    %v1375 = vpack.c.b16 %v1007, %v1003
    %v1376 = vpack.c.b16 %v1008, %v1004
    %v1377 = vpack.c.b16 %v1009, %v1005
    %v1378 = vpack.c.b16 %v1010, %v1006
    %v1379 = vpack.c.b16 %v1015, %v1011
    %v1380 = vpack.c.b16 %v1016, %v1012
    %v1381 = vpack.c.b16 %v1017, %v1013
    %v1382 = vpack.c.b16 %v1018, %v1014
    %v1383 = vpack.c.b16 %v1023, %v1019
    %v1384 = vpack.c.b16 %v1024, %v1020
    %v1385 = vpack.c.b16 %v1025, %v1021
    %v1386 = vpack.c.b16 %v1026, %v1022
    %v1387 = vpack.c.b16 %v1031, %v1027
    %v1388 = vpack.c.b16 %v1032, %v1028
    %v1389 = vpack.c.b16 %v1033, %v1029
    %v1390 = vpack.c.b16 %v1034, %v1030
    %v1391 = vpack.c.b16 %v1039, %v1035
    %v1392 = vpack.c.b16 %v1040, %v1036
    %v1393 = vpack.c.b16 %v1041, %v1037
    %v1394 = vpack.c.b16 %v1042, %v1038
    %v1395 = vpack.c.b16 %v1047, %v1043
    %v1396 = vpack.c.b16 %v1048, %v1044
    %v1397 = vpack.c.b16 %v1049, %v1045
    %v1398 = vpack.c.b16 %v1050, %v1046
    %v1399 = vpack.c.b16 %v1055, %v1051
    %v1400 = vpack.c.b16 %v1056, %v1052
    %v1401 = vpack.c.b16 %v1057, %v1053
    %v1402 = vpack.c.b16 %v1058, %v1054
    %v1403 = vpack.c.b16 %v1063, %v1059
    %v1404 = vpack.c.b16 %v1064, %v1060
    %v1405 = vpack.c.b16 %v1065, %v1061
    %v1406 = vpack.c.b16 %v1066, %v1062
    %v1407 = vpack.c.b16 %v1071, %v1067
    %v1408 = vpack.c.b16 %v1072, %v1068
    %v1409 = vpack.c.b16 %v1073, %v1069
    %v1410 = vpack.c.b16 %v1074, %v1070
    %v1411 = vpack.c.b16 %v1079, %v1075
    %v1412 = vpack.c.b16 %v1080, %v1076
    %v1413 = vpack.c.b16 %v1081, %v1077
    %v1414 = vpack.c.b16 %v1082, %v1078
    %v1415 = vpack.c.b16 %v1087, %v1083
    %v1416 = vpack.c.b16 %v1088, %v1084
    %v1417 = vpack.c.b16 %v1089, %v1085
    %v1418 = vpack.c.b16 %v1090, %v1086
    %v1419 = vpack.c.b16 %v1095, %v1091
    %v1420 = vpack.c.b16 %v1096, %v1092
    %v1421 = vpack.c.b16 %v1097, %v1093
    %v1422 = vpack.c.b16 %v1098, %v1094
    %v1423 = vpack.c.b16 %v1103, %v1099
    %v1424 = vpack.c.b16 %v1104, %v1100
    %v1425 = vpack.c.b16 %v1105, %v1101
    %v1426 = vpack.c.b16 %v1106, %v1102
    %v1427 = vpack.c.b16 %v1111, %v1107
    %v1428 = vpack.c.b16 %v1112, %v1108
    %v1429 = vpack.c.b16 %v1113, %v1109
    %v1430 = vpack.c.b16 %v1114, %v1110
    %v1431 = vpack.c.b16 %v1119, %v1115
    %v1432 = vpack.c.b16 %v1120, %v1116
    %v1433 = vpack.c.b16 %v1121, %v1117
    %v1434 = vpack.c.b16 %v1122, %v1118
    %v1435 = vpack.c.b16 %v1127, %v1123
    %v1436 = vpack.c.b16 %v1128, %v1124
    %v1437 = vpack.c.b16 %v1129, %v1125
    %v1438 = vpack.c.b16 %v1130, %v1126
    %v1439 = vpack.c.b16 %v1135, %v1131
    %v1440 = vpack.c.b16 %v1136, %v1132
    %v1441 = vpack.c.b16 %v1137, %v1133
    %v1442 = vpack.c.b16 %v1138, %v1134
    %v1443 = vpack.c.b16 %v1143, %v1139
    %v1444 = vpack.c.b16 %v1144, %v1140
    %v1445 = vpack.c.b16 %v1145, %v1141
    %v1446 = vpack.c.b16 %v1146, %v1142
    %v1447 = vpack.c.b16 %v1151, %v1147
    %v1448 = vpack.c.b16 %v1152, %v1148
    %v1449 = vpack.c.b16 %v1153, %v1149
    %v1450 = vpack.c.b16 %v1154, %v1150
    %v1451 = vpack.c.b16 %v1159, %v1155
    %v1452 = vpack.c.b16 %v1160, %v1156
    %v1453 = vpack.c.b16 %v1161, %v1157
    %v1454 = vpack.c.b16 %v1162, %v1158
    %v1455 = vpack.c.b16 %v1167, %v1163
    %v1456 = vpack.c.b16 %v1168, %v1164
    %v1457 = vpack.c.b16 %v1169, %v1165
    %v1458 = vpack.c.b16 %v1170, %v1166
    %v1459 = vpack.c.b16 %v1175, %v1171
    %v1460 = vpack.c.b16 %v1176, %v1172
    %v1461 = vpack.c.b16 %v1177, %v1173
    %v1462 = vpack.c.b16 %v1178, %v1174
    %v1463 = vpack.c.b16 %v1183, %v1179
    %v1464 = vpack.c.b16 %v1184, %v1180
    %v1465 = vpack.c.b16 %v1185, %v1181
    %v1466 = vpack.c.b16 %v1186, %v1182
    %v1467 = vpack.c.b16 %v1191, %v1187
    %v1468 = vpack.c.b16 %v1192, %v1188
    %v1469 = vpack.c.b16 %v1193, %v1189
    %v1470 = vpack.c.b16 %v1194, %v1190
    %v1471 = vpack.c.b16 %v1199, %v1195
    %v1472 = vpack.c.b16 %v1200, %v1196
    %v1473 = vpack.c.b16 %v1201, %v1197
    %v1474 = vpack.c.b16 %v1202, %v1198
    %v1475 = vpack.c.b16 %v1207, %v1203
    %v1476 = vpack.c.b16 %v1208, %v1204
    %v1477 = vpack.c.b16 %v1209, %v1205
    %v1478 = vpack.c.b16 %v1210, %v1206
    %v1479 = vpack.c.b16 %v1215, %v1211
    %v1480 = vpack.c.b16 %v1216, %v1212
    %v1481 = vpack.c.b16 %v1217, %v1213
    %v1482 = vpack.c.b16 %v1218, %v1214
    %v1483 = vpack.c.b16 %v1223, %v1219
    %v1484 = vpack.c.b16 %v1224, %v1220
    %v1485 = vpack.c.b16 %v1225, %v1221
    %v1486 = vpack.c.b16 %v1226, %v1222
    %v1487 = vpack.c.b16 %v1231, %v1227
    %v1488 = vpack.c.b16 %v1232, %v1228
    %v1489 = vpack.c.b16 %v1233, %v1229
    %v1490 = vpack.c.b16 %v1234, %v1230
    %1747 = vmatprep.subr.bf16.mxu0 %v1264
    %1748 = vmatpush1.bf16.msra.mxu0 %v1263
    %1749 = vmatprep.subr.bf16.mxu0 %v1260
    %1750 = vmatpush1.bf16.msra.mxu0 %v1259
    %1751 = vmatprep.subr.bf16.mxu0 %v1256
    %1752 = vmatpush1.bf16.msra.mxu0 %v1255
    %1753 = vmatprep.subr.bf16.mxu0 %v1252
    %1754 = vmatpush1.bf16.msra.mxu0 %v1251
    %1755 = vmatprep.subr.bf16.mxu0 %v1248
    %1756 = vmatpush1.bf16.msra.mxu0 %v1247
    %1757 = vmatprep.subr.bf16.mxu0 %v1244
    %1758 = vmatpush1.bf16.msra.mxu0 %v1243
    %1759 = vmatprep.subr.bf16.mxu0 %v1240
    %1760 = vmatpush1.bf16.msra.mxu0 %v1239
    %1761 = vmatprep.subr.bf16.mxu0 %v1236
    %1762 = vmatpush1.bf16.msra.mxu0 %v1235
    %1763 = vmatprep.subr.bf16.mxu0 %v1296
    %1764 = vmatpush2.bf16.msra.mxu0 %v1295
    %1765 = vmatprep.subr.bf16.mxu0 %v1292
    %1766 = vmatpush2.bf16.msra.mxu0 %v1291
    %1767 = vmatprep.subr.bf16.mxu0 %v1288
    %1768 = vmatpush2.bf16.msra.mxu0 %v1287
    %1769 = vmatprep.subr.bf16.mxu0 %v1284
    %1770 = vmatpush2.bf16.msra.mxu0 %v1283
    %1771 = vmatprep.subr.bf16.mxu0 %v1280
    %1772 = vmatpush2.bf16.msra.mxu0 %v1279
    %1773 = vmatprep.subr.bf16.mxu0 %v1276
    %1774 = vmatpush2.bf16.msra.mxu0 %v1275
    %1775 = vmatprep.subr.bf16.mxu0 %v1272
    %1776 = vmatpush2.bf16.msra.mxu0 %v1271
    %1777 = vmatprep.subr.bf16.mxu0 %v1268
    %1778 = vmatpush2.bf16.msra.mxu0 %v1267
    %1779 = vmatprep.mubr.bf16.mxu0 %v74
    %1780 = vmatmul.mubr.bf16.gmra.mxu0 %v73
    %v1781 = vpop.f32.mrf.mxu0
    %v1782 = vadd.f32 %v438, %v1781
    %v1783 = vpop.f32.mrf.mxu0
    %v1784 = vadd.f32 %v442, %v1783
    %v1785 = vpop.f32.mrf.mxu0
    %v1786 = vpop.f32.mrf.mxu0
    %1787 = vdwg.mxu0
    %1788 = vmatprep.subr.bf16.mxu0 %v1328
    %1789 = vmatpush1.bf16.msra.mxu0 %v1327
    %1790 = vmatprep.subr.bf16.mxu0 %v1324
    %1791 = vmatpush1.bf16.msra.mxu0 %v1323
    %1792 = vmatprep.subr.bf16.mxu0 %v1320
    %1793 = vmatpush1.bf16.msra.mxu0 %v1319
    %1794 = vmatprep.subr.bf16.mxu0 %v1316
    %1795 = vmatpush1.bf16.msra.mxu0 %v1315
    %1796 = vmatprep.subr.bf16.mxu0 %v1312
    %1797 = vmatpush1.bf16.msra.mxu0 %v1311
    %1798 = vmatprep.subr.bf16.mxu0 %v1308
    %1799 = vmatpush1.bf16.msra.mxu0 %v1307
    %1800 = vmatprep.subr.bf16.mxu0 %v1304
    %1801 = vmatpush1.bf16.msra.mxu0 %v1303
    %1802 = vmatprep.subr.bf16.mxu0 %v1300
    %1803 = vmatpush1.bf16.msra.mxu0 %v1299
    %1804 = vmatprep.subr.bf16.mxu0 %v1360
    %1805 = vmatpush2.bf16.msra.mxu0 %v1359
    %1806 = vmatprep.subr.bf16.mxu0 %v1356
    %1807 = vmatpush2.bf16.msra.mxu0 %v1355
    %1808 = vmatprep.subr.bf16.mxu0 %v1352
    %1809 = vmatpush2.bf16.msra.mxu0 %v1351
    %1810 = vmatprep.subr.bf16.mxu0 %v1348
    %1811 = vmatpush2.bf16.msra.mxu0 %v1347
    %1812 = vmatprep.subr.bf16.mxu0 %v1344
    %1813 = vmatpush2.bf16.msra.mxu0 %v1343
    %1814 = vmatprep.subr.bf16.mxu0 %v1340
    %1815 = vmatpush2.bf16.msra.mxu0 %v1339
    %1816 = vmatprep.subr.bf16.mxu0 %v1336
    %1817 = vmatpush2.bf16.msra.mxu0 %v1335
    %1818 = vmatprep.subr.bf16.mxu0 %v1332
    %1819 = vmatpush2.bf16.msra.mxu0 %v1331
    %1820 = vmatprep.mubr.bf16.mxu0 %v76
    %1821 = vmatmul.mubr.bf16.gmra.mxu0 %v75
    %v1822 = vpop.f32.mrf.mxu0
    %v1823 = vadd.f32 %v1782, %v1822
    %v1824 = vpop.f32.mrf.mxu0
    %v1825 = vadd.f32 %v1784, %v1824
    %v1826 = vpop.f32.mrf.mxu0
    %v1827 = vpop.f32.mrf.mxu0
    %1828 = vdwg.mxu0
    %1829 = vmatprep.subr.bf16.mxu0 %v1392
    %1830 = vmatpush1.bf16.msra.mxu0 %v1391
    %1831 = vmatprep.subr.bf16.mxu0 %v1388
    %1832 = vmatpush1.bf16.msra.mxu0 %v1387
    %1833 = vmatprep.subr.bf16.mxu0 %v1384
    %1834 = vmatpush1.bf16.msra.mxu0 %v1383
    %1835 = vmatprep.subr.bf16.mxu0 %v1380
    %1836 = vmatpush1.bf16.msra.mxu0 %v1379
    %1837 = vmatprep.subr.bf16.mxu0 %v1376
    %1838 = vmatpush1.bf16.msra.mxu0 %v1375
    %1839 = vmatprep.subr.bf16.mxu0 %v1372
    %1840 = vmatpush1.bf16.msra.mxu0 %v1371
    %1841 = vmatprep.subr.bf16.mxu0 %v1368
    %1842 = vmatpush1.bf16.msra.mxu0 %v1367
    %1843 = vmatprep.subr.bf16.mxu0 %v1364
    %1844 = vmatpush1.bf16.msra.mxu0 %v1363
    %1845 = vmatprep.subr.bf16.mxu0 %v1424
    %1846 = vmatpush2.bf16.msra.mxu0 %v1423
    %1847 = vmatprep.subr.bf16.mxu0 %v1420
    %1848 = vmatpush2.bf16.msra.mxu0 %v1419
    %1849 = vmatprep.subr.bf16.mxu0 %v1416
    %1850 = vmatpush2.bf16.msra.mxu0 %v1415
    %1851 = vmatprep.subr.bf16.mxu0 %v1412
    %1852 = vmatpush2.bf16.msra.mxu0 %v1411
    %1853 = vmatprep.subr.bf16.mxu0 %v1408
    %1854 = vmatpush2.bf16.msra.mxu0 %v1407
    %1855 = vmatprep.subr.bf16.mxu0 %v1404
    %1856 = vmatpush2.bf16.msra.mxu0 %v1403
    %1857 = vmatprep.subr.bf16.mxu0 %v1400
    %1858 = vmatpush2.bf16.msra.mxu0 %v1399
    %1859 = vmatprep.subr.bf16.mxu0 %v1396
    %1860 = vmatpush2.bf16.msra.mxu0 %v1395
    %1861 = vmatprep.mubr.bf16.mxu0 %v78
    %1862 = vmatmul.mubr.bf16.gmra.mxu0 %v77
    %v1863 = vpop.f32.mrf.mxu0
    %v1864 = vadd.f32 %v1823, %v1863
    %v1865 = vpop.f32.mrf.mxu0
    %v1866 = vadd.f32 %v1825, %v1865
    %v1867 = vpop.f32.mrf.mxu0
    %v1868 = vpop.f32.mrf.mxu0
    %1869 = vdwg.mxu0
    %1870 = vmatprep.subr.bf16.mxu0 %v1456
    %1871 = vmatpush1.bf16.msra.mxu0 %v1455
    %1872 = vmatprep.subr.bf16.mxu0 %v1452
    %1873 = vmatpush1.bf16.msra.mxu0 %v1451
    %1874 = vmatprep.subr.bf16.mxu0 %v1448
    %1875 = vmatpush1.bf16.msra.mxu0 %v1447
    %1876 = vmatprep.subr.bf16.mxu0 %v1444
    %1877 = vmatpush1.bf16.msra.mxu0 %v1443
    %1878 = vmatprep.subr.bf16.mxu0 %v1440
    %1879 = vmatpush1.bf16.msra.mxu0 %v1439
    %1880 = vmatprep.subr.bf16.mxu0 %v1436
    %1881 = vmatpush1.bf16.msra.mxu0 %v1435
    %1882 = vmatprep.subr.bf16.mxu0 %v1432
    %1883 = vmatpush1.bf16.msra.mxu0 %v1431
    %1884 = vmatprep.subr.bf16.mxu0 %v1428
    %1885 = vmatpush1.bf16.msra.mxu0 %v1427
    %1886 = vmatprep.subr.bf16.mxu0 %v1488
    %1887 = vmatpush2.bf16.msra.mxu0 %v1487
    %1888 = vmatprep.subr.bf16.mxu0 %v1484
    %1889 = vmatpush2.bf16.msra.mxu0 %v1483
    %1890 = vmatprep.subr.bf16.mxu0 %v1480
    %1891 = vmatpush2.bf16.msra.mxu0 %v1479
    %1892 = vmatprep.subr.bf16.mxu0 %v1476
    %1893 = vmatpush2.bf16.msra.mxu0 %v1475
    %1894 = vmatprep.subr.bf16.mxu0 %v1472
    %1895 = vmatpush2.bf16.msra.mxu0 %v1471
    %1896 = vmatprep.subr.bf16.mxu0 %v1468
    %1897 = vmatpush2.bf16.msra.mxu0 %v1467
    %1898 = vmatprep.subr.bf16.mxu0 %v1464
    %1899 = vmatpush2.bf16.msra.mxu0 %v1463
    %1900 = vmatprep.subr.bf16.mxu0 %v1460
    %1901 = vmatpush2.bf16.msra.mxu0 %v1459
    %1902 = vmatprep.mubr.bf16.mxu0 %v80
    %1903 = vmatmul.mubr.bf16.gmra.mxu0 %v79
    %v1904 = vpop.f32.mrf.mxu0
    %v1905 = vadd.f32 %v1864, %v1904
    %v1906 = vpop.f32.mrf.mxu0
    %v1907 = vadd.f32 %v1866, %v1906
    %v1908 = vpop.f32.mrf.mxu0
    %v1909 = vpop.f32.mrf.mxu0
    %1910 = vdwg.mxu0
    %1911 = vmatprep.subr.bf16.mxu0 %v1266
    %1912 = vmatpush1.bf16.msra.mxu0 %v1265
    %1913 = vmatprep.subr.bf16.mxu0 %v1262
    %1914 = vmatpush1.bf16.msra.mxu0 %v1261
    %1915 = vmatprep.subr.bf16.mxu0 %v1258
    %1916 = vmatpush1.bf16.msra.mxu0 %v1257
    %1917 = vmatprep.subr.bf16.mxu0 %v1254
    %1918 = vmatpush1.bf16.msra.mxu0 %v1253
    %1919 = vmatprep.subr.bf16.mxu0 %v1250
    %1920 = vmatpush1.bf16.msra.mxu0 %v1249
    %1921 = vmatprep.subr.bf16.mxu0 %v1246
    %1922 = vmatpush1.bf16.msra.mxu0 %v1245
    %1923 = vmatprep.subr.bf16.mxu0 %v1242
    %1924 = vmatpush1.bf16.msra.mxu0 %v1241
    %1925 = vmatprep.subr.bf16.mxu0 %v1238
    %1926 = vmatpush1.bf16.msra.mxu0 %v1237
    %1927 = vmatprep.subr.bf16.mxu0 %v1298
    %1928 = vmatpush2.bf16.msra.mxu0 %v1297
    %1929 = vmatprep.subr.bf16.mxu0 %v1294
    %1930 = vmatpush2.bf16.msra.mxu0 %v1293
    %1931 = vmatprep.subr.bf16.mxu0 %v1290
    %1932 = vmatpush2.bf16.msra.mxu0 %v1289
    %1933 = vmatprep.subr.bf16.mxu0 %v1286
    %1934 = vmatpush2.bf16.msra.mxu0 %v1285
    %1935 = vmatprep.subr.bf16.mxu0 %v1282
    %1936 = vmatpush2.bf16.msra.mxu0 %v1281
    %1937 = vmatprep.subr.bf16.mxu0 %v1278
    %1938 = vmatpush2.bf16.msra.mxu0 %v1277
    %1939 = vmatprep.subr.bf16.mxu0 %v1274
    %1940 = vmatpush2.bf16.msra.mxu0 %v1273
    %1941 = vmatprep.subr.bf16.mxu0 %v1270
    %1942 = vmatpush2.bf16.msra.mxu0 %v1269
    %1943 = vmatprep.mubr.bf16.mxu0 %v74
    %1944 = vmatmul.mubr.bf16.gmra.mxu0 %v73
    %v1945 = vpop.f32.mrf.mxu0
    %v1946 = vadd.f32 %v446, %v1945
    %v1947 = vpop.f32.mrf.mxu0
    %v1948 = vadd.f32 %v450, %v1947
    %v1949 = vpop.f32.mrf.mxu0
    %v1950 = vpop.f32.mrf.mxu0
    %1951 = vdwg.mxu0
    %1952 = vmatprep.subr.bf16.mxu0 %v1330
    %1953 = vmatpush1.bf16.msra.mxu0 %v1329
    %1954 = vmatprep.subr.bf16.mxu0 %v1326
    %1955 = vmatpush1.bf16.msra.mxu0 %v1325
    %1956 = vmatprep.subr.bf16.mxu0 %v1322
    %1957 = vmatpush1.bf16.msra.mxu0 %v1321
    %1958 = vmatprep.subr.bf16.mxu0 %v1318
    %1959 = vmatpush1.bf16.msra.mxu0 %v1317
    %1960 = vmatprep.subr.bf16.mxu0 %v1314
    %1961 = vmatpush1.bf16.msra.mxu0 %v1313
    %1962 = vmatprep.subr.bf16.mxu0 %v1310
    %1963 = vmatpush1.bf16.msra.mxu0 %v1309
    %1964 = vmatprep.subr.bf16.mxu0 %v1306
    %1965 = vmatpush1.bf16.msra.mxu0 %v1305
    %1966 = vmatprep.subr.bf16.mxu0 %v1302
    %1967 = vmatpush1.bf16.msra.mxu0 %v1301
    %1968 = vmatprep.subr.bf16.mxu0 %v1362
    %1969 = vmatpush2.bf16.msra.mxu0 %v1361
    %1970 = vmatprep.subr.bf16.mxu0 %v1358
    %1971 = vmatpush2.bf16.msra.mxu0 %v1357
    %1972 = vmatprep.subr.bf16.mxu0 %v1354
    %1973 = vmatpush2.bf16.msra.mxu0 %v1353
    %1974 = vmatprep.subr.bf16.mxu0 %v1350
    %1975 = vmatpush2.bf16.msra.mxu0 %v1349
    %1976 = vmatprep.subr.bf16.mxu0 %v1346
    %1977 = vmatpush2.bf16.msra.mxu0 %v1345
    %1978 = vmatprep.subr.bf16.mxu0 %v1342
    %1979 = vmatpush2.bf16.msra.mxu0 %v1341
    %1980 = vmatprep.subr.bf16.mxu0 %v1338
    %1981 = vmatpush2.bf16.msra.mxu0 %v1337
    %1982 = vmatprep.subr.bf16.mxu0 %v1334
    %1983 = vmatpush2.bf16.msra.mxu0 %v1333
    %1984 = vmatprep.mubr.bf16.mxu0 %v76
    %1985 = vmatmul.mubr.bf16.gmra.mxu0 %v75
    %v1986 = vpop.f32.mrf.mxu0
    %v1987 = vadd.f32 %v1946, %v1986
    %v1988 = vpop.f32.mrf.mxu0
    %v1989 = vadd.f32 %v1948, %v1988
    %v1990 = vpop.f32.mrf.mxu0
    %v1991 = vpop.f32.mrf.mxu0
    %1992 = vdwg.mxu0
    %1993 = vmatprep.subr.bf16.mxu0 %v1394
    %1994 = vmatpush1.bf16.msra.mxu0 %v1393
    %1995 = vmatprep.subr.bf16.mxu0 %v1390
    %1996 = vmatpush1.bf16.msra.mxu0 %v1389
    %1997 = vmatprep.subr.bf16.mxu0 %v1386
    %1998 = vmatpush1.bf16.msra.mxu0 %v1385
    %1999 = vmatprep.subr.bf16.mxu0 %v1382
    %2000 = vmatpush1.bf16.msra.mxu0 %v1381
    %2001 = vmatprep.subr.bf16.mxu0 %v1378
    %2002 = vmatpush1.bf16.msra.mxu0 %v1377
    %2003 = vmatprep.subr.bf16.mxu0 %v1374
    %2004 = vmatpush1.bf16.msra.mxu0 %v1373
    %2005 = vmatprep.subr.bf16.mxu0 %v1370
    %2006 = vmatpush1.bf16.msra.mxu0 %v1369
    %2007 = vmatprep.subr.bf16.mxu0 %v1366
    %2008 = vmatpush1.bf16.msra.mxu0 %v1365
    %2009 = vmatprep.subr.bf16.mxu0 %v1426
    %2010 = vmatpush2.bf16.msra.mxu0 %v1425
    %2011 = vmatprep.subr.bf16.mxu0 %v1422
    %2012 = vmatpush2.bf16.msra.mxu0 %v1421
    %2013 = vmatprep.subr.bf16.mxu0 %v1418
    %2014 = vmatpush2.bf16.msra.mxu0 %v1417
    %2015 = vmatprep.subr.bf16.mxu0 %v1414
    %2016 = vmatpush2.bf16.msra.mxu0 %v1413
    %2017 = vmatprep.subr.bf16.mxu0 %v1410
    %2018 = vmatpush2.bf16.msra.mxu0 %v1409
    %2019 = vmatprep.subr.bf16.mxu0 %v1406
    %2020 = vmatpush2.bf16.msra.mxu0 %v1405
    %2021 = vmatprep.subr.bf16.mxu0 %v1402
    %2022 = vmatpush2.bf16.msra.mxu0 %v1401
    %2023 = vmatprep.subr.bf16.mxu0 %v1398
    %2024 = vmatpush2.bf16.msra.mxu0 %v1397
    %2025 = vmatprep.mubr.bf16.mxu0 %v78
    %2026 = vmatmul.mubr.bf16.gmra.mxu0 %v77
    %v2027 = vpop.f32.mrf.mxu0
    %v2028 = vadd.f32 %v1987, %v2027
    %v2029 = vpop.f32.mrf.mxu0
    %v2030 = vadd.f32 %v1989, %v2029
    %v2031 = vpop.f32.mrf.mxu0
    %v2032 = vpop.f32.mrf.mxu0
    %2033 = vdwg.mxu0
    %2034 = vmatprep.subr.bf16.mxu0 %v1458
    %2035 = vmatpush1.bf16.msra.mxu0 %v1457
    %2036 = vmatprep.subr.bf16.mxu0 %v1454
    %2037 = vmatpush1.bf16.msra.mxu0 %v1453
    %2038 = vmatprep.subr.bf16.mxu0 %v1450
    %2039 = vmatpush1.bf16.msra.mxu0 %v1449
    %2040 = vmatprep.subr.bf16.mxu0 %v1446
    %2041 = vmatpush1.bf16.msra.mxu0 %v1445
    %2042 = vmatprep.subr.bf16.mxu0 %v1442
    %2043 = vmatpush1.bf16.msra.mxu0 %v1441
    %2044 = vmatprep.subr.bf16.mxu0 %v1438
    %2045 = vmatpush1.bf16.msra.mxu0 %v1437
    %2046 = vmatprep.subr.bf16.mxu0 %v1434
    %2047 = vmatpush1.bf16.msra.mxu0 %v1433
    %2048 = vmatprep.subr.bf16.mxu0 %v1430
    %2049 = vmatpush1.bf16.msra.mxu0 %v1429
    %2050 = vmatprep.subr.bf16.mxu0 %v1490
    %2051 = vmatpush2.bf16.msra.mxu0 %v1489
    %2052 = vmatprep.subr.bf16.mxu0 %v1486
    %2053 = vmatpush2.bf16.msra.mxu0 %v1485
    %2054 = vmatprep.subr.bf16.mxu0 %v1482
    %2055 = vmatpush2.bf16.msra.mxu0 %v1481
    %2056 = vmatprep.subr.bf16.mxu0 %v1478
    %2057 = vmatpush2.bf16.msra.mxu0 %v1477
    %2058 = vmatprep.subr.bf16.mxu0 %v1474
    %2059 = vmatpush2.bf16.msra.mxu0 %v1473
    %2060 = vmatprep.subr.bf16.mxu0 %v1470
    %2061 = vmatpush2.bf16.msra.mxu0 %v1469
    %2062 = vmatprep.subr.bf16.mxu0 %v1466
    %2063 = vmatpush2.bf16.msra.mxu0 %v1465
    %2064 = vmatprep.subr.bf16.mxu0 %v1462
    %2065 = vmatpush2.bf16.msra.mxu0 %v1461
    %2066 = vmatprep.mubr.bf16.mxu0 %v80
    %2067 = vmatmul.mubr.bf16.gmra.mxu0 %v79
    %v2068 = vpop.f32.mrf.mxu0
    %v2069 = vadd.f32 %v2028, %v2068
    %v2070 = vpop.f32.mrf.mxu0
    %v2071 = vadd.f32 %v2030, %v2070
    %v2072 = vpop.f32.mrf.mxu0
    %v2073 = vpop.f32.mrf.mxu0
    %2074 = vdwg.mxu0
    %vm2075 = vcmp.gt.f32.partialorder 0.0, 1.0
    %v2076 = vsel %vm2075, 1, 0
    %v2077 = vcvt.s32.f32 %v2076
    %v2078 = vpack.c.bf16 %v2077, %v2077
    %v2079 = vadd.f32 %v1905, 0.0
    %v2080 = vadd.f32 %v1907, 0.0
    %v2081 = vadd.f32 %v2069, 0.0
    %v2082 = vadd.f32 %v2071, 0.0
    %v2147 = vunpack.c.l.b16 %v337
    %v2148 = vunpack.c.h.b16 %v337
    %v2149 = vunpack.c.l.b16 %v338
    %v2150 = vunpack.c.h.b16 %v338
    %v2151 = vunpack.c.l.b16 %v339
    %v2152 = vunpack.c.h.b16 %v339
    %v2153 = vunpack.c.l.b16 %v340
    %v2154 = vunpack.c.h.b16 %v340
    %v2155 = vunpack.c.l.b16 %v341
    %v2156 = vunpack.c.h.b16 %v341
    %v2157 = vunpack.c.l.b16 %v342
    %v2158 = vunpack.c.h.b16 %v342
    %v2159 = vunpack.c.l.b16 %v343
    %v2160 = vunpack.c.h.b16 %v343
    %v2161 = vunpack.c.l.b16 %v344
    %v2162 = vunpack.c.h.b16 %v344
    %v2163 = vunpack.c.l.b16 %v345
    %v2164 = vunpack.c.h.b16 %v345
    %v2165 = vunpack.c.l.b16 %v346
    %v2166 = vunpack.c.h.b16 %v346
    %v2167 = vunpack.c.l.b16 %v347
    %v2168 = vunpack.c.h.b16 %v347
    %v2169 = vunpack.c.l.b16 %v348
    %v2170 = vunpack.c.h.b16 %v348
    %v2171 = vunpack.c.l.b16 %v349
    %v2172 = vunpack.c.h.b16 %v349
    %v2173 = vunpack.c.l.b16 %v350
    %v2174 = vunpack.c.h.b16 %v350
    %v2175 = vunpack.c.l.b16 %v351
    %v2176 = vunpack.c.h.b16 %v351
    %v2177 = vunpack.c.l.b16 %v352
    %v2178 = vunpack.c.h.b16 %v352
    %v2179 = vunpack.c.l.b16 %v353
    %v2180 = vunpack.c.h.b16 %v353
    %v2181 = vunpack.c.l.b16 %v354
    %v2182 = vunpack.c.h.b16 %v354
    %v2183 = vunpack.c.l.b16 %v355
    %v2184 = vunpack.c.h.b16 %v355
    %v2185 = vunpack.c.l.b16 %v356
    %v2186 = vunpack.c.h.b16 %v356
    %v2187 = vunpack.c.l.b16 %v357
    %v2188 = vunpack.c.h.b16 %v357
    %v2189 = vunpack.c.l.b16 %v358
    %v2190 = vunpack.c.h.b16 %v358
    %v2191 = vunpack.c.l.b16 %v359
    %v2192 = vunpack.c.h.b16 %v359
    %v2193 = vunpack.c.l.b16 %v360
    %v2194 = vunpack.c.h.b16 %v360
    %v2195 = vunpack.c.l.b16 %v361
    %v2196 = vunpack.c.h.b16 %v361
    %v2197 = vunpack.c.l.b16 %v362
    %v2198 = vunpack.c.h.b16 %v362
    %v2199 = vunpack.c.l.b16 %v363
    %v2200 = vunpack.c.h.b16 %v363
    %v2201 = vunpack.c.l.b16 %v364
    %v2202 = vunpack.c.h.b16 %v364
    %v2203 = vunpack.c.l.b16 %v365
    %v2204 = vunpack.c.h.b16 %v365
    %v2205 = vunpack.c.l.b16 %v366
    %v2206 = vunpack.c.h.b16 %v366
    %v2207 = vunpack.c.l.b16 %v367
    %v2208 = vunpack.c.h.b16 %v367
    %v2209 = vunpack.c.l.b16 %v368
    %v2210 = vunpack.c.h.b16 %v368
    %v2211 = vunpack.c.l.b16 %v369
    %v2212 = vunpack.c.h.b16 %v369
    %v2213 = vunpack.c.l.b16 %v370
    %v2214 = vunpack.c.h.b16 %v370
    %v2215 = vunpack.c.l.b16 %v371
    %v2216 = vunpack.c.h.b16 %v371
    %v2217 = vunpack.c.l.b16 %v372
    %v2218 = vunpack.c.h.b16 %v372
    %v2219 = vunpack.c.l.b16 %v373
    %v2220 = vunpack.c.h.b16 %v373
    %v2221 = vunpack.c.l.b16 %v374
    %v2222 = vunpack.c.h.b16 %v374
    %v2223 = vunpack.c.l.b16 %v375
    %v2224 = vunpack.c.h.b16 %v375
    %v2225 = vunpack.c.l.b16 %v376
    %v2226 = vunpack.c.h.b16 %v376
    %v2227 = vunpack.c.l.b16 %v377
    %v2228 = vunpack.c.h.b16 %v377
    %v2229 = vunpack.c.l.b16 %v378
    %v2230 = vunpack.c.h.b16 %v378
    %v2231 = vunpack.c.l.b16 %v379
    %v2232 = vunpack.c.h.b16 %v379
    %v2233 = vunpack.c.l.b16 %v380
    %v2234 = vunpack.c.h.b16 %v380
    %v2235 = vunpack.c.l.b16 %v381
    %v2236 = vunpack.c.h.b16 %v381
    %v2237 = vunpack.c.l.b16 %v382
    %v2238 = vunpack.c.h.b16 %v382
    %v2239 = vunpack.c.l.b16 %v383
    %v2240 = vunpack.c.h.b16 %v383
    %v2241 = vunpack.c.l.b16 %v384
    %v2242 = vunpack.c.h.b16 %v384
    %v2243 = vunpack.c.l.b16 %v385
    %v2244 = vunpack.c.h.b16 %v385
    %v2245 = vunpack.c.l.b16 %v386
    %v2246 = vunpack.c.h.b16 %v386
    %v2247 = vunpack.c.l.b16 %v387
    %v2248 = vunpack.c.h.b16 %v387
    %v2249 = vunpack.c.l.b16 %v388
    %v2250 = vunpack.c.h.b16 %v388
    %v2251 = vunpack.c.l.b16 %v389
    %v2252 = vunpack.c.h.b16 %v389
    %v2253 = vunpack.c.l.b16 %v390
    %v2254 = vunpack.c.h.b16 %v390
    %v2255 = vunpack.c.l.b16 %v391
    %v2256 = vunpack.c.h.b16 %v391
    %v2257 = vunpack.c.l.b16 %v392
    %v2258 = vunpack.c.h.b16 %v392
    %v2259 = vunpack.c.l.b16 %v393
    %v2260 = vunpack.c.h.b16 %v393
    %v2261 = vunpack.c.l.b16 %v394
    %v2262 = vunpack.c.h.b16 %v394
    %v2263 = vunpack.c.l.b16 %v395
    %v2264 = vunpack.c.h.b16 %v395
    %v2265 = vunpack.c.l.b16 %v396
    %v2266 = vunpack.c.h.b16 %v396
    %v2267 = vunpack.c.l.b16 %v397
    %v2268 = vunpack.c.h.b16 %v397
    %v2269 = vunpack.c.l.b16 %v398
    %v2270 = vunpack.c.h.b16 %v398
    %v2271 = vunpack.c.l.b16 %v399
    %v2272 = vunpack.c.h.b16 %v399
    %v2273 = vunpack.c.l.b16 %v400
    %v2274 = vunpack.c.h.b16 %v400
    %v2275 = vpack.c.b16 %v2149, %v2147
    %v2276 = vpack.c.b16 %v2150, %v2148
    %v2277 = vpack.c.b16 %v2153, %v2151
    %v2278 = vpack.c.b16 %v2154, %v2152
    %v2279 = vpack.c.b16 %v2157, %v2155
    %v2280 = vpack.c.b16 %v2158, %v2156
    %v2281 = vpack.c.b16 %v2161, %v2159
    %v2282 = vpack.c.b16 %v2162, %v2160
    %v2283 = vpack.c.b16 %v2165, %v2163
    %v2284 = vpack.c.b16 %v2166, %v2164
    %v2285 = vpack.c.b16 %v2169, %v2167
    %v2286 = vpack.c.b16 %v2170, %v2168
    %v2287 = vpack.c.b16 %v2173, %v2171
    %v2288 = vpack.c.b16 %v2174, %v2172
    %v2289 = vpack.c.b16 %v2177, %v2175
    %v2290 = vpack.c.b16 %v2178, %v2176
    %v2291 = vpack.c.b16 %v2181, %v2179
    %v2292 = vpack.c.b16 %v2182, %v2180
    %v2293 = vpack.c.b16 %v2185, %v2183
    %v2294 = vpack.c.b16 %v2186, %v2184
    %v2295 = vpack.c.b16 %v2189, %v2187
    %v2296 = vpack.c.b16 %v2190, %v2188
    %v2297 = vpack.c.b16 %v2193, %v2191
    %v2298 = vpack.c.b16 %v2194, %v2192
    %v2299 = vpack.c.b16 %v2197, %v2195
    %v2300 = vpack.c.b16 %v2198, %v2196
    %v2301 = vpack.c.b16 %v2201, %v2199
    %v2302 = vpack.c.b16 %v2202, %v2200
    %v2303 = vpack.c.b16 %v2205, %v2203
    %v2304 = vpack.c.b16 %v2206, %v2204
    %v2305 = vpack.c.b16 %v2209, %v2207
    %v2306 = vpack.c.b16 %v2210, %v2208
    %v2307 = vpack.c.b16 %v2213, %v2211
    %v2308 = vpack.c.b16 %v2214, %v2212
    %v2309 = vpack.c.b16 %v2217, %v2215
    %v2310 = vpack.c.b16 %v2218, %v2216
    %v2311 = vpack.c.b16 %v2221, %v2219
    %v2312 = vpack.c.b16 %v2222, %v2220
    %v2313 = vpack.c.b16 %v2225, %v2223
    %v2314 = vpack.c.b16 %v2226, %v2224
    %v2315 = vpack.c.b16 %v2229, %v2227
    %v2316 = vpack.c.b16 %v2230, %v2228
    %v2317 = vpack.c.b16 %v2233, %v2231
    %v2318 = vpack.c.b16 %v2234, %v2232
    %v2319 = vpack.c.b16 %v2237, %v2235
    %v2320 = vpack.c.b16 %v2238, %v2236
    %v2321 = vpack.c.b16 %v2241, %v2239
    %v2322 = vpack.c.b16 %v2242, %v2240
    %v2323 = vpack.c.b16 %v2245, %v2243
    %v2324 = vpack.c.b16 %v2246, %v2244
    %v2325 = vpack.c.b16 %v2249, %v2247
    %v2326 = vpack.c.b16 %v2250, %v2248
    %v2327 = vpack.c.b16 %v2253, %v2251
    %v2328 = vpack.c.b16 %v2254, %v2252
    %v2329 = vpack.c.b16 %v2257, %v2255
    %v2330 = vpack.c.b16 %v2258, %v2256
    %v2331 = vpack.c.b16 %v2261, %v2259
    %v2332 = vpack.c.b16 %v2262, %v2260
    %v2333 = vpack.c.b16 %v2265, %v2263
    %v2334 = vpack.c.b16 %v2266, %v2264
    %v2335 = vpack.c.b16 %v2269, %v2267
    %v2336 = vpack.c.b16 %v2270, %v2268
    %v2337 = vpack.c.b16 %v2273, %v2271
    %v2338 = vpack.c.b16 %v2274, %v2272
    %2403 = vmatprep.subr.bf16.mxu0 %v2290
    %2404 = vmatpush1.bf16.msra.mxu0 %v2289
    %2405 = vmatprep.subr.bf16.mxu0 %v2288
    %2406 = vmatpush1.bf16.msra.mxu0 %v2287
    %2407 = vmatprep.subr.bf16.mxu0 %v2286
    %2408 = vmatpush1.bf16.msra.mxu0 %v2285
    %2409 = vmatprep.subr.bf16.mxu0 %v2284
    %2410 = vmatpush1.bf16.msra.mxu0 %v2283
    %2411 = vmatprep.subr.bf16.mxu0 %v2282
    %2412 = vmatpush1.bf16.msra.mxu0 %v2281
    %2413 = vmatprep.subr.bf16.mxu0 %v2280
    %2414 = vmatpush1.bf16.msra.mxu0 %v2279
    %2415 = vmatprep.subr.bf16.mxu0 %v2278
    %2416 = vmatpush1.bf16.msra.mxu0 %v2277
    %2417 = vmatprep.subr.bf16.mxu0 %v2276
    %2418 = vmatpush1.bf16.msra.mxu0 %v2275
    %2419 = vmatprep.subr.bf16.mxu0 %v2306
    %2420 = vmatpush2.bf16.msra.mxu0 %v2305
    %2421 = vmatprep.subr.bf16.mxu0 %v2304
    %2422 = vmatpush2.bf16.msra.mxu0 %v2303
    %2423 = vmatprep.subr.bf16.mxu0 %v2302
    %2424 = vmatpush2.bf16.msra.mxu0 %v2301
    %2425 = vmatprep.subr.bf16.mxu0 %v2300
    %2426 = vmatpush2.bf16.msra.mxu0 %v2299
    %2427 = vmatprep.subr.bf16.mxu0 %v2298
    %2428 = vmatpush2.bf16.msra.mxu0 %v2297
    %2429 = vmatprep.subr.bf16.mxu0 %v2296
    %2430 = vmatpush2.bf16.msra.mxu0 %v2295
    %2431 = vmatprep.subr.bf16.mxu0 %v2294
    %2432 = vmatpush2.bf16.msra.mxu0 %v2293
    %2433 = vmatprep.subr.bf16.mxu0 %v2292
    %2434 = vmatpush2.bf16.msra.mxu0 %v2291
    %2435 = vmatprep.mubr.bf16.mxu0 %v2078
    %2436 = vmatmul.mubr.bf16.gmra.mxu0 %v2078
    %v2437 = vpop.f32.mrf.mxu0
    %v2438 = vadd.f32 %v460, %v2437
    %v2439 = vpop.f32.mrf.mxu0
    %v2440 = vadd.f32 %v464, %v2439
    %v2441 = vpop.f32.mrf.mxu0
    %v2442 = vpop.f32.mrf.mxu0
    %2443 = vdwg.mxu0
    %2444 = vmatprep.subr.bf16.mxu0 %v2322
    %2445 = vmatpush1.bf16.msra.mxu0 %v2321
    %2446 = vmatprep.subr.bf16.mxu0 %v2320
    %2447 = vmatpush1.bf16.msra.mxu0 %v2319
    %2448 = vmatprep.subr.bf16.mxu0 %v2318
    %2449 = vmatpush1.bf16.msra.mxu0 %v2317
    %2450 = vmatprep.subr.bf16.mxu0 %v2316
    %2451 = vmatpush1.bf16.msra.mxu0 %v2315
    %2452 = vmatprep.subr.bf16.mxu0 %v2314
    %2453 = vmatpush1.bf16.msra.mxu0 %v2313
    %2454 = vmatprep.subr.bf16.mxu0 %v2312
    %2455 = vmatpush1.bf16.msra.mxu0 %v2311
    %2456 = vmatprep.subr.bf16.mxu0 %v2310
    %2457 = vmatpush1.bf16.msra.mxu0 %v2309
    %2458 = vmatprep.subr.bf16.mxu0 %v2308
    %2459 = vmatpush1.bf16.msra.mxu0 %v2307
    %2460 = vmatprep.subr.bf16.mxu0 %v2338
    %2461 = vmatpush2.bf16.msra.mxu0 %v2337
    %2462 = vmatprep.subr.bf16.mxu0 %v2336
    %2463 = vmatpush2.bf16.msra.mxu0 %v2335
    %2464 = vmatprep.subr.bf16.mxu0 %v2334
    %2465 = vmatpush2.bf16.msra.mxu0 %v2333
    %2466 = vmatprep.subr.bf16.mxu0 %v2332
    %2467 = vmatpush2.bf16.msra.mxu0 %v2331
    %2468 = vmatprep.subr.bf16.mxu0 %v2330
    %2469 = vmatpush2.bf16.msra.mxu0 %v2329
    %2470 = vmatprep.subr.bf16.mxu0 %v2328
    %2471 = vmatpush2.bf16.msra.mxu0 %v2327
    %2472 = vmatprep.subr.bf16.mxu0 %v2326
    %2473 = vmatpush2.bf16.msra.mxu0 %v2325
    %2474 = vmatprep.subr.bf16.mxu0 %v2324
    %2475 = vmatpush2.bf16.msra.mxu0 %v2323
    %2476 = vmatprep.mubr.bf16.mxu0 %v2078
    %2477 = vmatmul.mubr.bf16.gmra.mxu0 %v2078
    %v2478 = vpop.f32.mrf.mxu0
    %v2479 = vadd.f32 %v2438, %v2478
    %v2480 = vpop.f32.mrf.mxu0
    %v2481 = vadd.f32 %v2440, %v2480
    %v2482 = vpop.f32.mrf.mxu0
    %v2483 = vpop.f32.mrf.mxu0
    %2484 = vdwg.mxu0
    %v2485 = vadd.f32 %v2479, 0.0
    %v2486 = vadd.f32 %v2481, 0.0
    %v2519 = vunpack.c.l.b16 %v401
    %v2520 = vunpack.c.l.b16 %v402
    %v2521 = vunpack.c.l.b16 %v403
    %v2522 = vunpack.c.l.b16 %v404
    %v2523 = vunpack.c.l.b16 %v405
    %v2524 = vunpack.c.l.b16 %v406
    %v2525 = vunpack.c.l.b16 %v407
    %v2526 = vunpack.c.l.b16 %v408
    %v2527 = vunpack.c.l.b16 %v409
    %v2528 = vunpack.c.l.b16 %v410
    %v2529 = vunpack.c.l.b16 %v411
    %v2530 = vunpack.c.l.b16 %v412
    %v2531 = vunpack.c.l.b16 %v413
    %v2532 = vunpack.c.l.b16 %v414
    %v2533 = vunpack.c.l.b16 %v415
    %v2534 = vunpack.c.l.b16 %v416
    %v2535 = vunpack.c.l.b16 %v417
    %v2536 = vunpack.c.l.b16 %v418
    %v2537 = vunpack.c.l.b16 %v419
    %v2538 = vunpack.c.l.b16 %v420
    %v2539 = vunpack.c.l.b16 %v421
    %v2540 = vunpack.c.l.b16 %v422
    %v2541 = vunpack.c.l.b16 %v423
    %v2542 = vunpack.c.l.b16 %v424
    %v2543 = vunpack.c.l.b16 %v425
    %v2544 = vunpack.c.l.b16 %v426
    %v2545 = vunpack.c.l.b16 %v427
    %v2546 = vunpack.c.l.b16 %v428
    %v2547 = vunpack.c.l.b16 %v429
    %v2548 = vunpack.c.l.b16 %v430
    %v2549 = vunpack.c.l.b16 %v431
    %v2550 = vunpack.c.l.b16 %v432
    %v2551 = vpack.c.b16 %v2520, %v2519
    %v2552 = vpack.c.b16 %v2522, %v2521
    %v2553 = vpack.c.b16 %v2524, %v2523
    %v2554 = vpack.c.b16 %v2526, %v2525
    %v2555 = vpack.c.b16 %v2528, %v2527
    %v2556 = vpack.c.b16 %v2530, %v2529
    %v2557 = vpack.c.b16 %v2532, %v2531
    %v2558 = vpack.c.b16 %v2534, %v2533
    %v2559 = vpack.c.b16 %v2536, %v2535
    %v2560 = vpack.c.b16 %v2538, %v2537
    %v2561 = vpack.c.b16 %v2540, %v2539
    %v2562 = vpack.c.b16 %v2542, %v2541
    %v2563 = vpack.c.b16 %v2544, %v2543
    %v2564 = vpack.c.b16 %v2546, %v2545
    %v2565 = vpack.c.b16 %v2548, %v2547
    %v2566 = vpack.c.b16 %v2550, %v2549
    %2583 = vmatprep.subr.bf16.mxu0 0
    %2584 = vmatpush1.bf16.msra.mxu0 %v2558
    %2585 = vmatprep.subr.bf16.mxu0 0
    %2586 = vmatpush1.bf16.msra.mxu0 %v2557
    %2587 = vmatprep.subr.bf16.mxu0 0
    %2588 = vmatpush1.bf16.msra.mxu0 %v2556
    %2589 = vmatprep.subr.bf16.mxu0 0
    %2590 = vmatpush1.bf16.msra.mxu0 %v2555
    %2591 = vmatprep.subr.bf16.mxu0 0
    %2592 = vmatpush1.bf16.msra.mxu0 %v2554
    %2593 = vmatprep.subr.bf16.mxu0 0
    %2594 = vmatpush1.bf16.msra.mxu0 %v2553
    %2595 = vmatprep.subr.bf16.mxu0 0
    %2596 = vmatpush1.bf16.msra.mxu0 %v2552
    %2597 = vmatprep.subr.bf16.mxu0 0
    %2598 = vmatpush1.bf16.msra.mxu0 %v2551
    %2599 = vmatprep.subr.bf16.mxu0 0
    %2600 = vmatpush2.bf16.msra.mxu0 %v2566
    %2601 = vmatprep.subr.bf16.mxu0 0
    %2602 = vmatpush2.bf16.msra.mxu0 %v2565
    %2603 = vmatprep.subr.bf16.mxu0 0
    %2604 = vmatpush2.bf16.msra.mxu0 %v2564
    %2605 = vmatprep.subr.bf16.mxu0 0
    %2606 = vmatpush2.bf16.msra.mxu0 %v2563
    %2607 = vmatprep.subr.bf16.mxu0 0
    %2608 = vmatpush2.bf16.msra.mxu0 %v2562
    %2609 = vmatprep.subr.bf16.mxu0 0
    %2610 = vmatpush2.bf16.msra.mxu0 %v2561
    %2611 = vmatprep.subr.bf16.mxu0 0
    %2612 = vmatpush2.bf16.msra.mxu0 %v2560
    %2613 = vmatprep.subr.bf16.mxu0 0
    %2614 = vmatpush2.bf16.msra.mxu0 %v2559
    %2615 = vmatprep.mubr.bf16.mxu0 %v2078
    %2616 = vmatmul.mubr.bf16.gmra.mxu0 %v2078
    %v2617 = vpop.f32.mrf.mxu0
    %v2618 = vadd.f32 0.0, %v2617
    %v2619 = vpop.f32.mrf.mxu0
    %v2620 = vpop.f32.mrf.mxu0
    %v2621 = vpop.f32.mrf.mxu0
    %2622 = vdwg.mxu0
    %v2623 = vadd.f32 %v2618, 0.0
    %v2624 = vmul.f32 %v2623, 0.1
    %v2625 = vadd.f32 %v2624, 0.0
    %v2626 = vmul.f32 %v2618, 0.8
    %2627 = vst [vmem:[%s6] sm:$0xff] %v2625
    %v2628 = vadd.f32 %v2079, 0.0
    %v2629 = vadd.f32 %v2080, 0.0
    %v2630 = vadd.f32 %v2081, 0.0
    %v2631 = vadd.f32 %v2082, 0.0
    %v2632 = vmul.f32 %v2628, 0.1
    %v2633 = vmul.f32 %v2629, 0.1
    %v2634 = vmul.f32 %v2630, 0.1
    %v2635 = vmul.f32 %v2631, 0.1
    %v2636 = vadd.f32 %v2632, 0.0
    %v2637 = vadd.f32 %v2633, 0.0
    %v2638 = vadd.f32 %v2634, 0.0
    %v2639 = vadd.f32 %v2635, 0.0
    %v2640 = vmul.f32 %v2079, 0.8
    %v2641 = vmul.f32 %v2080, 0.8
    %v2642 = vmul.f32 %v2081, 0.8
    %v2643 = vmul.f32 %v2082, 0.8
    %vm2644 = vcmp.gt.f32.partialorder %v2636, 1.0
    %vm2645 = vcmp.gt.f32.partialorder %v2637, 1.0
    %vm2646 = vcmp.gt.f32.partialorder %v2638, 1.0
    %vm2647 = vcmp.gt.f32.partialorder %v2639, 1.0
    %v2648 = vsel %vm2644, 1, 0
    %v2649 = vsel %vm2645, 1, 0
    %v2650 = vsel %vm2646, 1, 0
    %v2651 = vsel %vm2647, 1, 0
    %v2652 = vcvt.s32.f32 %v2648
    %v2653 = vcvt.s32.f32 %v2649
    %v2654 = vcvt.s32.f32 %v2650
    %v2655 = vcvt.s32.f32 %v2651
    %v2656 = vpack.c.bf16 %v2652, %v2652
    %v2657 = vpack.c.bf16 %v2653, %v2653
    %v2658 = vpack.c.bf16 %v2654, %v2654
    %v2659 = vpack.c.bf16 %v2655, %v2655
    %v2660 = vsel %vm2644, 0.0, %v2636
    %v2661 = vsel %vm2645, 0.0, %v2637
    %v2662 = vsel %vm2646, 0.0, %v2638
    %v2663 = vsel %vm2647, 0.0, %v2639
    %v2664 = vadd.f32 %v2640, %v1905
    %v2665 = vadd.f32 %v2641, %v1907
    %v2666 = vadd.f32 %v2642, %v2069
    %v2667 = vadd.f32 %v2643, %v2071
    %2668 = vmatprep.subr.bf16.mxu0 %v2290
    %2669 = vmatpush1.bf16.msra.mxu0 %v2289
    %2670 = vmatprep.subr.bf16.mxu0 %v2288
    %2671 = vmatpush1.bf16.msra.mxu0 %v2287
    %2672 = vmatprep.subr.bf16.mxu0 %v2286
    %2673 = vmatpush1.bf16.msra.mxu0 %v2285
    %2674 = vmatprep.subr.bf16.mxu0 %v2284
    %2675 = vmatpush1.bf16.msra.mxu0 %v2283
    %2676 = vmatprep.subr.bf16.mxu0 %v2282
    %2677 = vmatpush1.bf16.msra.mxu0 %v2281
    %2678 = vmatprep.subr.bf16.mxu0 %v2280
    %2679 = vmatpush1.bf16.msra.mxu0 %v2279
    %2680 = vmatprep.subr.bf16.mxu0 %v2278
    %2681 = vmatpush1.bf16.msra.mxu0 %v2277
    %2682 = vmatprep.subr.bf16.mxu0 %v2276
    %2683 = vmatpush1.bf16.msra.mxu0 %v2275
    %2684 = vmatprep.subr.bf16.mxu0 %v2306
    %2685 = vmatpush2.bf16.msra.mxu0 %v2305
    %2686 = vmatprep.subr.bf16.mxu0 %v2304
    %2687 = vmatpush2.bf16.msra.mxu0 %v2303
    %2688 = vmatprep.subr.bf16.mxu0 %v2302
    %2689 = vmatpush2.bf16.msra.mxu0 %v2301
    %2690 = vmatprep.subr.bf16.mxu0 %v2300
    %2691 = vmatpush2.bf16.msra.mxu0 %v2299
    %2692 = vmatprep.subr.bf16.mxu0 %v2298
    %2693 = vmatpush2.bf16.msra.mxu0 %v2297
    %2694 = vmatprep.subr.bf16.mxu0 %v2296
    %2695 = vmatpush2.bf16.msra.mxu0 %v2295
    %2696 = vmatprep.subr.bf16.mxu0 %v2294
    %2697 = vmatpush2.bf16.msra.mxu0 %v2293
    %2698 = vmatprep.subr.bf16.mxu0 %v2292
    %2699 = vmatpush2.bf16.msra.mxu0 %v2291
    %2700 = vmatprep.mubr.bf16.mxu0 %v2657
    %2701 = vmatmul.mubr.bf16.gmra.mxu0 %v2656
    %v2702 = vpop.f32.mrf.mxu0
    %v2703 = vadd.f32 %v460, %v2702
    %v2704 = vpop.f32.mrf.mxu0
    %v2705 = vadd.f32 %v464, %v2704
    %v2706 = vpop.f32.mrf.mxu0
    %v2707 = vpop.f32.mrf.mxu0
    %2708 = vdwg.mxu0
    %2709 = vmatprep.subr.bf16.mxu0 %v2322
    %2710 = vmatpush1.bf16.msra.mxu0 %v2321
    %2711 = vmatprep.subr.bf16.mxu0 %v2320
    %2712 = vmatpush1.bf16.msra.mxu0 %v2319
    %2713 = vmatprep.subr.bf16.mxu0 %v2318
    %2714 = vmatpush1.bf16.msra.mxu0 %v2317
    %2715 = vmatprep.subr.bf16.mxu0 %v2316
    %2716 = vmatpush1.bf16.msra.mxu0 %v2315
    %2717 = vmatprep.subr.bf16.mxu0 %v2314
    %2718 = vmatpush1.bf16.msra.mxu0 %v2313
    %2719 = vmatprep.subr.bf16.mxu0 %v2312
    %2720 = vmatpush1.bf16.msra.mxu0 %v2311
    %2721 = vmatprep.subr.bf16.mxu0 %v2310
    %2722 = vmatpush1.bf16.msra.mxu0 %v2309
    %2723 = vmatprep.subr.bf16.mxu0 %v2308
    %2724 = vmatpush1.bf16.msra.mxu0 %v2307
    %2725 = vmatprep.subr.bf16.mxu0 %v2338
    %2726 = vmatpush2.bf16.msra.mxu0 %v2337
    %2727 = vmatprep.subr.bf16.mxu0 %v2336
    %2728 = vmatpush2.bf16.msra.mxu0 %v2335
    %2729 = vmatprep.subr.bf16.mxu0 %v2334
    %2730 = vmatpush2.bf16.msra.mxu0 %v2333
    %2731 = vmatprep.subr.bf16.mxu0 %v2332
    %2732 = vmatpush2.bf16.msra.mxu0 %v2331
    %2733 = vmatprep.subr.bf16.mxu0 %v2330
    %2734 = vmatpush2.bf16.msra.mxu0 %v2329
    %2735 = vmatprep.subr.bf16.mxu0 %v2328
    %2736 = vmatpush2.bf16.msra.mxu0 %v2327
    %2737 = vmatprep.subr.bf16.mxu0 %v2326
    %2738 = vmatpush2.bf16.msra.mxu0 %v2325
    %2739 = vmatprep.subr.bf16.mxu0 %v2324
    %2740 = vmatpush2.bf16.msra.mxu0 %v2323
    %2741 = vmatprep.mubr.bf16.mxu0 %v2659
    %2742 = vmatmul.mubr.bf16.gmra.mxu0 %v2658
    %v2743 = vpop.f32.mrf.mxu0
    %v2744 = vadd.f32 %v2703, %v2743
    %v2745 = vpop.f32.mrf.mxu0
    %v2746 = vadd.f32 %v2705, %v2745
    %v2747 = vpop.f32.mrf.mxu0
    %v2748 = vpop.f32.mrf.mxu0
    %2749 = vdwg.mxu0
    %v2750 = vadd.f32 %v2485, 0.0
    %v2751 = vadd.f32 %v2486, 0.0
    %v2752 = vmul.f32 %v2750, 0.1
    %v2753 = vmul.f32 %v2751, 0.1
    %v2754 = vadd.f32 %v2752, 0.0
    %v2755 = vadd.f32 %v2753, 0.0
    %v2756 = vmul.f32 %v2485, 0.8
    %v2757 = vmul.f32 %v2486, 0.8
    %vm2758 = vcmp.gt.f32.partialorder %v2754, 1.0
    %vm2759 = vcmp.gt.f32.partialorder %v2755, 1.0
    %v2760 = vsel %vm2758, 1, 0
    %v2761 = vsel %vm2759, 1, 0
    %v2762 = vcvt.s32.f32 %v2760
    %v2763 = vcvt.s32.f32 %v2761
    %v2764 = vpack.c.bf16 %v2762, %v2762
    %v2765 = vpack.c.bf16 %v2763, %v2763
    %v2766 = vsel %vm2758, 0.0, %v2754
    %v2767 = vsel %vm2759, 0.0, %v2755
    %v2768 = vadd.f32 %v2756, %v2744
    %v2769 = vadd.f32 %v2757, %v2746
    %2770 = vmatprep.subr.bf16.mxu0 0
    %2771 = vmatpush1.bf16.msra.mxu0 %v2558
    %2772 = vmatprep.subr.bf16.mxu0 0
    %2773 = vmatpush1.bf16.msra.mxu0 %v2557
    %2774 = vmatprep.subr.bf16.mxu0 0
    %2775 = vmatpush1.bf16.msra.mxu0 %v2556
    %2776 = vmatprep.subr.bf16.mxu0 0
    %2777 = vmatpush1.bf16.msra.mxu0 %v2555
    %2778 = vmatprep.subr.bf16.mxu0 0
    %2779 = vmatpush1.bf16.msra.mxu0 %v2554
    %2780 = vmatprep.subr.bf16.mxu0 0
    %2781 = vmatpush1.bf16.msra.mxu0 %v2553
    %2782 = vmatprep.subr.bf16.mxu0 0
    %2783 = vmatpush1.bf16.msra.mxu0 %v2552
    %2784 = vmatprep.subr.bf16.mxu0 0
    %2785 = vmatpush1.bf16.msra.mxu0 %v2551
    %2786 = vmatprep.subr.bf16.mxu0 0
    %2787 = vmatpush2.bf16.msra.mxu0 %v2566
    %2788 = vmatprep.subr.bf16.mxu0 0
    %2789 = vmatpush2.bf16.msra.mxu0 %v2565
    %2790 = vmatprep.subr.bf16.mxu0 0
    %2791 = vmatpush2.bf16.msra.mxu0 %v2564
    %2792 = vmatprep.subr.bf16.mxu0 0
    %2793 = vmatpush2.bf16.msra.mxu0 %v2563
    %2794 = vmatprep.subr.bf16.mxu0 0
    %2795 = vmatpush2.bf16.msra.mxu0 %v2562
    %2796 = vmatprep.subr.bf16.mxu0 0
    %2797 = vmatpush2.bf16.msra.mxu0 %v2561
    %2798 = vmatprep.subr.bf16.mxu0 0
    %2799 = vmatpush2.bf16.msra.mxu0 %v2560
    %2800 = vmatprep.subr.bf16.mxu0 0
    %2801 = vmatpush2.bf16.msra.mxu0 %v2559
    %2802 = vmatprep.mubr.bf16.mxu0 %v2765
    %2803 = vmatmul.mubr.bf16.gmra.mxu0 %v2764
    %v2804 = vpop.f32.mrf.mxu0
    %v2805 = vadd.f32 0.0, %v2804
    %v2806 = vpop.f32.mrf.mxu0
    %v2807 = vpop.f32.mrf.mxu0
    %v2808 = vpop.f32.mrf.mxu0
    %2809 = vdwg.mxu0
    %v2810 = vadd.f32 %v2626, %v2805
    %v2811 = vsub.f32 0.0, %v2625
    %v2812 = vadd.f32 %v2811, %v2810
    %v2813 = vmul.f32 %v2812, 0.1
    %v2814 = vadd.f32 %v2625, %v2813
    %v2815 = vmul.f32 %v2810, 0.8
    %s2816 = scalar_lea.vmem %s6, 8
    %2817 = vst [vmem:[%s2816] sm:$0xff] %v2814
    %v2818 = vsub.f32 0.0, %v2660
    %v2819 = vsub.f32 0.0, %v2661
    %v2820 = vsub.f32 0.0, %v2662
    %v2821 = vsub.f32 0.0, %v2663
    %v2822 = vadd.f32 %v2818, %v2664
    %v2823 = vadd.f32 %v2819, %v2665
    %v2824 = vadd.f32 %v2820, %v2666
    %v2825 = vadd.f32 %v2821, %v2667
    %v2826 = vmul.f32 %v2822, 0.1
    %v2827 = vmul.f32 %v2823, 0.1
    %v2828 = vmul.f32 %v2824, 0.1
    %v2829 = vmul.f32 %v2825, 0.1
    %v2830 = vadd.f32 %v2660, %v2826
    %v2831 = vadd.f32 %v2661, %v2827
    %v2832 = vadd.f32 %v2662, %v2828
    %v2833 = vadd.f32 %v2663, %v2829
    %v2834 = vmul.f32 %v2664, 0.8
    %v2835 = vmul.f32 %v2665, 0.8
    %v2836 = vmul.f32 %v2666, 0.8
    %v2837 = vmul.f32 %v2667, 0.8
    %vm2838 = vcmp.gt.f32.partialorder %v2830, 1.0
    %vm2839 = vcmp.gt.f32.partialorder %v2831, 1.0
    %vm2840 = vcmp.gt.f32.partialorder %v2832, 1.0
    %vm2841 = vcmp.gt.f32.partialorder %v2833, 1.0
    %v2842 = vsel %vm2838, 1, 0
    %v2843 = vsel %vm2839, 1, 0
    %v2844 = vsel %vm2840, 1, 0
    %v2845 = vsel %vm2841, 1, 0
    %v2846 = vcvt.s32.f32 %v2842
    %v2847 = vcvt.s32.f32 %v2843
    %v2848 = vcvt.s32.f32 %v2844
    %v2849 = vcvt.s32.f32 %v2845
    %v2850 = vpack.c.bf16 %v2846, %v2846
    %v2851 = vpack.c.bf16 %v2847, %v2847
    %v2852 = vpack.c.bf16 %v2848, %v2848
    %v2853 = vpack.c.bf16 %v2849, %v2849
    %v2854 = vsel %vm2838, 0.0, %v2830
    %v2855 = vsel %vm2839, 0.0, %v2831
    %v2856 = vsel %vm2840, 0.0, %v2832
    %v2857 = vsel %vm2841, 0.0, %v2833
    %v2858 = vadd.f32 %v2834, %v1905
    %v2859 = vadd.f32 %v2835, %v1907
    %v2860 = vadd.f32 %v2836, %v2069
    %v2861 = vadd.f32 %v2837, %v2071
    %2862 = vmatprep.subr.bf16.mxu0 %v2290
    %2863 = vmatpush1.bf16.msra.mxu0 %v2289
    %2864 = vmatprep.subr.bf16.mxu0 %v2288
    %2865 = vmatpush1.bf16.msra.mxu0 %v2287
    %2866 = vmatprep.subr.bf16.mxu0 %v2286
    %2867 = vmatpush1.bf16.msra.mxu0 %v2285
    %2868 = vmatprep.subr.bf16.mxu0 %v2284
    %2869 = vmatpush1.bf16.msra.mxu0 %v2283
    %2870 = vmatprep.subr.bf16.mxu0 %v2282
    %2871 = vmatpush1.bf16.msra.mxu0 %v2281
    %2872 = vmatprep.subr.bf16.mxu0 %v2280
    %2873 = vmatpush1.bf16.msra.mxu0 %v2279
    %2874 = vmatprep.subr.bf16.mxu0 %v2278
    %2875 = vmatpush1.bf16.msra.mxu0 %v2277
    %2876 = vmatprep.subr.bf16.mxu0 %v2276
    %2877 = vmatpush1.bf16.msra.mxu0 %v2275
    %2878 = vmatprep.subr.bf16.mxu0 %v2306
    %2879 = vmatpush2.bf16.msra.mxu0 %v2305
    %2880 = vmatprep.subr.bf16.mxu0 %v2304
    %2881 = vmatpush2.bf16.msra.mxu0 %v2303
    %2882 = vmatprep.subr.bf16.mxu0 %v2302
    %2883 = vmatpush2.bf16.msra.mxu0 %v2301
    %2884 = vmatprep.subr.bf16.mxu0 %v2300
    %2885 = vmatpush2.bf16.msra.mxu0 %v2299
    %2886 = vmatprep.subr.bf16.mxu0 %v2298
    %2887 = vmatpush2.bf16.msra.mxu0 %v2297
    %2888 = vmatprep.subr.bf16.mxu0 %v2296
    %2889 = vmatpush2.bf16.msra.mxu0 %v2295
    %2890 = vmatprep.subr.bf16.mxu0 %v2294
    %2891 = vmatpush2.bf16.msra.mxu0 %v2293
    %2892 = vmatprep.subr.bf16.mxu0 %v2292
    %2893 = vmatpush2.bf16.msra.mxu0 %v2291
    %2894 = vmatprep.mubr.bf16.mxu0 %v2851
    %2895 = vmatmul.mubr.bf16.gmra.mxu0 %v2850
    %v2896 = vpop.f32.mrf.mxu0
    %v2897 = vadd.f32 %v460, %v2896
    %v2898 = vpop.f32.mrf.mxu0
    %v2899 = vadd.f32 %v464, %v2898
    %v2900 = vpop.f32.mrf.mxu0
    %v2901 = vpop.f32.mrf.mxu0
    %2902 = vdwg.mxu0
    %2903 = vmatprep.subr.bf16.mxu0 %v2322
    %2904 = vmatpush1.bf16.msra.mxu0 %v2321
    %2905 = vmatprep.subr.bf16.mxu0 %v2320
    %2906 = vmatpush1.bf16.msra.mxu0 %v2319
    %2907 = vmatprep.subr.bf16.mxu0 %v2318
    %2908 = vmatpush1.bf16.msra.mxu0 %v2317
    %2909 = vmatprep.subr.bf16.mxu0 %v2316
    %2910 = vmatpush1.bf16.msra.mxu0 %v2315
    %2911 = vmatprep.subr.bf16.mxu0 %v2314
    %2912 = vmatpush1.bf16.msra.mxu0 %v2313
    %2913 = vmatprep.subr.bf16.mxu0 %v2312
    %2914 = vmatpush1.bf16.msra.mxu0 %v2311
    %2915 = vmatprep.subr.bf16.mxu0 %v2310
    %2916 = vmatpush1.bf16.msra.mxu0 %v2309
    %2917 = vmatprep.subr.bf16.mxu0 %v2308
    %2918 = vmatpush1.bf16.msra.mxu0 %v2307
    %2919 = vmatprep.subr.bf16.mxu0 %v2338
    %2920 = vmatpush2.bf16.msra.mxu0 %v2337
    %2921 = vmatprep.subr.bf16.mxu0 %v2336
    %2922 = vmatpush2.bf16.msra.mxu0 %v2335
    %2923 = vmatprep.subr.bf16.mxu0 %v2334
    %2924 = vmatpush2.bf16.msra.mxu0 %v2333
    %2925 = vmatprep.subr.bf16.mxu0 %v2332
    %2926 = vmatpush2.bf16.msra.mxu0 %v2331
    %2927 = vmatprep.subr.bf16.mxu0 %v2330
    %2928 = vmatpush2.bf16.msra.mxu0 %v2329
    %2929 = vmatprep.subr.bf16.mxu0 %v2328
    %2930 = vmatpush2.bf16.msra.mxu0 %v2327
    %2931 = vmatprep.subr.bf16.mxu0 %v2326
    %2932 = vmatpush2.bf16.msra.mxu0 %v2325
    %2933 = vmatprep.subr.bf16.mxu0 %v2324
    %2934 = vmatpush2.bf16.msra.mxu0 %v2323
    %2935 = vmatprep.mubr.bf16.mxu0 %v2853
    %2936 = vmatmul.mubr.bf16.gmra.mxu0 %v2852
    %v2937 = vpop.f32.mrf.mxu0
    %v2938 = vadd.f32 %v2897, %v2937
    %v2939 = vpop.f32.mrf.mxu0
    %v2940 = vadd.f32 %v2899, %v2939
    %v2941 = vpop.f32.mrf.mxu0
    %v2942 = vpop.f32.mrf.mxu0
    %2943 = vdwg.mxu0
    %v2944 = vsub.f32 0.0, %v2766
    %v2945 = vsub.f32 0.0, %v2767
    %v2946 = vadd.f32 %v2944, %v2768
    %v2947 = vadd.f32 %v2945, %v2769
    %v2948 = vmul.f32 %v2946, 0.1
    %v2949 = vmul.f32 %v2947, 0.1
    %v2950 = vadd.f32 %v2766, %v2948
    %v2951 = vadd.f32 %v2767, %v2949
    %v2952 = vmul.f32 %v2768, 0.8
    %v2953 = vmul.f32 %v2769, 0.8
    %vm2954 = vcmp.gt.f32.partialorder %v2950, 1.0
    %vm2955 = vcmp.gt.f32.partialorder %v2951, 1.0
    %v2956 = vsel %vm2954, 1, 0
    %v2957 = vsel %vm2955, 1, 0
    %v2958 = vcvt.s32.f32 %v2956
    %v2959 = vcvt.s32.f32 %v2957
    %v2960 = vpack.c.bf16 %v2958, %v2958
    %v2961 = vpack.c.bf16 %v2959, %v2959
    %v2962 = vsel %vm2954, 0.0, %v2950
    %v2963 = vsel %vm2955, 0.0, %v2951
    %v2964 = vadd.f32 %v2952, %v2938
    %v2965 = vadd.f32 %v2953, %v2940
    %2966 = vmatprep.subr.bf16.mxu0 0
    %2967 = vmatpush1.bf16.msra.mxu0 %v2558
    %2968 = vmatprep.subr.bf16.mxu0 0
    %2969 = vmatpush1.bf16.msra.mxu0 %v2557
    %2970 = vmatprep.subr.bf16.mxu0 0
    %2971 = vmatpush1.bf16.msra.mxu0 %v2556
    %2972 = vmatprep.subr.bf16.mxu0 0
    %2973 = vmatpush1.bf16.msra.mxu0 %v2555
    %2974 = vmatprep.subr.bf16.mxu0 0
    %2975 = vmatpush1.bf16.msra.mxu0 %v2554
    %2976 = vmatprep.subr.bf16.mxu0 0
    %2977 = vmatpush1.bf16.msra.mxu0 %v2553
    %2978 = vmatprep.subr.bf16.mxu0 0
    %2979 = vmatpush1.bf16.msra.mxu0 %v2552
    %2980 = vmatprep.subr.bf16.mxu0 0
    %2981 = vmatpush1.bf16.msra.mxu0 %v2551
    %2982 = vmatprep.subr.bf16.mxu0 0
    %2983 = vmatpush2.bf16.msra.mxu0 %v2566
    %2984 = vmatprep.subr.bf16.mxu0 0
    %2985 = vmatpush2.bf16.msra.mxu0 %v2565
    %2986 = vmatprep.subr.bf16.mxu0 0
    %2987 = vmatpush2.bf16.msra.mxu0 %v2564
    %2988 = vmatprep.subr.bf16.mxu0 0
    %2989 = vmatpush2.bf16.msra.mxu0 %v2563
    %2990 = vmatprep.subr.bf16.mxu0 0
    %2991 = vmatpush2.bf16.msra.mxu0 %v2562
    %2992 = vmatprep.subr.bf16.mxu0 0
    %2993 = vmatpush2.bf16.msra.mxu0 %v2561
    %2994 = vmatprep.subr.bf16.mxu0 0
    %2995 = vmatpush2.bf16.msra.mxu0 %v2560
    %2996 = vmatprep.subr.bf16.mxu0 0
    %2997 = vmatpush2.bf16.msra.mxu0 %v2559
    %2998 = vmatprep.mubr.bf16.mxu0 %v2961
    %2999 = vmatmul.mubr.bf16.gmra.mxu0 %v2960
    %v3000 = vpop.f32.mrf.mxu0
    %v3001 = vadd.f32 0.0, %v3000
    %v3002 = vpop.f32.mrf.mxu0
    %v3003 = vpop.f32.mrf.mxu0
    %v3004 = vpop.f32.mrf.mxu0
    %3005 = vdwg.mxu0
    %v3006 = vadd.f32 %v2815, %v3001
    %v3007 = vsub.f32 0.0, %v2814
    %v3008 = vadd.f32 %v3007, %v3006
    %v3009 = vmul.f32 %v3008, 0.1
    %v3010 = vadd.f32 %v2814, %v3009
    %v3011 = vmul.f32 %v3006, 0.8
    %s3012 = scalar_lea.vmem %s6, 16
    %3013 = vst [vmem:[%s3012] sm:$0xff] %v3010
    %v3014 = vsub.f32 0.0, %v2854
    %v3015 = vsub.f32 0.0, %v2855
    %v3016 = vsub.f32 0.0, %v2856
    %v3017 = vsub.f32 0.0, %v2857
    %v3018 = vadd.f32 %v3014, %v2858
    %v3019 = vadd.f32 %v3015, %v2859
    %v3020 = vadd.f32 %v3016, %v2860
    %v3021 = vadd.f32 %v3017, %v2861
    %v3022 = vmul.f32 %v3018, 0.1
    %v3023 = vmul.f32 %v3019, 0.1
    %v3024 = vmul.f32 %v3020, 0.1
    %v3025 = vmul.f32 %v3021, 0.1
    %v3026 = vadd.f32 %v2854, %v3022
    %v3027 = vadd.f32 %v2855, %v3023
    %v3028 = vadd.f32 %v2856, %v3024
    %v3029 = vadd.f32 %v2857, %v3025
    %v3030 = vmul.f32 %v2858, 0.8
    %v3031 = vmul.f32 %v2859, 0.8
    %v3032 = vmul.f32 %v2860, 0.8
    %v3033 = vmul.f32 %v2861, 0.8
    %vm3034 = vcmp.gt.f32.partialorder %v3026, 1.0
    %vm3035 = vcmp.gt.f32.partialorder %v3027, 1.0
    %vm3036 = vcmp.gt.f32.partialorder %v3028, 1.0
    %vm3037 = vcmp.gt.f32.partialorder %v3029, 1.0
    %v3038 = vsel %vm3034, 1, 0
    %v3039 = vsel %vm3035, 1, 0
    %v3040 = vsel %vm3036, 1, 0
    %v3041 = vsel %vm3037, 1, 0
    %v3042 = vcvt.s32.f32 %v3038
    %v3043 = vcvt.s32.f32 %v3039
    %v3044 = vcvt.s32.f32 %v3040
    %v3045 = vcvt.s32.f32 %v3041
    %v3046 = vpack.c.bf16 %v3042, %v3042
    %v3047 = vpack.c.bf16 %v3043, %v3043
    %v3048 = vpack.c.bf16 %v3044, %v3044
    %v3049 = vpack.c.bf16 %v3045, %v3045
    %v3050 = vsel %vm3034, 0.0, %v3026
    %v3051 = vsel %vm3035, 0.0, %v3027
    %v3052 = vsel %vm3036, 0.0, %v3028
    %v3053 = vsel %vm3037, 0.0, %v3029
    %v3054 = vadd.f32 %v3030, %v1905
    %v3055 = vadd.f32 %v3031, %v1907
    %v3056 = vadd.f32 %v3032, %v2069
    %v3057 = vadd.f32 %v3033, %v2071
    %3058 = vmatprep.subr.bf16.mxu0 %v2290
    %3059 = vmatpush1.bf16.msra.mxu0 %v2289
    %3060 = vmatprep.subr.bf16.mxu0 %v2288
    %3061 = vmatpush1.bf16.msra.mxu0 %v2287
    %3062 = vmatprep.subr.bf16.mxu0 %v2286
    %3063 = vmatpush1.bf16.msra.mxu0 %v2285
    %3064 = vmatprep.subr.bf16.mxu0 %v2284
    %3065 = vmatpush1.bf16.msra.mxu0 %v2283
    %3066 = vmatprep.subr.bf16.mxu0 %v2282
    %3067 = vmatpush1.bf16.msra.mxu0 %v2281
    %3068 = vmatprep.subr.bf16.mxu0 %v2280
    %3069 = vmatpush1.bf16.msra.mxu0 %v2279
    %3070 = vmatprep.subr.bf16.mxu0 %v2278
    %3071 = vmatpush1.bf16.msra.mxu0 %v2277
    %3072 = vmatprep.subr.bf16.mxu0 %v2276
    %3073 = vmatpush1.bf16.msra.mxu0 %v2275
    %3074 = vmatprep.subr.bf16.mxu0 %v2306
    %3075 = vmatpush2.bf16.msra.mxu0 %v2305
    %3076 = vmatprep.subr.bf16.mxu0 %v2304
    %3077 = vmatpush2.bf16.msra.mxu0 %v2303
    %3078 = vmatprep.subr.bf16.mxu0 %v2302
    %3079 = vmatpush2.bf16.msra.mxu0 %v2301
    %3080 = vmatprep.subr.bf16.mxu0 %v2300
    %3081 = vmatpush2.bf16.msra.mxu0 %v2299
    %3082 = vmatprep.subr.bf16.mxu0 %v2298
    %3083 = vmatpush2.bf16.msra.mxu0 %v2297
    %3084 = vmatprep.subr.bf16.mxu0 %v2296
    %3085 = vmatpush2.bf16.msra.mxu0 %v2295
    %3086 = vmatprep.subr.bf16.mxu0 %v2294
    %3087 = vmatpush2.bf16.msra.mxu0 %v2293
    %3088 = vmatprep.subr.bf16.mxu0 %v2292
    %3089 = vmatpush2.bf16.msra.mxu0 %v2291
    %3090 = vmatprep.mubr.bf16.mxu0 %v3047
    %3091 = vmatmul.mubr.bf16.gmra.mxu0 %v3046
    %v3092 = vpop.f32.mrf.mxu0
    %v3093 = vadd.f32 %v460, %v3092
    %v3094 = vpop.f32.mrf.mxu0
    %v3095 = vadd.f32 %v464, %v3094
    %v3096 = vpop.f32.mrf.mxu0
    %v3097 = vpop.f32.mrf.mxu0
    %3098 = vdwg.mxu0
    %3099 = vmatprep.subr.bf16.mxu0 %v2322
    %3100 = vmatpush1.bf16.msra.mxu0 %v2321
    %3101 = vmatprep.subr.bf16.mxu0 %v2320
    %3102 = vmatpush1.bf16.msra.mxu0 %v2319
    %3103 = vmatprep.subr.bf16.mxu0 %v2318
    %3104 = vmatpush1.bf16.msra.mxu0 %v2317
    %3105 = vmatprep.subr.bf16.mxu0 %v2316
    %3106 = vmatpush1.bf16.msra.mxu0 %v2315
    %3107 = vmatprep.subr.bf16.mxu0 %v2314
    %3108 = vmatpush1.bf16.msra.mxu0 %v2313
    %3109 = vmatprep.subr.bf16.mxu0 %v2312
    %3110 = vmatpush1.bf16.msra.mxu0 %v2311
    %3111 = vmatprep.subr.bf16.mxu0 %v2310
    %3112 = vmatpush1.bf16.msra.mxu0 %v2309
    %3113 = vmatprep.subr.bf16.mxu0 %v2308
    %3114 = vmatpush1.bf16.msra.mxu0 %v2307
    %3115 = vmatprep.subr.bf16.mxu0 %v2338
    %3116 = vmatpush2.bf16.msra.mxu0 %v2337
    %3117 = vmatprep.subr.bf16.mxu0 %v2336
    %3118 = vmatpush2.bf16.msra.mxu0 %v2335
    %3119 = vmatprep.subr.bf16.mxu0 %v2334
    %3120 = vmatpush2.bf16.msra.mxu0 %v2333
    %3121 = vmatprep.subr.bf16.mxu0 %v2332
    %3122 = vmatpush2.bf16.msra.mxu0 %v2331
    %3123 = vmatprep.subr.bf16.mxu0 %v2330
    %3124 = vmatpush2.bf16.msra.mxu0 %v2329
    %3125 = vmatprep.subr.bf16.mxu0 %v2328
    %3126 = vmatpush2.bf16.msra.mxu0 %v2327
    %3127 = vmatprep.subr.bf16.mxu0 %v2326
    %3128 = vmatpush2.bf16.msra.mxu0 %v2325
    %3129 = vmatprep.subr.bf16.mxu0 %v2324
    %3130 = vmatpush2.bf16.msra.mxu0 %v2323
    %3131 = vmatprep.mubr.bf16.mxu0 %v3049
    %3132 = vmatmul.mubr.bf16.gmra.mxu0 %v3048
    %v3133 = vpop.f32.mrf.mxu0
    %v3134 = vadd.f32 %v3093, %v3133
    %v3135 = vpop.f32.mrf.mxu0
    %v3136 = vadd.f32 %v3095, %v3135
    %v3137 = vpop.f32.mrf.mxu0
    %v3138 = vpop.f32.mrf.mxu0
    %3139 = vdwg.mxu0
    %v3140 = vsub.f32 0.0, %v2962
    %v3141 = vsub.f32 0.0, %v2963
    %v3142 = vadd.f32 %v3140, %v2964
    %v3143 = vadd.f32 %v3141, %v2965
    %v3144 = vmul.f32 %v3142, 0.1
    %v3145 = vmul.f32 %v3143, 0.1
    %v3146 = vadd.f32 %v2962, %v3144
    %v3147 = vadd.f32 %v2963, %v3145
    %v3148 = vmul.f32 %v2964, 0.8
    %v3149 = vmul.f32 %v2965, 0.8
    %vm3150 = vcmp.gt.f32.partialorder %v3146, 1.0
    %vm3151 = vcmp.gt.f32.partialorder %v3147, 1.0
    %v3152 = vsel %vm3150, 1, 0
    %v3153 = vsel %vm3151, 1, 0
    %v3154 = vcvt.s32.f32 %v3152
    %v3155 = vcvt.s32.f32 %v3153
    %v3156 = vpack.c.bf16 %v3154, %v3154
    %v3157 = vpack.c.bf16 %v3155, %v3155
    %v3158 = vsel %vm3150, 0.0, %v3146
    %v3159 = vsel %vm3151, 0.0, %v3147
    %v3160 = vadd.f32 %v3148, %v3134
    %v3161 = vadd.f32 %v3149, %v3136
    %3162 = vmatprep.subr.bf16.mxu0 0
    %3163 = vmatpush1.bf16.msra.mxu0 %v2558
    %3164 = vmatprep.subr.bf16.mxu0 0
    %3165 = vmatpush1.bf16.msra.mxu0 %v2557
    %3166 = vmatprep.subr.bf16.mxu0 0
    %3167 = vmatpush1.bf16.msra.mxu0 %v2556
    %3168 = vmatprep.subr.bf16.mxu0 0
    %3169 = vmatpush1.bf16.msra.mxu0 %v2555
    %3170 = vmatprep.subr.bf16.mxu0 0
    %3171 = vmatpush1.bf16.msra.mxu0 %v2554
    %3172 = vmatprep.subr.bf16.mxu0 0
    %3173 = vmatpush1.bf16.msra.mxu0 %v2553
    %3174 = vmatprep.subr.bf16.mxu0 0
    %3175 = vmatpush1.bf16.msra.mxu0 %v2552
    %3176 = vmatprep.subr.bf16.mxu0 0
    %3177 = vmatpush1.bf16.msra.mxu0 %v2551
    %3178 = vmatprep.subr.bf16.mxu0 0
    %3179 = vmatpush2.bf16.msra.mxu0 %v2566
    %3180 = vmatprep.subr.bf16.mxu0 0
    %3181 = vmatpush2.bf16.msra.mxu0 %v2565
    %3182 = vmatprep.subr.bf16.mxu0 0
    %3183 = vmatpush2.bf16.msra.mxu0 %v2564
    %3184 = vmatprep.subr.bf16.mxu0 0
    %3185 = vmatpush2.bf16.msra.mxu0 %v2563
    %3186 = vmatprep.subr.bf16.mxu0 0
    %3187 = vmatpush2.bf16.msra.mxu0 %v2562
    %3188 = vmatprep.subr.bf16.mxu0 0
    %3189 = vmatpush2.bf16.msra.mxu0 %v2561
    %3190 = vmatprep.subr.bf16.mxu0 0
    %3191 = vmatpush2.bf16.msra.mxu0 %v2560
    %3192 = vmatprep.subr.bf16.mxu0 0
    %3193 = vmatpush2.bf16.msra.mxu0 %v2559
    %3194 = vmatprep.mubr.bf16.mxu0 %v3157
    %3195 = vmatmul.mubr.bf16.gmra.mxu0 %v3156
    %v3196 = vpop.f32.mrf.mxu0
    %v3197 = vadd.f32 0.0, %v3196
    %v3198 = vpop.f32.mrf.mxu0
    %v3199 = vpop.f32.mrf.mxu0
    %v3200 = vpop.f32.mrf.mxu0
    %3201 = vdwg.mxu0
    %v3202 = vadd.f32 %v3011, %v3197
    %v3203 = vsub.f32 0.0, %v3010
    %v3204 = vadd.f32 %v3203, %v3202
    %v3205 = vmul.f32 %v3204, 0.1
    %v3206 = vadd.f32 %v3010, %v3205
    %v3207 = vmul.f32 %v3202, 0.8
    %s3208 = scalar_lea.vmem %s6, 24
    %3209 = vst [vmem:[%s3208] sm:$0xff] %v3206
    %v3210 = vsub.f32 0.0, %v3050
    %v3211 = vsub.f32 0.0, %v3051
    %v3212 = vsub.f32 0.0, %v3052
    %v3213 = vsub.f32 0.0, %v3053
    %v3214 = vadd.f32 %v3210, %v3054
    %v3215 = vadd.f32 %v3211, %v3055
    %v3216 = vadd.f32 %v3212, %v3056
    %v3217 = vadd.f32 %v3213, %v3057
    %v3218 = vmul.f32 %v3214, 0.1
    %v3219 = vmul.f32 %v3215, 0.1
    %v3220 = vmul.f32 %v3216, 0.1
    %v3221 = vmul.f32 %v3217, 0.1
    %v3222 = vadd.f32 %v3050, %v3218
    %v3223 = vadd.f32 %v3051, %v3219
    %v3224 = vadd.f32 %v3052, %v3220
    %v3225 = vadd.f32 %v3053, %v3221
    %v3226 = vmul.f32 %v3054, 0.8
    %v3227 = vmul.f32 %v3055, 0.8
    %v3228 = vmul.f32 %v3056, 0.8
    %v3229 = vmul.f32 %v3057, 0.8
    %vm3230 = vcmp.gt.f32.partialorder %v3222, 1.0
    %vm3231 = vcmp.gt.f32.partialorder %v3223, 1.0
    %vm3232 = vcmp.gt.f32.partialorder %v3224, 1.0
    %vm3233 = vcmp.gt.f32.partialorder %v3225, 1.0
    %v3234 = vsel %vm3230, 1, 0
    %v3235 = vsel %vm3231, 1, 0
    %v3236 = vsel %vm3232, 1, 0
    %v3237 = vsel %vm3233, 1, 0
    %v3238 = vcvt.s32.f32 %v3234
    %v3239 = vcvt.s32.f32 %v3235
    %v3240 = vcvt.s32.f32 %v3236
    %v3241 = vcvt.s32.f32 %v3237
    %v3242 = vpack.c.bf16 %v3238, %v3238
    %v3243 = vpack.c.bf16 %v3239, %v3239
    %v3244 = vpack.c.bf16 %v3240, %v3240
    %v3245 = vpack.c.bf16 %v3241, %v3241
    %v3246 = vsel %vm3230, 0.0, %v3222
    %v3247 = vsel %vm3231, 0.0, %v3223
    %v3248 = vsel %vm3232, 0.0, %v3224
    %v3249 = vsel %vm3233, 0.0, %v3225
    %v3250 = vadd.f32 %v3226, %v1905
    %v3251 = vadd.f32 %v3227, %v1907
    %v3252 = vadd.f32 %v3228, %v2069
    %v3253 = vadd.f32 %v3229, %v2071
    %3254 = vmatprep.subr.bf16.mxu0 %v2290
    %3255 = vmatpush1.bf16.msra.mxu0 %v2289
    %3256 = vmatprep.subr.bf16.mxu0 %v2288
    %3257 = vmatpush1.bf16.msra.mxu0 %v2287
    %3258 = vmatprep.subr.bf16.mxu0 %v2286
    %3259 = vmatpush1.bf16.msra.mxu0 %v2285
    %3260 = vmatprep.subr.bf16.mxu0 %v2284
    %3261 = vmatpush1.bf16.msra.mxu0 %v2283
    %3262 = vmatprep.subr.bf16.mxu0 %v2282
    %3263 = vmatpush1.bf16.msra.mxu0 %v2281
    %3264 = vmatprep.subr.bf16.mxu0 %v2280
    %3265 = vmatpush1.bf16.msra.mxu0 %v2279
    %3266 = vmatprep.subr.bf16.mxu0 %v2278
    %3267 = vmatpush1.bf16.msra.mxu0 %v2277
    %3268 = vmatprep.subr.bf16.mxu0 %v2276
    %3269 = vmatpush1.bf16.msra.mxu0 %v2275
    %3270 = vmatprep.subr.bf16.mxu0 %v2306
    %3271 = vmatpush2.bf16.msra.mxu0 %v2305
    %3272 = vmatprep.subr.bf16.mxu0 %v2304
    %3273 = vmatpush2.bf16.msra.mxu0 %v2303
    %3274 = vmatprep.subr.bf16.mxu0 %v2302
    %3275 = vmatpush2.bf16.msra.mxu0 %v2301
    %3276 = vmatprep.subr.bf16.mxu0 %v2300
    %3277 = vmatpush2.bf16.msra.mxu0 %v2299
    %3278 = vmatprep.subr.bf16.mxu0 %v2298
    %3279 = vmatpush2.bf16.msra.mxu0 %v2297
    %3280 = vmatprep.subr.bf16.mxu0 %v2296
    %3281 = vmatpush2.bf16.msra.mxu0 %v2295
    %3282 = vmatprep.subr.bf16.mxu0 %v2294
    %3283 = vmatpush2.bf16.msra.mxu0 %v2293
    %3284 = vmatprep.subr.bf16.mxu0 %v2292
    %3285 = vmatpush2.bf16.msra.mxu0 %v2291
    %3286 = vmatprep.mubr.bf16.mxu0 %v3243
    %3287 = vmatmul.mubr.bf16.gmra.mxu0 %v3242
    %v3288 = vpop.f32.mrf.mxu0
    %v3289 = vadd.f32 %v460, %v3288
    %v3290 = vpop.f32.mrf.mxu0
    %v3291 = vadd.f32 %v464, %v3290
    %v3292 = vpop.f32.mrf.mxu0
    %v3293 = vpop.f32.mrf.mxu0
    %3294 = vdwg.mxu0
    %3295 = vmatprep.subr.bf16.mxu0 %v2322
    %3296 = vmatpush1.bf16.msra.mxu0 %v2321
    %3297 = vmatprep.subr.bf16.mxu0 %v2320
    %3298 = vmatpush1.bf16.msra.mxu0 %v2319
    %3299 = vmatprep.subr.bf16.mxu0 %v2318
    %3300 = vmatpush1.bf16.msra.mxu0 %v2317
    %3301 = vmatprep.subr.bf16.mxu0 %v2316
    %3302 = vmatpush1.bf16.msra.mxu0 %v2315
    %3303 = vmatprep.subr.bf16.mxu0 %v2314
    %3304 = vmatpush1.bf16.msra.mxu0 %v2313
    %3305 = vmatprep.subr.bf16.mxu0 %v2312
    %3306 = vmatpush1.bf16.msra.mxu0 %v2311
    %3307 = vmatprep.subr.bf16.mxu0 %v2310
    %3308 = vmatpush1.bf16.msra.mxu0 %v2309
    %3309 = vmatprep.subr.bf16.mxu0 %v2308
    %3310 = vmatpush1.bf16.msra.mxu0 %v2307
    %3311 = vmatprep.subr.bf16.mxu0 %v2338
    %3312 = vmatpush2.bf16.msra.mxu0 %v2337
    %3313 = vmatprep.subr.bf16.mxu0 %v2336
    %3314 = vmatpush2.bf16.msra.mxu0 %v2335
    %3315 = vmatprep.subr.bf16.mxu0 %v2334
    %3316 = vmatpush2.bf16.msra.mxu0 %v2333
    %3317 = vmatprep.subr.bf16.mxu0 %v2332
    %3318 = vmatpush2.bf16.msra.mxu0 %v2331
    %3319 = vmatprep.subr.bf16.mxu0 %v2330
    %3320 = vmatpush2.bf16.msra.mxu0 %v2329
    %3321 = vmatprep.subr.bf16.mxu0 %v2328
    %3322 = vmatpush2.bf16.msra.mxu0 %v2327
    %3323 = vmatprep.subr.bf16.mxu0 %v2326
    %3324 = vmatpush2.bf16.msra.mxu0 %v2325
    %3325 = vmatprep.subr.bf16.mxu0 %v2324
    %3326 = vmatpush2.bf16.msra.mxu0 %v2323
    %3327 = vmatprep.mubr.bf16.mxu0 %v3245
    %3328 = vmatmul.mubr.bf16.gmra.mxu0 %v3244
    %v3329 = vpop.f32.mrf.mxu0
    %v3330 = vadd.f32 %v3289, %v3329
    %v3331 = vpop.f32.mrf.mxu0
    %v3332 = vadd.f32 %v3291, %v3331
    %v3333 = vpop.f32.mrf.mxu0
    %v3334 = vpop.f32.mrf.mxu0
    %3335 = vdwg.mxu0
    %v3336 = vsub.f32 0.0, %v3158
    %v3337 = vsub.f32 0.0, %v3159
    %v3338 = vadd.f32 %v3336, %v3160
    %v3339 = vadd.f32 %v3337, %v3161
    %v3340 = vmul.f32 %v3338, 0.1
    %v3341 = vmul.f32 %v3339, 0.1
    %v3342 = vadd.f32 %v3158, %v3340
    %v3343 = vadd.f32 %v3159, %v3341
    %v3344 = vmul.f32 %v3160, 0.8
    %v3345 = vmul.f32 %v3161, 0.8
    %vm3346 = vcmp.gt.f32.partialorder %v3342, 1.0
    %vm3347 = vcmp.gt.f32.partialorder %v3343, 1.0
    %v3348 = vsel %vm3346, 1, 0
    %v3349 = vsel %vm3347, 1, 0
    %v3350 = vcvt.s32.f32 %v3348
    %v3351 = vcvt.s32.f32 %v3349
    %v3352 = vpack.c.bf16 %v3350, %v3350
    %v3353 = vpack.c.bf16 %v3351, %v3351
    %v3354 = vsel %vm3346, 0.0, %v3342
    %v3355 = vsel %vm3347, 0.0, %v3343
    %v3356 = vadd.f32 %v3344, %v3330
    %v3357 = vadd.f32 %v3345, %v3332
    %3358 = vmatprep.subr.bf16.mxu0 0
    %3359 = vmatpush1.bf16.msra.mxu0 %v2558
    %3360 = vmatprep.subr.bf16.mxu0 0
    %3361 = vmatpush1.bf16.msra.mxu0 %v2557
    %3362 = vmatprep.subr.bf16.mxu0 0
    %3363 = vmatpush1.bf16.msra.mxu0 %v2556
    %3364 = vmatprep.subr.bf16.mxu0 0
    %3365 = vmatpush1.bf16.msra.mxu0 %v2555
    %3366 = vmatprep.subr.bf16.mxu0 0
    %3367 = vmatpush1.bf16.msra.mxu0 %v2554
    %3368 = vmatprep.subr.bf16.mxu0 0
    %3369 = vmatpush1.bf16.msra.mxu0 %v2553
    %3370 = vmatprep.subr.bf16.mxu0 0
    %3371 = vmatpush1.bf16.msra.mxu0 %v2552
    %3372 = vmatprep.subr.bf16.mxu0 0
    %3373 = vmatpush1.bf16.msra.mxu0 %v2551
    %3374 = vmatprep.subr.bf16.mxu0 0
    %3375 = vmatpush2.bf16.msra.mxu0 %v2566
    %3376 = vmatprep.subr.bf16.mxu0 0
    %3377 = vmatpush2.bf16.msra.mxu0 %v2565
    %3378 = vmatprep.subr.bf16.mxu0 0
    %3379 = vmatpush2.bf16.msra.mxu0 %v2564
    %3380 = vmatprep.subr.bf16.mxu0 0
    %3381 = vmatpush2.bf16.msra.mxu0 %v2563
    %3382 = vmatprep.subr.bf16.mxu0 0
    %3383 = vmatpush2.bf16.msra.mxu0 %v2562
    %3384 = vmatprep.subr.bf16.mxu0 0
    %3385 = vmatpush2.bf16.msra.mxu0 %v2561
    %3386 = vmatprep.subr.bf16.mxu0 0
    %3387 = vmatpush2.bf16.msra.mxu0 %v2560
    %3388 = vmatprep.subr.bf16.mxu0 0
    %3389 = vmatpush2.bf16.msra.mxu0 %v2559
    %3390 = vmatprep.mubr.bf16.mxu0 %v3353
    %3391 = vmatmul.mubr.bf16.gmra.mxu0 %v3352
    %v3392 = vpop.f32.mrf.mxu0
    %v3393 = vadd.f32 0.0, %v3392
    %v3394 = vpop.f32.mrf.mxu0
    %v3395 = vpop.f32.mrf.mxu0
    %v3396 = vpop.f32.mrf.mxu0
    %3397 = vdwg.mxu0
    %v3398 = vadd.f32 %v3207, %v3393
    %v3399 = vsub.f32 0.0, %v3206
    %v3400 = vadd.f32 %v3399, %v3398
    %v3401 = vmul.f32 %v3400, 0.1
    %v3402 = vadd.f32 %v3206, %v3401
    %v3403 = vmul.f32 %v3398, 0.8
    %s3404 = scalar_lea.vmem %s6, 32
    %3405 = vst [vmem:[%s3404] sm:$0xff] %v3402
    %v3406 = vsub.f32 0.0, %v3246
    %v3407 = vsub.f32 0.0, %v3247
    %v3408 = vsub.f32 0.0, %v3248
    %v3409 = vsub.f32 0.0, %v3249
    %v3410 = vadd.f32 %v3406, %v3250
    %v3411 = vadd.f32 %v3407, %v3251
    %v3412 = vadd.f32 %v3408, %v3252
    %v3413 = vadd.f32 %v3409, %v3253
    %v3414 = vmul.f32 %v3410, 0.1
    %v3415 = vmul.f32 %v3411, 0.1
    %v3416 = vmul.f32 %v3412, 0.1
    %v3417 = vmul.f32 %v3413, 0.1
    %v3418 = vadd.f32 %v3246, %v3414
    %v3419 = vadd.f32 %v3247, %v3415
    %v3420 = vadd.f32 %v3248, %v3416
    %v3421 = vadd.f32 %v3249, %v3417
    %v3422 = vmul.f32 %v3250, 0.8
    %v3423 = vmul.f32 %v3251, 0.8
    %v3424 = vmul.f32 %v3252, 0.8
    %v3425 = vmul.f32 %v3253, 0.8
    %vm3426 = vcmp.gt.f32.partialorder %v3418, 1.0
    %vm3427 = vcmp.gt.f32.partialorder %v3419, 1.0
    %vm3428 = vcmp.gt.f32.partialorder %v3420, 1.0
    %vm3429 = vcmp.gt.f32.partialorder %v3421, 1.0
    %v3430 = vsel %vm3426, 1, 0
    %v3431 = vsel %vm3427, 1, 0
    %v3432 = vsel %vm3428, 1, 0
    %v3433 = vsel %vm3429, 1, 0
    %v3434 = vcvt.s32.f32 %v3430
    %v3435 = vcvt.s32.f32 %v3431
    %v3436 = vcvt.s32.f32 %v3432
    %v3437 = vcvt.s32.f32 %v3433
    %v3438 = vpack.c.bf16 %v3434, %v3434
    %v3439 = vpack.c.bf16 %v3435, %v3435
    %v3440 = vpack.c.bf16 %v3436, %v3436
    %v3441 = vpack.c.bf16 %v3437, %v3437
    %v3442 = vsel %vm3426, 0.0, %v3418
    %v3443 = vsel %vm3427, 0.0, %v3419
    %v3444 = vsel %vm3428, 0.0, %v3420
    %v3445 = vsel %vm3429, 0.0, %v3421
    %v3446 = vadd.f32 %v3422, %v1905
    %v3447 = vadd.f32 %v3423, %v1907
    %v3448 = vadd.f32 %v3424, %v2069
    %v3449 = vadd.f32 %v3425, %v2071
    %3450 = vmatprep.subr.bf16.mxu0 %v2290
    %3451 = vmatpush1.bf16.msra.mxu0 %v2289
    %3452 = vmatprep.subr.bf16.mxu0 %v2288
    %3453 = vmatpush1.bf16.msra.mxu0 %v2287
    %3454 = vmatprep.subr.bf16.mxu0 %v2286
    %3455 = vmatpush1.bf16.msra.mxu0 %v2285
    %3456 = vmatprep.subr.bf16.mxu0 %v2284
    %3457 = vmatpush1.bf16.msra.mxu0 %v2283
    %3458 = vmatprep.subr.bf16.mxu0 %v2282
    %3459 = vmatpush1.bf16.msra.mxu0 %v2281
    %3460 = vmatprep.subr.bf16.mxu0 %v2280
    %3461 = vmatpush1.bf16.msra.mxu0 %v2279
    %3462 = vmatprep.subr.bf16.mxu0 %v2278
    %3463 = vmatpush1.bf16.msra.mxu0 %v2277
    %3464 = vmatprep.subr.bf16.mxu0 %v2276
    %3465 = vmatpush1.bf16.msra.mxu0 %v2275
    %3466 = vmatprep.subr.bf16.mxu0 %v2306
    %3467 = vmatpush2.bf16.msra.mxu0 %v2305
    %3468 = vmatprep.subr.bf16.mxu0 %v2304
    %3469 = vmatpush2.bf16.msra.mxu0 %v2303
    %3470 = vmatprep.subr.bf16.mxu0 %v2302
    %3471 = vmatpush2.bf16.msra.mxu0 %v2301
    %3472 = vmatprep.subr.bf16.mxu0 %v2300
    %3473 = vmatpush2.bf16.msra.mxu0 %v2299
    %3474 = vmatprep.subr.bf16.mxu0 %v2298
    %3475 = vmatpush2.bf16.msra.mxu0 %v2297
    %3476 = vmatprep.subr.bf16.mxu0 %v2296
    %3477 = vmatpush2.bf16.msra.mxu0 %v2295
    %3478 = vmatprep.subr.bf16.mxu0 %v2294
    %3479 = vmatpush2.bf16.msra.mxu0 %v2293
    %3480 = vmatprep.subr.bf16.mxu0 %v2292
    %3481 = vmatpush2.bf16.msra.mxu0 %v2291
    %3482 = vmatprep.mubr.bf16.mxu0 %v3439
    %3483 = vmatmul.mubr.bf16.gmra.mxu0 %v3438
    %v3484 = vpop.f32.mrf.mxu0
    %v3485 = vadd.f32 %v460, %v3484
    %v3486 = vpop.f32.mrf.mxu0
    %v3487 = vadd.f32 %v464, %v3486
    %v3488 = vpop.f32.mrf.mxu0
    %v3489 = vpop.f32.mrf.mxu0
    %3490 = vdwg.mxu0
    %3491 = vmatprep.subr.bf16.mxu0 %v2322
    %3492 = vmatpush1.bf16.msra.mxu0 %v2321
    %3493 = vmatprep.subr.bf16.mxu0 %v2320
    %3494 = vmatpush1.bf16.msra.mxu0 %v2319
    %3495 = vmatprep.subr.bf16.mxu0 %v2318
    %3496 = vmatpush1.bf16.msra.mxu0 %v2317
    %3497 = vmatprep.subr.bf16.mxu0 %v2316
    %3498 = vmatpush1.bf16.msra.mxu0 %v2315
    %3499 = vmatprep.subr.bf16.mxu0 %v2314
    %3500 = vmatpush1.bf16.msra.mxu0 %v2313
    %3501 = vmatprep.subr.bf16.mxu0 %v2312
    %3502 = vmatpush1.bf16.msra.mxu0 %v2311
    %3503 = vmatprep.subr.bf16.mxu0 %v2310
    %3504 = vmatpush1.bf16.msra.mxu0 %v2309
    %3505 = vmatprep.subr.bf16.mxu0 %v2308
    %3506 = vmatpush1.bf16.msra.mxu0 %v2307
    %3507 = vmatprep.subr.bf16.mxu0 %v2338
    %3508 = vmatpush2.bf16.msra.mxu0 %v2337
    %3509 = vmatprep.subr.bf16.mxu0 %v2336
    %3510 = vmatpush2.bf16.msra.mxu0 %v2335
    %3511 = vmatprep.subr.bf16.mxu0 %v2334
    %3512 = vmatpush2.bf16.msra.mxu0 %v2333
    %3513 = vmatprep.subr.bf16.mxu0 %v2332
    %3514 = vmatpush2.bf16.msra.mxu0 %v2331
    %3515 = vmatprep.subr.bf16.mxu0 %v2330
    %3516 = vmatpush2.bf16.msra.mxu0 %v2329
    %3517 = vmatprep.subr.bf16.mxu0 %v2328
    %3518 = vmatpush2.bf16.msra.mxu0 %v2327
    %3519 = vmatprep.subr.bf16.mxu0 %v2326
    %3520 = vmatpush2.bf16.msra.mxu0 %v2325
    %3521 = vmatprep.subr.bf16.mxu0 %v2324
    %3522 = vmatpush2.bf16.msra.mxu0 %v2323
    %3523 = vmatprep.mubr.bf16.mxu0 %v3441
    %3524 = vmatmul.mubr.bf16.gmra.mxu0 %v3440
    %v3525 = vpop.f32.mrf.mxu0
    %v3526 = vadd.f32 %v3485, %v3525
    %v3527 = vpop.f32.mrf.mxu0
    %v3528 = vadd.f32 %v3487, %v3527
    %v3529 = vpop.f32.mrf.mxu0
    %v3530 = vpop.f32.mrf.mxu0
    %3531 = vdwg.mxu0
    %v3532 = vsub.f32 0.0, %v3354
    %v3533 = vsub.f32 0.0, %v3355
    %v3534 = vadd.f32 %v3532, %v3356
    %v3535 = vadd.f32 %v3533, %v3357
    %v3536 = vmul.f32 %v3534, 0.1
    %v3537 = vmul.f32 %v3535, 0.1
    %v3538 = vadd.f32 %v3354, %v3536
    %v3539 = vadd.f32 %v3355, %v3537
    %v3540 = vmul.f32 %v3356, 0.8
    %v3541 = vmul.f32 %v3357, 0.8
    %vm3542 = vcmp.gt.f32.partialorder %v3538, 1.0
    %vm3543 = vcmp.gt.f32.partialorder %v3539, 1.0
    %v3544 = vsel %vm3542, 1, 0
    %v3545 = vsel %vm3543, 1, 0
    %v3546 = vcvt.s32.f32 %v3544
    %v3547 = vcvt.s32.f32 %v3545
    %v3548 = vpack.c.bf16 %v3546, %v3546
    %v3549 = vpack.c.bf16 %v3547, %v3547
    %v3550 = vsel %vm3542, 0.0, %v3538
    %v3551 = vsel %vm3543, 0.0, %v3539
    %v3552 = vadd.f32 %v3540, %v3526
    %v3553 = vadd.f32 %v3541, %v3528
    %3554 = vmatprep.subr.bf16.mxu0 0
    %3555 = vmatpush1.bf16.msra.mxu0 %v2558
    %3556 = vmatprep.subr.bf16.mxu0 0
    %3557 = vmatpush1.bf16.msra.mxu0 %v2557
    %3558 = vmatprep.subr.bf16.mxu0 0
    %3559 = vmatpush1.bf16.msra.mxu0 %v2556
    %3560 = vmatprep.subr.bf16.mxu0 0
    %3561 = vmatpush1.bf16.msra.mxu0 %v2555
    %3562 = vmatprep.subr.bf16.mxu0 0
    %3563 = vmatpush1.bf16.msra.mxu0 %v2554
    %3564 = vmatprep.subr.bf16.mxu0 0
    %3565 = vmatpush1.bf16.msra.mxu0 %v2553
    %3566 = vmatprep.subr.bf16.mxu0 0
    %3567 = vmatpush1.bf16.msra.mxu0 %v2552
    %3568 = vmatprep.subr.bf16.mxu0 0
    %3569 = vmatpush1.bf16.msra.mxu0 %v2551
    %3570 = vmatprep.subr.bf16.mxu0 0
    %3571 = vmatpush2.bf16.msra.mxu0 %v2566
    %3572 = vmatprep.subr.bf16.mxu0 0
    %3573 = vmatpush2.bf16.msra.mxu0 %v2565
    %3574 = vmatprep.subr.bf16.mxu0 0
    %3575 = vmatpush2.bf16.msra.mxu0 %v2564
    %3576 = vmatprep.subr.bf16.mxu0 0
    %3577 = vmatpush2.bf16.msra.mxu0 %v2563
    %3578 = vmatprep.subr.bf16.mxu0 0
    %3579 = vmatpush2.bf16.msra.mxu0 %v2562
    %3580 = vmatprep.subr.bf16.mxu0 0
    %3581 = vmatpush2.bf16.msra.mxu0 %v2561
    %3582 = vmatprep.subr.bf16.mxu0 0
    %3583 = vmatpush2.bf16.msra.mxu0 %v2560
    %3584 = vmatprep.subr.bf16.mxu0 0
    %3585 = vmatpush2.bf16.msra.mxu0 %v2559
    %3586 = vmatprep.mubr.bf16.mxu0 %v3549
    %3587 = vmatmul.mubr.bf16.gmra.mxu0 %v3548
    %v3588 = vpop.f32.mrf.mxu0
    %v3589 = vadd.f32 0.0, %v3588
    %v3590 = vpop.f32.mrf.mxu0
    %v3591 = vpop.f32.mrf.mxu0
    %v3592 = vpop.f32.mrf.mxu0
    %3593 = vdwg.mxu0
    %v3594 = vadd.f32 %v3403, %v3589
    %v3595 = vsub.f32 0.0, %v3402
    %v3596 = vadd.f32 %v3595, %v3594
    %v3597 = vmul.f32 %v3596, 0.1
    %v3598 = vadd.f32 %v3402, %v3597
    %v3599 = vmul.f32 %v3594, 0.8
    %s3600 = scalar_lea.vmem %s6, 40
    %3601 = vst [vmem:[%s3600] sm:$0xff] %v3598
    %v3602 = vsub.f32 0.0, %v3442
    %v3603 = vsub.f32 0.0, %v3443
    %v3604 = vsub.f32 0.0, %v3444
    %v3605 = vsub.f32 0.0, %v3445
    %v3606 = vadd.f32 %v3602, %v3446
    %v3607 = vadd.f32 %v3603, %v3447
    %v3608 = vadd.f32 %v3604, %v3448
    %v3609 = vadd.f32 %v3605, %v3449
    %v3610 = vmul.f32 %v3606, 0.1
    %v3611 = vmul.f32 %v3607, 0.1
    %v3612 = vmul.f32 %v3608, 0.1
    %v3613 = vmul.f32 %v3609, 0.1
    %v3614 = vadd.f32 %v3442, %v3610
    %v3615 = vadd.f32 %v3443, %v3611
    %v3616 = vadd.f32 %v3444, %v3612
    %v3617 = vadd.f32 %v3445, %v3613
    %vm3618 = vcmp.gt.f32.partialorder %v3614, 1.0
    %vm3619 = vcmp.gt.f32.partialorder %v3615, 1.0
    %vm3620 = vcmp.gt.f32.partialorder %v3616, 1.0
    %vm3621 = vcmp.gt.f32.partialorder %v3617, 1.0
    %v3622 = vsel %vm3618, 1, 0
    %v3623 = vsel %vm3619, 1, 0
    %v3624 = vsel %vm3620, 1, 0
    %v3625 = vsel %vm3621, 1, 0
    %v3626 = vcvt.s32.f32 %v3622
    %v3627 = vcvt.s32.f32 %v3623
    %v3628 = vcvt.s32.f32 %v3624
    %v3629 = vcvt.s32.f32 %v3625
    %v3630 = vpack.c.bf16 %v3626, %v3626
    %v3631 = vpack.c.bf16 %v3627, %v3627
    %v3632 = vpack.c.bf16 %v3628, %v3628
    %v3633 = vpack.c.bf16 %v3629, %v3629
    %3634 = vmatprep.subr.bf16.mxu0 %v2290
    %3635 = vmatpush1.bf16.msra.mxu0 %v2289
    %3636 = vmatprep.subr.bf16.mxu0 %v2288
    %3637 = vmatpush1.bf16.msra.mxu0 %v2287
    %3638 = vmatprep.subr.bf16.mxu0 %v2286
    %3639 = vmatpush1.bf16.msra.mxu0 %v2285
    %3640 = vmatprep.subr.bf16.mxu0 %v2284
    %3641 = vmatpush1.bf16.msra.mxu0 %v2283
    %3642 = vmatprep.subr.bf16.mxu0 %v2282
    %3643 = vmatpush1.bf16.msra.mxu0 %v2281
    %3644 = vmatprep.subr.bf16.mxu0 %v2280
    %3645 = vmatpush1.bf16.msra.mxu0 %v2279
    %3646 = vmatprep.subr.bf16.mxu0 %v2278
    %3647 = vmatpush1.bf16.msra.mxu0 %v2277
    %3648 = vmatprep.subr.bf16.mxu0 %v2276
    %3649 = vmatpush1.bf16.msra.mxu0 %v2275
    %3650 = vmatprep.subr.bf16.mxu0 %v2306
    %3651 = vmatpush2.bf16.msra.mxu0 %v2305
    %3652 = vmatprep.subr.bf16.mxu0 %v2304
    %3653 = vmatpush2.bf16.msra.mxu0 %v2303
    %3654 = vmatprep.subr.bf16.mxu0 %v2302
    %3655 = vmatpush2.bf16.msra.mxu0 %v2301
    %3656 = vmatprep.subr.bf16.mxu0 %v2300
    %3657 = vmatpush2.bf16.msra.mxu0 %v2299
    %3658 = vmatprep.subr.bf16.mxu0 %v2298
    %3659 = vmatpush2.bf16.msra.mxu0 %v2297
    %3660 = vmatprep.subr.bf16.mxu0 %v2296
    %3661 = vmatpush2.bf16.msra.mxu0 %v2295
    %3662 = vmatprep.subr.bf16.mxu0 %v2294
    %3663 = vmatpush2.bf16.msra.mxu0 %v2293
    %3664 = vmatprep.subr.bf16.mxu0 %v2292
    %3665 = vmatpush2.bf16.msra.mxu0 %v2291
    %3666 = vmatprep.mubr.bf16.mxu0 %v3631
    %3667 = vmatmul.mubr.bf16.gmra.mxu0 %v3630
    %v3668 = vpop.f32.mrf.mxu0
    %v3669 = vadd.f32 %v460, %v3668
    %v3670 = vpop.f32.mrf.mxu0
    %v3671 = vadd.f32 %v464, %v3670
    %v3672 = vpop.f32.mrf.mxu0
    %v3673 = vpop.f32.mrf.mxu0
    %3674 = vdwg.mxu0
    %3675 = vmatprep.subr.bf16.mxu0 %v2322
    %3676 = vmatpush1.bf16.msra.mxu0 %v2321
    %3677 = vmatprep.subr.bf16.mxu0 %v2320
    %3678 = vmatpush1.bf16.msra.mxu0 %v2319
    %3679 = vmatprep.subr.bf16.mxu0 %v2318
    %3680 = vmatpush1.bf16.msra.mxu0 %v2317
    %3681 = vmatprep.subr.bf16.mxu0 %v2316
    %3682 = vmatpush1.bf16.msra.mxu0 %v2315
    %3683 = vmatprep.subr.bf16.mxu0 %v2314
    %3684 = vmatpush1.bf16.msra.mxu0 %v2313
    %3685 = vmatprep.subr.bf16.mxu0 %v2312
    %3686 = vmatpush1.bf16.msra.mxu0 %v2311
    %3687 = vmatprep.subr.bf16.mxu0 %v2310
    %3688 = vmatpush1.bf16.msra.mxu0 %v2309
    %3689 = vmatprep.subr.bf16.mxu0 %v2308
    %3690 = vmatpush1.bf16.msra.mxu0 %v2307
    %3691 = vmatprep.subr.bf16.mxu0 %v2338
    %3692 = vmatpush2.bf16.msra.mxu0 %v2337
    %3693 = vmatprep.subr.bf16.mxu0 %v2336
    %3694 = vmatpush2.bf16.msra.mxu0 %v2335
    %3695 = vmatprep.subr.bf16.mxu0 %v2334
    %3696 = vmatpush2.bf16.msra.mxu0 %v2333
    %3697 = vmatprep.subr.bf16.mxu0 %v2332
    %3698 = vmatpush2.bf16.msra.mxu0 %v2331
    %3699 = vmatprep.subr.bf16.mxu0 %v2330
    %3700 = vmatpush2.bf16.msra.mxu0 %v2329
    %3701 = vmatprep.subr.bf16.mxu0 %v2328
    %3702 = vmatpush2.bf16.msra.mxu0 %v2327
    %3703 = vmatprep.subr.bf16.mxu0 %v2326
    %3704 = vmatpush2.bf16.msra.mxu0 %v2325
    %3705 = vmatprep.subr.bf16.mxu0 %v2324
    %3706 = vmatpush2.bf16.msra.mxu0 %v2323
    %3707 = vmatprep.mubr.bf16.mxu0 %v3633
    %3708 = vmatmul.mubr.bf16.gmra.mxu0 %v3632
    %v3709 = vpop.f32.mrf.mxu0
    %v3710 = vadd.f32 %v3669, %v3709
    %v3711 = vpop.f32.mrf.mxu0
    %v3712 = vadd.f32 %v3671, %v3711
    %v3713 = vpop.f32.mrf.mxu0
    %v3714 = vpop.f32.mrf.mxu0
    %3715 = vdwg.mxu0
    %v3716 = vsub.f32 0.0, %v3550
    %v3717 = vsub.f32 0.0, %v3551
    %v3718 = vadd.f32 %v3716, %v3552
    %v3719 = vadd.f32 %v3717, %v3553
    %v3720 = vmul.f32 %v3718, 0.1
    %v3721 = vmul.f32 %v3719, 0.1
    %v3722 = vadd.f32 %v3550, %v3720
    %v3723 = vadd.f32 %v3551, %v3721
    %v3724 = vmul.f32 %v3552, 0.8
    %v3725 = vmul.f32 %v3553, 0.8
    %vm3726 = vcmp.gt.f32.partialorder %v3722, 1.0
    %vm3727 = vcmp.gt.f32.partialorder %v3723, 1.0
    %v3728 = vsel %vm3726, 1, 0
    %v3729 = vsel %vm3727, 1, 0
    %v3730 = vcvt.s32.f32 %v3728
    %v3731 = vcvt.s32.f32 %v3729
    %v3732 = vpack.c.bf16 %v3730, %v3730
    %v3733 = vpack.c.bf16 %v3731, %v3731
    %v3734 = vsel %vm3726, 0.0, %v3722
    %v3735 = vsel %vm3727, 0.0, %v3723
    %v3736 = vadd.f32 %v3724, %v3710
    %v3737 = vadd.f32 %v3725, %v3712
    %3738 = vmatprep.subr.bf16.mxu0 0
    %3739 = vmatpush1.bf16.msra.mxu0 %v2558
    %3740 = vmatprep.subr.bf16.mxu0 0
    %3741 = vmatpush1.bf16.msra.mxu0 %v2557
    %3742 = vmatprep.subr.bf16.mxu0 0
    %3743 = vmatpush1.bf16.msra.mxu0 %v2556
    %3744 = vmatprep.subr.bf16.mxu0 0
    %3745 = vmatpush1.bf16.msra.mxu0 %v2555
    %3746 = vmatprep.subr.bf16.mxu0 0
    %3747 = vmatpush1.bf16.msra.mxu0 %v2554
    %3748 = vmatprep.subr.bf16.mxu0 0
    %3749 = vmatpush1.bf16.msra.mxu0 %v2553
    %3750 = vmatprep.subr.bf16.mxu0 0
    %3751 = vmatpush1.bf16.msra.mxu0 %v2552
    %3752 = vmatprep.subr.bf16.mxu0 0
    %3753 = vmatpush1.bf16.msra.mxu0 %v2551
    %3754 = vmatprep.subr.bf16.mxu0 0
    %3755 = vmatpush2.bf16.msra.mxu0 %v2566
    %3756 = vmatprep.subr.bf16.mxu0 0
    %3757 = vmatpush2.bf16.msra.mxu0 %v2565
    %3758 = vmatprep.subr.bf16.mxu0 0
    %3759 = vmatpush2.bf16.msra.mxu0 %v2564
    %3760 = vmatprep.subr.bf16.mxu0 0
    %3761 = vmatpush2.bf16.msra.mxu0 %v2563
    %3762 = vmatprep.subr.bf16.mxu0 0
    %3763 = vmatpush2.bf16.msra.mxu0 %v2562
    %3764 = vmatprep.subr.bf16.mxu0 0
    %3765 = vmatpush2.bf16.msra.mxu0 %v2561
    %3766 = vmatprep.subr.bf16.mxu0 0
    %3767 = vmatpush2.bf16.msra.mxu0 %v2560
    %3768 = vmatprep.subr.bf16.mxu0 0
    %3769 = vmatpush2.bf16.msra.mxu0 %v2559
    %3770 = vmatprep.mubr.bf16.mxu0 %v3733
    %3771 = vmatmul.mubr.bf16.gmra.mxu0 %v3732
    %v3772 = vpop.f32.mrf.mxu0
    %v3773 = vadd.f32 0.0, %v3772
    %v3774 = vpop.f32.mrf.mxu0
    %v3775 = vpop.f32.mrf.mxu0
    %v3776 = vpop.f32.mrf.mxu0
    %3777 = vdwg.mxu0
    %v3778 = vadd.f32 %v3599, %v3773
    %v3779 = vsub.f32 0.0, %v3598
    %v3780 = vadd.f32 %v3779, %v3778
    %v3781 = vmul.f32 %v3780, 0.1
    %v3782 = vadd.f32 %v3598, %v3781
    %v3783 = vmul.f32 %v3778, 0.8
    %s3784 = scalar_lea.vmem %s6, 48
    %3785 = vst [vmem:[%s3784] sm:$0xff] %v3782
    %v3786 = vsub.f32 0.0, %v3734
    %v3787 = vsub.f32 0.0, %v3735
    %v3788 = vadd.f32 %v3786, %v3736
    %v3789 = vadd.f32 %v3787, %v3737
    %v3790 = vmul.f32 %v3788, 0.1
    %v3791 = vmul.f32 %v3789, 0.1
    %v3792 = vadd.f32 %v3734, %v3790
    %v3793 = vadd.f32 %v3735, %v3791
    %vm3794 = vcmp.gt.f32.partialorder %v3792, 1.0
    %vm3795 = vcmp.gt.f32.partialorder %v3793, 1.0
    %v3796 = vsel %vm3794, 1, 0
    %v3797 = vsel %vm3795, 1, 0
    %v3798 = vcvt.s32.f32 %v3796
    %v3799 = vcvt.s32.f32 %v3797
    %v3800 = vpack.c.bf16 %v3798, %v3798
    %v3801 = vpack.c.bf16 %v3799, %v3799
    %3802 = vmatprep.subr.bf16.mxu0 0
    %3803 = vmatpush1.bf16.msra.mxu0 %v2558
    %3804 = vmatprep.subr.bf16.mxu0 0
    %3805 = vmatpush1.bf16.msra.mxu0 %v2557
    %3806 = vmatprep.subr.bf16.mxu0 0
    %3807 = vmatpush1.bf16.msra.mxu0 %v2556
    %3808 = vmatprep.subr.bf16.mxu0 0
    %3809 = vmatpush1.bf16.msra.mxu0 %v2555
    %3810 = vmatprep.subr.bf16.mxu0 0
    %3811 = vmatpush1.bf16.msra.mxu0 %v2554
    %3812 = vmatprep.subr.bf16.mxu0 0
    %3813 = vmatpush1.bf16.msra.mxu0 %v2553
    %3814 = vmatprep.subr.bf16.mxu0 0
    %3815 = vmatpush1.bf16.msra.mxu0 %v2552
    %3816 = vmatprep.subr.bf16.mxu0 0
    %3817 = vmatpush1.bf16.msra.mxu0 %v2551
    %3818 = vmatprep.subr.bf16.mxu0 0
    %3819 = vmatpush2.bf16.msra.mxu0 %v2566
    %3820 = vmatprep.subr.bf16.mxu0 0
    %3821 = vmatpush2.bf16.msra.mxu0 %v2565
    %3822 = vmatprep.subr.bf16.mxu0 0
    %3823 = vmatpush2.bf16.msra.mxu0 %v2564
    %3824 = vmatprep.subr.bf16.mxu0 0
    %3825 = vmatpush2.bf16.msra.mxu0 %v2563
    %3826 = vmatprep.subr.bf16.mxu0 0
    %3827 = vmatpush2.bf16.msra.mxu0 %v2562
    %3828 = vmatprep.subr.bf16.mxu0 0
    %3829 = vmatpush2.bf16.msra.mxu0 %v2561
    %3830 = vmatprep.subr.bf16.mxu0 0
    %3831 = vmatpush2.bf16.msra.mxu0 %v2560
    %3832 = vmatprep.subr.bf16.mxu0 0
    %3833 = vmatpush2.bf16.msra.mxu0 %v2559
    %3834 = vmatprep.mubr.bf16.mxu0 %v3801
    %3835 = vmatmul.mubr.bf16.gmra.mxu0 %v3800
    %v3836 = vpop.f32.mrf.mxu0
    %v3837 = vadd.f32 0.0, %v3836
    %v3838 = vpop.f32.mrf.mxu0
    %v3839 = vpop.f32.mrf.mxu0
    %v3840 = vpop.f32.mrf.mxu0
    %3841 = vdwg.mxu0
    %v3842 = vadd.f32 %v3783, %v3837
    %v3843 = vsub.f32 0.0, %v3782
    %v3844 = vadd.f32 %v3843, %v3842
    %v3845 = vmul.f32 %v3844, 0.1
    %v3846 = vadd.f32 %v3782, %v3845
    %s3847 = scalar_lea.vmem %s6, 56
    %3848 = vst [vmem:[%s3847] sm:$0xff] %v3846
    // Predicated region
    $region38: #{snn_model_b_forward.1} parent=1 // pred_check
      _
    $region39: #{snn_model_b_forward.1} parent=1 // pred_check_branch
      %3850 = sbr.rel (0) target = $region41
    $region40: #{snn_model_b_forward.1} parent=1 // pred_region
      _
    $region41: #{snn_model_b_forward.1} parent=1 // pred_fallthru
      _
    // Predicated region
    $region42: #{snn_model_b_forward.1} parent=1 // pred_check
      _
    $region43: #{snn_model_b_forward.1} parent=1 // pred_check_branch
      %3852 = sbr.rel (0) target = $region45
    $region44: #{snn_model_b_forward.1} parent=1 // pred_region
      _
    $region45: #{snn_model_b_forward.1} parent=1 // pred_fallthru
      _
    %3853 = vsyncpa [#allocation3], 1
    %3854 = vsyncpa [#allocation5], 1

</llo_original>
